<compile_context>
chip_gen: v6e
topology: v6e:2x2x1
jax: 0.10.0
libtpu: 0.0.40
codegen_flags: <defaults>
</compile_context>

<pallas_src>
import functools

import numpy as np
import jax
import jax.numpy as jnp
from jax.experimental import pallas as pl
from jax.experimental.pallas import tpu as pltpu


# ----------------------------------------------------------------------------- fused kernel

def _fused_sampler_kernel(sched_ref, x_T_ref, w_ref, emb_ref, noise_ref, x_ref):
    """One reverse-diffusion step per grid index; x_ref is the VMEM-resident x_t."""
    i = pl.program_id(0)
    n = pl.num_programs(0)
    t = n - 1 - i                                   # time_step, i.e. reversed(range(T))

    @pl.when(i == 0)
    def _():
        x_ref[...] = x_T_ref[...]                   # x_t <- x_T once; stays resident afterwards

    x = x_ref[...]

    # ---- synthetic eps model: single bf16 MXU matmul, f32 accumulate --------------------
    h = jnp.dot(x.astype(jnp.bfloat16), w_ref[...], preferred_element_type=jnp.float32)
    # classifier-free guidance, folded:
    #   (1+w)*eps_cond - w*eps_uncond = tanh(x@W) + [temb + (1+w)*lemb_c - w*lemb_u]
    # emb_ref holds the bracketed (precomputed, step-indexed) term.
    eps = jnp.tanh(h) + emb_ref[0]

    # ---- extract(coeff, t, x.shape): per-step scalars read from SMEM --------------------
    c1 = sched_ref[0, t]                            # sqrt(1 / alpha_t)
    c2 = sched_ref[1, t]                            # coeff2_t
    sv = jnp.where(t > 0, sched_ref[2, t], 0.0)     # sqrt(var_t); noise = 0 at time_step == 0

    # x_{t-1} = coeff1*x_t - coeff2*eps + sqrt(var)*noise
    x_new = c1 * x - c2 * eps + sv * noise_ref[0]

    @pl.when(i < n - 1)
    def _():
        x_ref[...] = x_new

    @pl.when(i == n - 1)
    def _():
        x_ref[...] = jnp.clip(x_new, -1.0, 1.0)     # final torch.clip(x_0, -1, 1)


# ----------------------------------------------------------------------------- sampler forward

def gaussian_diffusion_sampler(x_T, labels, noise_key, model_params,
                               *, beta_1=1e-4, beta_T=0.02, T=10, w=1.8):
    """Reproduces GaussianDiffusionSampler.forward with the whole reverse loop fused into a
    single grid=(T,) pallas_call."""
    B, C, H, W = x_T.shape
    D = C * H * W
    w_mat, time_table, label_table = model_params

    # --- schedule buffers (float64 on host, matching register_buffer(...).double()) ------
    betas = np.linspace(beta_1, beta_T, T, dtype=np.float64)
    alphas = 1.0 - betas
    alphas_bar = np.cumprod(alphas)
    alphas_bar_prev = np.concatenate([np.ones((1,), np.float64), alphas_bar])[:T]
    coeff1 = np.sqrt(1.0 / alphas)
    coeff2 = coeff1 * (1.0 - alphas) / np.sqrt(1.0 - alphas_bar)
    posterior_var = betas * (1.0 - alphas_bar_prev) / (1.0 - alphas_bar)
    var_sched = np.concatenate([posterior_var[1:2], betas[1:]])        # p_mean_variance `var`
    sched = jnp.asarray(np.stack([coeff1, coeff2, np.sqrt(var_sched)]),
                        dtype=jnp.float32)                             # [3, T]  -> SMEM

    # --- per-step guided embedding & noise, indexed by grid step i (time_step = T-1-i) ---
    t_steps = np.arange(T - 1, -1, -1)                                 # reversed(range(T))
    temb = time_table[t_steps]                                         # [T, D]
    lemb_c = label_table[labels]                                       # [B, D]  model(x,t,labels)
    lemb_u = label_table[jnp.zeros_like(labels)]                       # [B, D]  zeros_like(labels)
    guided_emb = (temb[:, None, :]
                  + (1.0 + w) * lemb_c[None, :, :]
                  - w * lemb_u[None, :, :]).astype(jnp.float32)        # [T, B, D]
    noise = jax.random.normal(noise_key, (T, B, D), jnp.float32)       # last slice unused (t==0)

    x_flat = x_T.reshape(B, D).astype(jnp.float32)
    w_bf16 = w_mat.astype(jnp.bfloat16)                                # halves weight HBM/VMEM

    x_0 = pl.pallas_call(
        _fused_sampler_kernel,
        out_shape=jax.ShapeDtypeStruct((B, D), jnp.float32),
        grid_spec=pltpu.PrefetchScalarGridSpec(
            num_scalar_prefetch=0,
            grid=(T,),
            in_specs=[
                pl.BlockSpec(memory_space=pltpu.MemorySpace.SMEM),     # sched [3, T]
                pl.BlockSpec((B, D), lambda i: (0, 0)),                # x_T (fetched once)
                pl.BlockSpec((D, D), lambda i: (0, 0)),                # weight, VMEM-resident
                pl.BlockSpec((1, B, D), lambda i: (i, 0, 0)),          # guided emb per step
                pl.BlockSpec((1, B, D), lambda i: (i, 0, 0)),          # noise per step
            ],
            out_specs=pl.BlockSpec((B, D), lambda i: (0, 0)),          # x_t accumulator, resident
        ),
        compiler_params=pltpu.CompilerParams(
            dimension_semantics=("arbitrary",),     # T is a sequential recurrence
            vmem_limit_bytes=32 * 1024 * 1024,
        ),
    )(sched, x_flat, w_bf16, guided_emb, noise)

    return x_0.reshape(B, C, H, W)


def init_model_params(key, D, T, num_classes):
    kw, kt, kl = jax.random.split(key, 3)
    w_mat = jax.random.normal(kw, (D, D), jnp.float32) / jnp.sqrt(jnp.float32(D))
    time_table = 0.1 * jax.random.normal(kt, (T, D), jnp.float32)
    label_table = 0.1 * jax.random.normal(kl, (num_classes, D), jnp.float32)
    return w_mat, time_table, label_table


# ----------------------------------------------------------------------------- main

if __name__ == "__main__":
    B, C, H, W = 8, 4, 16, 16          # NCHW image; D = 1024 = 8 * 128 (lane-dense), batch 8
    T = 10                              # small number of diffusion steps for the demo
    NUM_CLASSES = 10
    GUIDANCE_W = 1.8

    root = jax.random.PRNGKey(0)
    k_x, k_lbl, k_noise, k_params = jax.random.split(root, 4)

    x_T = jax.random.normal(k_x, (B, C, H, W), jnp.float32)
    labels = jax.random.randint(k_lbl, (B,), 0, NUM_CLASSES, dtype=jnp.int32)
    params = init_model_params(k_params, C * H * W, T, NUM_CLASSES)

    sampler = jax.jit(functools.partial(gaussian_diffusion_sampler,
                                        T=T, w=GUIDANCE_W))
    x_0 = jax.block_until_ready(sampler(x_T, labels, k_noise, params))

    assert x_0.shape == (B, C, H, W)
    assert not bool(jnp.isnan(x_0).any()), "nan in tensor."
    assert float(jnp.max(jnp.abs(x_0))) <= 1.0 + 1e-6
    print("KERNEL_OK")
</pallas_src>

<mosaic_0001>
module attributes {stable_mosaic.version = 11 : i64} {
  func.func @_fused_sampler_kernel(%arg0: i32, %arg1: memref<3x10xf32, #tpu.memory_space<smem>>, %arg2: memref<8x1024xf32, #tpu.memory_space<vmem>>, %arg3: memref<1024x1024xbf16, #tpu.memory_space<vmem>>, %arg4: memref<1x8x1024xf32, #tpu.memory_space<vmem>>, %arg5: memref<1x8x1024xf32, #tpu.memory_space<vmem>>, %arg6: memref<8x1024xf32, #tpu.memory_space<vmem>>) attributes {dimension_semantics = [#tpu.dimension_semantics<arbitrary>], iteration_bounds = array<i64: 10>, scalar_prefetch = 0 : i64, scratch_operands = 0 : i64, tpu.core_type = #tpu.core_type<tc>, window_params = [{transform_indices = @transform_0, window_bounds = array<i64: 3, 10>}, {pipeline_mode = #tpu.pipeline_mode<synchronous>, transform_indices = @transform_1, window_bounds = array<i64: 8, 1024>}, {pipeline_mode = #tpu.pipeline_mode<synchronous>, transform_indices = @transform_2, window_bounds = array<i64: 1024, 1024>}, {transform_indices = @transform_3, window_bounds = array<i64: 1, 8, 1024>}, {transform_indices = @transform_4, window_bounds = array<i64: 1, 8, 1024>}, {pipeline_mode = #tpu.pipeline_mode<synchronous>, transform_indices = @transform_5, window_bounds = array<i64: 8, 1024>}]} {
    %c9_i32 = arith.constant 9 : i32
    %0 = arith.subi %c9_i32, %arg0 : i32
    %c0_i32 = arith.constant 0 : i32
    %1 = arith.cmpi eq, %arg0, %c0_i32 : i32
    %2 = arith.extui %1 : i1 to i32
    %c0_i32_0 = arith.constant 0 : i32
    %3 = arith.cmpi ne, %2, %c0_i32_0 : i32
    scf.if %3 {
      %c0_17 = arith.constant 0 : index
      %c0_18 = arith.constant 0 : index
      %36 = vector.load %arg2[%c0_17, %c0_18] : memref<8x1024xf32, #tpu.memory_space<vmem>>, vector<8x1024xf32>
      %c0_19 = arith.constant 0 : index
      %c0_20 = arith.constant 0 : index
      %37 = vector.load %arg6[%c0_19, %c0_20] : memref<8x1024xf32, #tpu.memory_space<vmem>>, vector<8x1024xf32>
      tpu.vector_store %arg6[%c0_19, %c0_20], %36 {strides = array<i32>} : memref<8x1024xf32, #tpu.memory_space<vmem>>, vector<8x1024xf32>,
    } else {
    }
    %c0 = arith.constant 0 : index
    %c0_1 = arith.constant 0 : index
    %4 = vector.load %arg6[%c0, %c0_1] : memref<8x1024xf32, #tpu.memory_space<vmem>>, vector<8x1024xf32>
    %5 = arith.truncf %4 : vector<8x1024xf32> to vector<8x1024xbf16>
    %c0_2 = arith.constant 0 : index
    %c0_3 = arith.constant 0 : index
    %6 = vector.load %arg3[%c0_2, %c0_3] : memref<1024x1024xbf16, #tpu.memory_space<vmem>>, vector<1024x1024xbf16>
    %cst = arith.constant dense<0.000000e+00> : vector<8x1024xf32>
    %7 = tpu.matmul %5, %6, %cst {dimension_numbers = #tpu.dot_dimension_numbers<[1], [0], [0], [1], [0, 0, 1, 1], [], []>} : vector<8x1024xbf16>, vector<1024x1024xbf16>, vector<8x1024xf32> -> vector<8x1024xf32>
    %8 = math.tanh %7 : vector<8x1024xf32>
    %c0_4 = arith.constant 0 : index
    %c0_5 = arith.constant 0 : index
    %c0_6 = arith.constant 0 : index
    %9 = vector.load %arg4[%c0_4, %c0_5, %c0_6] : memref<1x8x1024xf32, #tpu.memory_space<vmem>>, vector<1x8x1024xf32>
    %10 = vector.shape_cast %9 : vector<1x8x1024xf32> to vector<8x1024xf32>
    %11 = arith.addf %8, %10 : vector<8x1024xf32>
    %c0_7 = arith.constant 0 : index
    %12 = arith.index_cast %0 : i32 to index
    %13 = memref.load %arg1[%c0_7, %12] : memref<3x10xf32, #tpu.memory_space<smem>>
    %c1 = arith.constant 1 : index
    %14 = arith.index_cast %0 : i32 to index
    %15 = memref.load %arg1[%c1, %14] : memref<3x10xf32, #tpu.memory_space<smem>>
    %c0_i32_8 = arith.constant 0 : i32
    %16 = arith.cmpi sgt, %0, %c0_i32_8 : i32
    %c2 = arith.constant 2 : index
    %17 = arith.index_cast %0 : i32 to index
    %18 = memref.load %arg1[%c2, %17] : memref<3x10xf32, #tpu.memory_space<smem>>
    %cst_9 = arith.constant 0.000000e+00 : f32
    %19 = arith.select %16, %18, %cst_9 : f32
    %20 = vector.broadcast %13 : f32 to vector<8x1024xf32>
    %21 = arith.mulf %20, %4 : vector<8x1024xf32>
    %22 = vector.broadcast %15 : f32 to vector<8x1024xf32>
    %23 = arith.mulf %22, %11 : vector<8x1024xf32>
    %24 = arith.subf %21, %23 : vector<8x1024xf32>
    %c0_10 = arith.constant 0 : index
    %c0_11 = arith.constant 0 : index
    %c0_12 = arith.constant 0 : index
    %25 = vector.load %arg5[%c0_10, %c0_11, %c0_12] : memref<1x8x1024xf32, #tpu.memory_space<vmem>>, vector<1x8x1024xf32>
    %26 = vector.shape_cast %25 : vector<1x8x1024xf32> to vector<8x1024xf32>
    %27 = vector.broadcast %19 : f32 to vector<8x1024xf32>
    %28 = arith.mulf %27, %26 : vector<8x1024xf32>
    %29 = arith.addf %24, %28 : vector<8x1024xf32>
    %c9_i32_13 = arith.constant 9 : i32
    %30 = arith.cmpi slt, %arg0, %c9_i32_13 : i32
    %31 = arith.extui %30 : i1 to i32
    %c0_i32_14 = arith.constant 0 : i32
    %32 = arith.cmpi ne, %31, %c0_i32_14 : i32
    scf.if %32 {
      %c0_17 = arith.constant 0 : index
      %c0_18 = arith.constant 0 : index
      %36 = vector.load %arg6[%c0_17, %c0_18] : memref<8x1024xf32, #tpu.memory_space<vmem>>, vector<8x1024xf32>
      tpu.vector_store %arg6[%c0_17, %c0_18], %29 {strides = array<i32>} : memref<8x1024xf32, #tpu.memory_space<vmem>>, vector<8x1024xf32>,
    } else {
    }
    %c9_i32_15 = arith.constant 9 : i32
    %33 = arith.cmpi eq, %arg0, %c9_i32_15 : i32
    %34 = arith.extui %33 : i1 to i32
    %c0_i32_16 = arith.constant 0 : i32
    %35 = arith.cmpi ne, %34, %c0_i32_16 : i32
    scf.if %35 {
      %cst_17 = arith.constant -1.000000e+00 : f32
      %cst_18 = arith.constant 1.000000e+00 : f32
      %36 = vector.broadcast %cst_17 : f32 to vector<8x1024xf32>
      %37 = arith.maximumf %36, %29 : vector<8x1024xf32>
      %38 = vector.broadcast %cst_18 : f32 to vector<8x1024xf32>
      %39 = arith.minimumf %38, %37 : vector<8x1024xf32>
      %c0_19 = arith.constant 0 : index
      %c0_20 = arith.constant 0 : index
      %40 = vector.load %arg6[%c0_19, %c0_20] : memref<8x1024xf32, #tpu.memory_space<vmem>>, vector<8x1024xf32>
      tpu.vector_store %arg6[%c0_19, %c0_20], %39 {strides = array<i32>} : memref<8x1024xf32, #tpu.memory_space<vmem>>, vector<8x1024xf32>,
    } else {
    }
    return
  }
  func.func @transform_0(%arg0: i32) -> (i32, i32) {
    %c0_i32 = arith.constant 0 : i32
    %c0_i32_0 = arith.constant 0 : i32
    %c0_i32_1 = arith.constant 0 : i32
    return %c0_i32, %c0_i32_0 : i32, i32
  }
  func.func @transform_1(%arg0: i32) -> (i32, i32) {
    %c0_i32 = arith.constant 0 : i32
    %c0_i32_0 = arith.constant 0 : i32
    %c0_i32_1 = arith.constant 0 : i32
    return %c0_i32, %c0_i32_0 : i32, i32
  }
  func.func @transform_2(%arg0: i32) -> (i32, i32) {
    %c0_i32 = arith.constant 0 : i32
    %c0_i32_0 = arith.constant 0 : i32
    %c0_i32_1 = arith.constant 0 : i32
    return %c0_i32, %c0_i32_0 : i32, i32
  }
  func.func @transform_3(%arg0: i32) -> (i32, i32, i32) {
    %c0_i32 = arith.constant 0 : i32
    %c0_i32_0 = arith.constant 0 : i32
    %c0_i32_1 = arith.constant 0 : i32
    return %arg0, %c0_i32, %c0_i32_0 : i32, i32, i32
  }
  func.func @transform_4(%arg0: i32) -> (i32, i32, i32) {
    %c0_i32 = arith.constant 0 : i32
    %c0_i32_0 = arith.constant 0 : i32
    %c0_i32_1 = arith.constant 0 : i32
    return %arg0, %c0_i32, %c0_i32_0 : i32, i32, i32
  }
  func.func @transform_5(%arg0: i32) -> (i32, i32) {
    %c0_i32 = arith.constant 0 : i32
    %c0_i32_0 = arith.constant 0 : i32
    %c0_i32_1 = arith.constant 0 : i32
    return %c0_i32, %c0_i32_0 : i32, i32
  }
}

</mosaic_0001>

<llo_original>
// kernel: gaussian_diffusion_sampler.1
$region0: #{gaussian_diffusion_sampler.1}
  #allocation0 [shape = 'u32[]', space=smem, size = 0x4, offset = 0x4, fixed_abs, tag = 'smem constant byte address 0x4 - core index']
  #allocation1 [shape = 'u32[144,128]{1,0:T(1,128)}', space=vmem, size = 0x12000, scoped, tag = 'internal scratch']
  %s0 = inlined_call_operand.vmem [shape: f32[3,10], index: 0, kind: input, shape index: {}]
  %s1 = inlined_call_operand.vmem [shape: f32[8,1024], index: 1, kind: input, shape index: {}]
  %s2 = inlined_call_operand.vmem [shape: bf16[1024,1024], index: 2, kind: input, shape index: {}]
  %s3 = inlined_call_operand.vmem [shape: f32[10,8,1024], index: 3, kind: input, shape index: {}]
  %s4 = inlined_call_operand.vmem [shape: f32[10,8,1024], index: 4, kind: input, shape index: {}]
  %s5 = inlined_call_operand.vmem [shape: f32[8,1024], index: 5, kind: output, shape index: {}]
  %s6 = sld [smem:[#allocation0]]
  $region69: #{gaussian_diffusion_sampler.1} parent=0
    _
  %s8 = ssub.s32 1, %s6
  %s9 = scalar_select 0, %s8, %s6
  $region1: #{gaussian_diffusion_sampler.1} parent=0
    #allocation2 [shape = 'u8[2048]{0}', space=smem, size = 0x800, scoped, tag = 'input window, operand 0, single buffered']
    #allocation3 [shape = 's32[2]{0}', space=sflag, size = 0x8, scoped, tag = 'scoped memory for gaussian_diffusion_sampler.1']
    %10 = vsyncpa [#allocation3], 0
    loop: start=0, step=1, limit=12
    $region2: #{gaussian_diffusion_sampler.1} parent=1 // loop_pre_header
      _
    $region3: #{gaussian_diffusion_sampler.1} parent=1 // loop_header
      %s12 = sphi 0, %s16
      %p13 = scmp.ge.s32.totalorder %s12, 12
      %s20 = sphi 0, %s20
      %s22 = sphi 0, %s20
      %s23 = sphi 0, %s22
      %s37 = sphi 0, %s23
      %s41 = sphi 0, %s41
      %s43 = sphi 0, %s41
      %s44 = sphi 0, %s43
      %s58 = sphi 0, %s44
      %s62 = sphi 0, %s62
      %s64 = sphi 0, %s62
      %s65 = sphi 0, %s64
      %s79 = sphi 0, %s65
      %s85 = sphi 0, %s87
      %s88 = sphi 0, %s85
      %s89 = sphi 0, %s88
      %s105 = sphi 0, %s89
      %s111 = sphi 0, %s113
      %s114 = sphi 0, %s111
      %s115 = sphi 0, %s114
      %s131 = sphi 0, %s115
      %s135 = sphi 0, %s135
      %s137 = sphi 0, %s135
      %s138 = sphi 0, %s137
      %s152 = sphi 0, %s138
    $region4: #{gaussian_diffusion_sampler.1} parent=1 // loop_header_branch
      %15 = sbr.rel (%p13) target = $region8
    $region5: #{gaussian_diffusion_sampler.1} parent=1 // loop_body
      %s17 = ssub.s32 %s12, 1
      %s18 = ssub.s32 %s12, 2
      %s19 = sadd.s32 %s12, 1
      %s21 = sadd.s32 %s20, 1
      %p24 = scmp.eq.s32.totalorder %s12, 9
      %p25 = scmp.ne.s32.totalorder %s20, %s22
      %p26 = scmp.eq.s32.totalorder %s12, 0
      %p27 = por %p25, %p26
      %p28 = scmp.ne.s32.totalorder %s20, %s22
      %p29 = scmp.eq.s32.totalorder %s17, 9
      %p30 = por %p28, %p29
      %p31 = scmp.ne.s32.totalorder %s22, %s23
      %p32 = scmp.eq.s32.totalorder %s17, 0
      %p33 = por %p31, %p32
      %p34 = scmp.ne.s32.totalorder %s22, %s23
      %p35 = scmp.eq.s32.totalorder %s18, 9
      %p36 = por %p34, %p35
      %p38 = scmp.ne.s32.totalorder %s23, %s37
      %p39 = scmp.eq.s32.totalorder %s18, 0
      %p40 = por %p38, %p39
      %s42 = sadd.s32 %s41, 1
      %p45 = scmp.eq.s32.totalorder %s12, 9
      %p46 = scmp.ne.s32.totalorder %s41, %s43
      %p47 = scmp.eq.s32.totalorder %s12, 0
      %p48 = por %p46, %p47
      %p49 = scmp.ne.s32.totalorder %s41, %s43
      %p50 = scmp.eq.s32.totalorder %s17, 9
      %p51 = por %p49, %p50
      %p52 = scmp.ne.s32.totalorder %s43, %s44
      %p53 = scmp.eq.s32.totalorder %s17, 0
      %p54 = por %p52, %p53
      %p55 = scmp.ne.s32.totalorder %s43, %s44
      %p56 = scmp.eq.s32.totalorder %s18, 9
      %p57 = por %p55, %p56
      %p59 = scmp.ne.s32.totalorder %s44, %s58
      %p60 = scmp.eq.s32.totalorder %s18, 0
      %p61 = por %p59, %p60
      %s63 = sadd.s32 %s62, 1
      %p66 = scmp.eq.s32.totalorder %s12, 9
      %p67 = scmp.ne.s32.totalorder %s62, %s64
      %p68 = scmp.eq.s32.totalorder %s12, 0
      %p69 = por %p67, %p68
      %p70 = scmp.ne.s32.totalorder %s62, %s64
      %p71 = scmp.eq.s32.totalorder %s17, 9
      %p72 = por %p70, %p71
      %p73 = scmp.ne.s32.totalorder %s64, %s65
      %p74 = scmp.eq.s32.totalorder %s17, 0
      %p75 = por %p73, %p74
      %p76 = scmp.ne.s32.totalorder %s64, %s65
      %p77 = scmp.eq.s32.totalorder %s18, 9
      %p78 = por %p76, %p77
      %p80 = scmp.ne.s32.totalorder %s65, %s79
      %p81 = scmp.eq.s32.totalorder %s18, 0
      %p82 = por %p80, %p81
      %s83 = ssub.s32 %s12, %s19
      %p84 = scmp.eq.s32.totalorder %s83, 0
      %s86 = sadd.s32 %s85, 1
      %s87 = scalar_select %p84, %s85, %s86
      %p90 = pneg %p84
      %p91 = scmp.eq.s32.totalorder %s12, 9
      %p92 = por %p90, %p91
      %p93 = scmp.ne.s32.totalorder %s85, %s88
      %p94 = scmp.eq.s32.totalorder %s12, 0
      %p95 = por %p93, %p94
      %p96 = scmp.ne.s32.totalorder %s85, %s88
      %p97 = scmp.eq.s32.totalorder %s17, 9
      %p98 = por %p96, %p97
      %p99 = scmp.ne.s32.totalorder %s88, %s89
      %p100 = scmp.eq.s32.totalorder %s17, 0
      %p101 = por %p99, %p100
      %p102 = scmp.ne.s32.totalorder %s88, %s89
      %p103 = scmp.eq.s32.totalorder %s18, 9
      %p104 = por %p102, %p103
      %p106 = scmp.ne.s32.totalorder %s89, %s105
      %p107 = scmp.eq.s32.totalorder %s18, 0
      %p108 = por %p106, %p107
      %s109 = ssub.s32 %s12, %s19
      %p110 = scmp.eq.s32.totalorder %s109, 0
      %s112 = sadd.s32 %s111, 1
      %s113 = scalar_select %p110, %s111, %s112
      %p116 = pneg %p110
      %p117 = scmp.eq.s32.totalorder %s12, 9
      %p118 = por %p116, %p117
      %p119 = scmp.ne.s32.totalorder %s111, %s114
      %p120 = scmp.eq.s32.totalorder %s12, 0
      %p121 = por %p119, %p120
      %p122 = scmp.ne.s32.totalorder %s111, %s114
      %p123 = scmp.eq.s32.totalorder %s17, 9
      %p124 = por %p122, %p123
      %p125 = scmp.ne.s32.totalorder %s114, %s115
      %p126 = scmp.eq.s32.totalorder %s17, 0
      %p127 = por %p125, %p126
      %p128 = scmp.ne.s32.totalorder %s114, %s115
      %p129 = scmp.eq.s32.totalorder %s18, 9
      %p130 = por %p128, %p129
      %p132 = scmp.ne.s32.totalorder %s115, %s131
      %p133 = scmp.eq.s32.totalorder %s18, 0
      %p134 = por %p132, %p133
      %s136 = sadd.s32 %s135, 1
      %p139 = scmp.eq.s32.totalorder %s12, 9
      %p140 = scmp.ne.s32.totalorder %s135, %s137
      %p141 = scmp.eq.s32.totalorder %s12, 0
      %p142 = por %p140, %p141
      %p143 = scmp.ne.s32.totalorder %s135, %s137
      %p144 = scmp.eq.s32.totalorder %s17, 9
      %p145 = por %p143, %p144
      %p146 = scmp.ne.s32.totalorder %s137, %s138
      %p147 = scmp.eq.s32.totalorder %s17, 0
      %p148 = por %p146, %p147
      %p149 = scmp.ne.s32.totalorder %s137, %s138
      %p150 = scmp.eq.s32.totalorder %s18, 9
      %p151 = por %p149, %p150
      %p153 = scmp.ne.s32.totalorder %s138, %s152
      %p154 = scmp.eq.s32.totalorder %s18, 0
      %p155 = por %p153, %p154
      %p156 = scmp.le.s32.totalorder 1, %s12
      %p157 = scmp.lt.s32.totalorder %s12, 11
      %p158 = pnand %p156, %p157
      %p159 = pneg %p158
      // Predicated region
      $region9: #{gaussian_diffusion_sampler.1} parent=5 // pred_check
        _
      $region10: #{gaussian_diffusion_sampler.1} parent=5 // pred_check_branch
        %161 = sbr.rel (%p158) target = $region12
      $region11: #{gaussian_diffusion_sampler.1} parent=5 // pred_region
        %s162 = ssub.s32 %s12, 1
        // Predicated region
        $region13: #{gaussian_diffusion_sampler.1} parent=11 // pred_check
          %p163 = pneg %p33
        $region14: #{gaussian_diffusion_sampler.1} parent=11 // pred_check_branch
          %165 = sbr.rel (%p163) target = $region16
        $region15: #{gaussian_diffusion_sampler.1} parent=11 // pred_region
          %s167 = ssub.s32 64, 64
          %168 = vsyncadd [#allocation3], %s167
          %s170 = sshll.u32 %s0, 4
          %s171 = int_to_ptr.vmem [resolvable:$true] %s170
          %173 = dma.vmem_to_smem %s171, 64, [#allocation2], [#allocation3]
        $region16: #{gaussian_diffusion_sampler.1} parent=11 // pred_fallthru
          _
        // Predicated region
        $region17: #{gaussian_diffusion_sampler.1} parent=11 // pred_check
          %p174 = pneg %p54
        $region18: #{gaussian_diffusion_sampler.1} parent=11 // pred_check_branch
          %176 = sbr.rel (%p174) target = $region20
        $region19: #{gaussian_diffusion_sampler.1} parent=11 // pred_region
          _
        $region20: #{gaussian_diffusion_sampler.1} parent=11 // pred_fallthru
          _
        // Predicated region
        $region21: #{gaussian_diffusion_sampler.1} parent=11 // pred_check
          %p177 = pneg %p75
        $region22: #{gaussian_diffusion_sampler.1} parent=11 // pred_check_branch
          %179 = sbr.rel (%p177) target = $region24
        $region23: #{gaussian_diffusion_sampler.1} parent=11 // pred_region
          _
        $region24: #{gaussian_diffusion_sampler.1} parent=11 // pred_fallthru
          _
      $region12: #{gaussian_diffusion_sampler.1} parent=5 // pred_fallthru
        _
      %p180 = scmp.lt.s32.totalorder %s12, 10
      // Predicated region
      $region25: #{gaussian_diffusion_sampler.1} parent=5 // pred_check
        %p181 = pneg %p180
      $region26: #{gaussian_diffusion_sampler.1} parent=5 // pred_check_branch
        %183 = sbr.rel (%p181) target = $region28
      $region27: #{gaussian_diffusion_sampler.1} parent=5 // pred_region
        // Predicated region
        $region29: #{gaussian_diffusion_sampler.1} parent=27 // pred_check
          %p184 = pneg %p95
        $region30: #{gaussian_diffusion_sampler.1} parent=27 // pred_check_branch
          %186 = sbr.rel (%p184) target = $region32
        $region31: #{gaussian_diffusion_sampler.1} parent=27 // pred_region
          %p187 = scmp.lt.s32.totalorder %s12, 9
          %s188 = scalar_select %p187, %s12, 9
          %s189 = smul.addr %s188, 8
          %s190 = smul.addr %s189, 8
          %s191 = scalar_lea.vmem %s3, %s190
        $region32: #{gaussian_diffusion_sampler.1} parent=27 // pred_fallthru
          _
        // Predicated region
        $region33: #{gaussian_diffusion_sampler.1} parent=27 // pred_check
          %p192 = pneg %p121
        $region34: #{gaussian_diffusion_sampler.1} parent=27 // pred_check_branch
          %194 = sbr.rel (%p192) target = $region36
        $region35: #{gaussian_diffusion_sampler.1} parent=27 // pred_region
          %p195 = scmp.lt.s32.totalorder %s12, 9
          %s196 = scalar_select %p195, %s12, 9
          %s197 = smul.addr %s196, 8
          %s198 = smul.addr %s197, 8
          %s199 = scalar_lea.vmem %s4, %s198
        $region36: #{gaussian_diffusion_sampler.1} parent=27 // pred_fallthru
          _
      $region28: #{gaussian_diffusion_sampler.1} parent=5 // pred_fallthru
        _
      %p200 = scmp.le.s32.totalorder 1, %s12
      %p201 = scmp.lt.s32.totalorder %s12, 11
      %p202 = pnand %p200, %p201
      %p203 = pneg %p202
      // Predicated region
      $region37: #{gaussian_diffusion_sampler.1} parent=5 // pred_check
        _
      $region38: #{gaussian_diffusion_sampler.1} parent=5 // pred_check_branch
        %205 = sbr.rel (%p202) target = $region40
      $region39: #{gaussian_diffusion_sampler.1} parent=5 // pred_region
        %s206 = ssub.s32 %s12, 1
        // Predicated region
        $region41: #{gaussian_diffusion_sampler.1} parent=39 // pred_check
          %p207 = pneg %p33
        $region42: #{gaussian_diffusion_sampler.1} parent=39 // pred_check_branch
          %209 = sbr.rel (%p207) target = $region44
        $region43: #{gaussian_diffusion_sampler.1} parent=39 // pred_region
          %210 = dma.done [#allocation3], 64
        $region44: #{gaussian_diffusion_sampler.1} parent=39 // pred_fallthru
          _
        %211 = sfence
        %p212 = pneg %p33
        %p213 = pneg %p30
        %p214 = pneg %p54
        %p215 = pneg %p51
        %p216 = pneg %p75
        %p217 = pneg %p72
        %p218 = scmp.lt.s32.totalorder %s17, 9
        %s219 = scalar_select %p218, %s17, 9
        %s220 = smul.addr %s219, 8
        %s221 = smul.addr %s220, 8
        %s222 = scalar_lea.vmem %s3, %s221
        %p223 = pneg %p101
        %p224 = pneg %p98
        %p225 = scmp.lt.s32.totalorder %s17, 9
        %s226 = scalar_select %p225, %s17, 9
        %s227 = smul.addr %s226, 8
        %s228 = smul.addr %s227, 8
        %s229 = scalar_lea.vmem %s4, %s228
        %p230 = pneg %p127
        %p231 = pneg %p124
        %p232 = pneg %p148
        %p233 = pneg %p145
        %p234 = scmp.lt.s32.totalorder %s17, 9
        %s235 = scalar_select %p234, %s17, 9
        %s236 = smul.addr %s235, 8
        %s237 = smul.addr %s236, 8
        %s238 = scalar_lea.vmem %s3, %s237
        %p239 = scmp.lt.s32.totalorder %s17, 9
        %s240 = scalar_select %p239, %s17, 9
        %s241 = smul.addr %s240, 8
        %s242 = smul.addr %s241, 8
        %s243 = scalar_lea.vmem %s4, %s242
        %s244 = ssub.s32 9, %s17
        %p245 = scmp.eq.s32.totalorder %s17, 0
        // Predicated region
        $region45: #{gaussian_diffusion_sampler.1} parent=39 // pred_check
          %p246 = pneg %p245
        $region46: #{gaussian_diffusion_sampler.1} parent=39 // pred_check_branch
          %248 = sbr.rel (%p246) target = $region48
        $region47: #{gaussian_diffusion_sampler.1} parent=39 // pred_region
          %v249 = vld [vmem:[%s1] sm:$0xff]
          %v250 = vld [vmem:[%s1 + $0x8] sm:$0xff]
          %v251 = vld [vmem:[%s1 + $0x10] sm:$0xff]
          %v252 = vld [vmem:[%s1 + $0x18] sm:$0xff]
          %v253 = vld [vmem:[%s1 + $0x20] sm:$0xff]
          %v254 = vld [vmem:[%s1 + $0x28] sm:$0xff]
          %v255 = vld [vmem:[%s1 + $0x30] sm:$0xff]
          %v256 = vld [vmem:[%s1 + $0x38] sm:$0xff]
          %257 = vst [vmem:[%s5] sm:$0xff] %v249
          %258 = vst [vmem:[%s5 + $0x8] sm:$0xff] %v250
          %259 = vst [vmem:[%s5 + $0x10] sm:$0xff] %v251
          %260 = vst [vmem:[%s5 + $0x18] sm:$0xff] %v252
          %261 = vst [vmem:[%s5 + $0x20] sm:$0xff] %v253
          %262 = vst [vmem:[%s5 + $0x28] sm:$0xff] %v254
          %263 = vst [vmem:[%s5 + $0x30] sm:$0xff] %v255
          %264 = vst [vmem:[%s5 + $0x38] sm:$0xff] %v256
        $region48: #{gaussian_diffusion_sampler.1} parent=39 // pred_fallthru
          _
        %v265 = vld [vmem:[%s5] sm:$0xff]
        %v266 = vld [vmem:[%s5 + $0x8] sm:$0xff]
        %v267 = vld [vmem:[%s5 + $0x10] sm:$0xff]
        %v268 = vld [vmem:[%s5 + $0x18] sm:$0xff]
        %v269 = vld [vmem:[%s5 + $0x20] sm:$0xff]
        %v270 = vld [vmem:[%s5 + $0x28] sm:$0xff]
        %v271 = vld [vmem:[%s5 + $0x30] sm:$0xff]
        %v272 = vld [vmem:[%s5 + $0x38] sm:$0xff]
        %v273 = vpack.c.bf16 %v265, %v265
        %v274 = vpack.c.bf16 %v266, %v266
        %v275 = vpack.c.bf16 %v267, %v267
        %v276 = vpack.c.bf16 %v268, %v268
        %v277 = vpack.c.bf16 %v269, %v269
        %v278 = vpack.c.bf16 %v270, %v270
        %v279 = vpack.c.bf16 %v271, %v271
        %v280 = vpack.c.bf16 %v272, %v272
        %v281 = vld [vmem:[%s2] sm:$0xff]
        %v282 = vld [vmem:[%s2 + $0x8] sm:$0xff]
        %v283 = vld [vmem:[%s2 + $0x10] sm:$0xff]
        %v284 = vld [vmem:[%s2 + $0x18] sm:$0xff]
        %v285 = vld [vmem:[%s2 + $0x20] sm:$0xff]
        %v286 = vld [vmem:[%s2 + $0x28] sm:$0xff]
        %v287 = vld [vmem:[%s2 + $0x30] sm:$0xff]
        %v288 = vld [vmem:[%s2 + $0x38] sm:$0xff]
        %v289 = vld [vmem:[%s2 + $0x40] sm:$0xff]
        %v290 = vld [vmem:[%s2 + $0x48] sm:$0xff]
        %v291 = vld [vmem:[%s2 + $0x50] sm:$0xff]
        %v292 = vld [vmem:[%s2 + $0x58] sm:$0xff]
        %v293 = vld [vmem:[%s2 + $0x60] sm:$0xff]
        %v294 = vld [vmem:[%s2 + $0x68] sm:$0xff]
        %v295 = vld [vmem:[%s2 + $0x70] sm:$0xff]
        %v296 = vld [vmem:[%s2 + $0x78] sm:$0xff]
        %v297 = vld [vmem:[%s2 + $0x80] sm:$0xff]
        %v298 = vld [vmem:[%s2 + $0x88] sm:$0xff]
        %v299 = vld [vmem:[%s2 + $0x90] sm:$0xff]
        %v300 = vld [vmem:[%s2 + $0x98] sm:$0xff]
        %v301 = vld [vmem:[%s2 + $0xa0] sm:$0xff]
        %v302 = vld [vmem:[%s2 + $0xa8] sm:$0xff]
        %v303 = vld [vmem:[%s2 + $0xb0] sm:$0xff]
        %v304 = vld [vmem:[%s2 + $0xb8] sm:$0xff]
        %v305 = vld [vmem:[%s2 + $0xc0] sm:$0xff]
        %v306 = vld [vmem:[%s2 + $0xc8] sm:$0xff]
        %v307 = vld [vmem:[%s2 + $0xd0] sm:$0xff]
        %v308 = vld [vmem:[%s2 + $0xd8] sm:$0xff]
        %v309 = vld [vmem:[%s2 + $0xe0] sm:$0xff]
        %v310 = vld [vmem:[%s2 + $0xe8] sm:$0xff]
        %v311 = vld [vmem:[%s2 + $0xf0] sm:$0xff]
        %v312 = vld [vmem:[%s2 + $0xf8] sm:$0xff]
        %v313 = vld [vmem:[%s2 + $0x100] sm:$0xff]
        %v314 = vld [vmem:[%s2 + $0x108] sm:$0xff]
        %v315 = vld [vmem:[%s2 + $0x110] sm:$0xff]
        %v316 = vld [vmem:[%s2 + $0x118] sm:$0xff]
        %v317 = vld [vmem:[%s2 + $0x120] sm:$0xff]
        %v318 = vld [vmem:[%s2 + $0x128] sm:$0xff]
        %v319 = vld [vmem:[%s2 + $0x130] sm:$0xff]
        %v320 = vld [vmem:[%s2 + $0x138] sm:$0xff]
        %v321 = vld [vmem:[%s2 + $0x140] sm:$0xff]
        %v322 = vld [vmem:[%s2 + $0x148] sm:$0xff]
        %v323 = vld [vmem:[%s2 + $0x150] sm:$0xff]
        %v324 = vld [vmem:[%s2 + $0x158] sm:$0xff]
        %v325 = vld [vmem:[%s2 + $0x160] sm:$0xff]
        %v326 = vld [vmem:[%s2 + $0x168] sm:$0xff]
        %v327 = vld [vmem:[%s2 + $0x170] sm:$0xff]
        %v328 = vld [vmem:[%s2 + $0x178] sm:$0xff]
        %v329 = vld [vmem:[%s2 + $0x180] sm:$0xff]
        %v330 = vld [vmem:[%s2 + $0x188] sm:$0xff]
        %v331 = vld [vmem:[%s2 + $0x190] sm:$0xff]
        %v332 = vld [vmem:[%s2 + $0x198] sm:$0xff]
        %v333 = vld [vmem:[%s2 + $0x1a0] sm:$0xff]
        %v334 = vld [vmem:[%s2 + $0x1a8] sm:$0xff]
        %v335 = vld [vmem:[%s2 + $0x1b0] sm:$0xff]
        %v336 = vld [vmem:[%s2 + $0x1b8] sm:$0xff]
        %v337 = vld [vmem:[%s2 + $0x1c0] sm:$0xff]
        %v338 = vld [vmem:[%s2 + $0x1c8] sm:$0xff]
        %v339 = vld [vmem:[%s2 + $0x1d0] sm:$0xff]
        %v340 = vld [vmem:[%s2 + $0x1d8] sm:$0xff]
        %v341 = vld [vmem:[%s2 + $0x1e0] sm:$0xff]
        %v342 = vld [vmem:[%s2 + $0x1e8] sm:$0xff]
        %v343 = vld [vmem:[%s2 + $0x1f0] sm:$0xff]
        %v344 = vld [vmem:[%s2 + $0x1f8] sm:$0xff]
        %v345 = vld [vmem:[%s2 + $0x200] sm:$0xff]
        %v346 = vld [vmem:[%s2 + $0x208] sm:$0xff]
        %v347 = vld [vmem:[%s2 + $0x210] sm:$0xff]
        %v348 = vld [vmem:[%s2 + $0x218] sm:$0xff]
        %v349 = vld [vmem:[%s2 + $0x220] sm:$0xff]
        %v350 = vld [vmem:[%s2 + $0x228] sm:$0xff]
        %v351 = vld [vmem:[%s2 + $0x230] sm:$0xff]
        %v352 = vld [vmem:[%s2 + $0x238] sm:$0xff]
        %v353 = vld [vmem:[%s2 + $0x240] sm:$0xff]
        %v354 = vld [vmem:[%s2 + $0x248] sm:$0xff]
        %v355 = vld [vmem:[%s2 + $0x250] sm:$0xff]
        %v356 = vld [vmem:[%s2 + $0x258] sm:$0xff]
        %v357 = vld [vmem:[%s2 + $0x260] sm:$0xff]
        %v358 = vld [vmem:[%s2 + $0x268] sm:$0xff]
        %v359 = vld [vmem:[%s2 + $0x270] sm:$0xff]
        %v360 = vld [vmem:[%s2 + $0x278] sm:$0xff]
        %v361 = vld [vmem:[%s2 + $0x280] sm:$0xff]
        %v362 = vld [vmem:[%s2 + $0x288] sm:$0xff]
        %v363 = vld [vmem:[%s2 + $0x290] sm:$0xff]
        %v364 = vld [vmem:[%s2 + $0x298] sm:$0xff]
        %v365 = vld [vmem:[%s2 + $0x2a0] sm:$0xff]
        %v366 = vld [vmem:[%s2 + $0x2a8] sm:$0xff]
        %v367 = vld [vmem:[%s2 + $0x2b0] sm:$0xff]
        %v368 = vld [vmem:[%s2 + $0x2b8] sm:$0xff]
        %v369 = vld [vmem:[%s2 + $0x2c0] sm:$0xff]
        %v370 = vld [vmem:[%s2 + $0x2c8] sm:$0xff]
        %v371 = vld [vmem:[%s2 + $0x2d0] sm:$0xff]
        %v372 = vld [vmem:[%s2 + $0x2d8] sm:$0xff]
        %v373 = vld [vmem:[%s2 + $0x2e0] sm:$0xff]
        %v374 = vld [vmem:[%s2 + $0x2e8] sm:$0xff]
        %v375 = vld [vmem:[%s2 + $0x2f0] sm:$0xff]
        %v376 = vld [vmem:[%s2 + $0x2f8] sm:$0xff]
        %v377 = vld [vmem:[%s2 + $0x300] sm:$0xff]
        %v378 = vld [vmem:[%s2 + $0x308] sm:$0xff]
        %v379 = vld [vmem:[%s2 + $0x310] sm:$0xff]
        %v380 = vld [vmem:[%s2 + $0x318] sm:$0xff]
        %v381 = vld [vmem:[%s2 + $0x320] sm:$0xff]
        %v382 = vld [vmem:[%s2 + $0x328] sm:$0xff]
        %v383 = vld [vmem:[%s2 + $0x330] sm:$0xff]
        %v384 = vld [vmem:[%s2 + $0x338] sm:$0xff]
        %v385 = vld [vmem:[%s2 + $0x340] sm:$0xff]
        %v386 = vld [vmem:[%s2 + $0x348] sm:$0xff]
        %v387 = vld [vmem:[%s2 + $0x350] sm:$0xff]
        %v388 = vld [vmem:[%s2 + $0x358] sm:$0xff]
        %v389 = vld [vmem:[%s2 + $0x360] sm:$0xff]
        %v390 = vld [vmem:[%s2 + $0x368] sm:$0xff]
        %v391 = vld [vmem:[%s2 + $0x370] sm:$0xff]
        %v392 = vld [vmem:[%s2 + $0x378] sm:$0xff]
        %v393 = vld [vmem:[%s2 + $0x380] sm:$0xff]
        %v394 = vld [vmem:[%s2 + $0x388] sm:$0xff]
        %v395 = vld [vmem:[%s2 + $0x390] sm:$0xff]
        %v396 = vld [vmem:[%s2 + $0x398] sm:$0xff]
        %v397 = vld [vmem:[%s2 + $0x3a0] sm:$0xff]
        %v398 = vld [vmem:[%s2 + $0x3a8] sm:$0xff]
        %v399 = vld [vmem:[%s2 + $0x3b0] sm:$0xff]
        %v400 = vld [vmem:[%s2 + $0x3b8] sm:$0xff]
        %v401 = vld [vmem:[%s2 + $0x3c0] sm:$0xff]
        %v402 = vld [vmem:[%s2 + $0x3c8] sm:$0xff]
        %v403 = vld [vmem:[%s2 + $0x3d0] sm:$0xff]
        %v404 = vld [vmem:[%s2 + $0x3d8] sm:$0xff]
        %v405 = vld [vmem:[%s2 + $0x3e0] sm:$0xff]
        %v406 = vld [vmem:[%s2 + $0x3e8] sm:$0xff]
        %v407 = vld [vmem:[%s2 + $0x3f0] sm:$0xff]
        %v408 = vld [vmem:[%s2 + $0x3f8] sm:$0xff]
        %v409 = vld [vmem:[%s2 + $0x400] sm:$0xff]
        %v410 = vld [vmem:[%s2 + $0x408] sm:$0xff]
        %v411 = vld [vmem:[%s2 + $0x410] sm:$0xff]
        %v412 = vld [vmem:[%s2 + $0x418] sm:$0xff]
        %v413 = vld [vmem:[%s2 + $0x420] sm:$0xff]
        %v414 = vld [vmem:[%s2 + $0x428] sm:$0xff]
        %v415 = vld [vmem:[%s2 + $0x430] sm:$0xff]
        %v416 = vld [vmem:[%s2 + $0x438] sm:$0xff]
        %v417 = vld [vmem:[%s2 + $0x440] sm:$0xff]
        %v418 = vld [vmem:[%s2 + $0x448] sm:$0xff]
        %v419 = vld [vmem:[%s2 + $0x450] sm:$0xff]
        %v420 = vld [vmem:[%s2 + $0x458] sm:$0xff]
        %v421 = vld [vmem:[%s2 + $0x460] sm:$0xff]
        %v422 = vld [vmem:[%s2 + $0x468] sm:$0xff]
        %v423 = vld [vmem:[%s2 + $0x470] sm:$0xff]
        %v424 = vld [vmem:[%s2 + $0x478] sm:$0xff]
        %v425 = vld [vmem:[%s2 + $0x480] sm:$0xff]
        %v426 = vld [vmem:[%s2 + $0x488] sm:$0xff]
        %v427 = vld [vmem:[%s2 + $0x490] sm:$0xff]
        %v428 = vld [vmem:[%s2 + $0x498] sm:$0xff]
        %v429 = vld [vmem:[%s2 + $0x4a0] sm:$0xff]
        %v430 = vld [vmem:[%s2 + $0x4a8] sm:$0xff]
        %v431 = vld [vmem:[%s2 + $0x4b0] sm:$0xff]
        %v432 = vld [vmem:[%s2 + $0x4b8] sm:$0xff]
        %v433 = vld [vmem:[%s2 + $0x4c0] sm:$0xff]
        %v434 = vld [vmem:[%s2 + $0x4c8] sm:$0xff]
        %v435 = vld [vmem:[%s2 + $0x4d0] sm:$0xff]
        %v436 = vld [vmem:[%s2 + $0x4d8] sm:$0xff]
        %v437 = vld [vmem:[%s2 + $0x4e0] sm:$0xff]
        %v438 = vld [vmem:[%s2 + $0x4e8] sm:$0xff]
        %v439 = vld [vmem:[%s2 + $0x4f0] sm:$0xff]
        %v440 = vld [vmem:[%s2 + $0x4f8] sm:$0xff]
        %v441 = vld [vmem:[%s2 + $0x500] sm:$0xff]
        %v442 = vld [vmem:[%s2 + $0x508] sm:$0xff]
        %v443 = vld [vmem:[%s2 + $0x510] sm:$0xff]
        %v444 = vld [vmem:[%s2 + $0x518] sm:$0xff]
        %v445 = vld [vmem:[%s2 + $0x520] sm:$0xff]
        %v446 = vld [vmem:[%s2 + $0x528] sm:$0xff]
        %v447 = vld [vmem:[%s2 + $0x530] sm:$0xff]
        %v448 = vld [vmem:[%s2 + $0x538] sm:$0xff]
        %v449 = vld [vmem:[%s2 + $0x540] sm:$0xff]
        %v450 = vld [vmem:[%s2 + $0x548] sm:$0xff]
        %v451 = vld [vmem:[%s2 + $0x550] sm:$0xff]
        %v452 = vld [vmem:[%s2 + $0x558] sm:$0xff]
        %v453 = vld [vmem:[%s2 + $0x560] sm:$0xff]
        %v454 = vld [vmem:[%s2 + $0x568] sm:$0xff]
        %v455 = vld [vmem:[%s2 + $0x570] sm:$0xff]
        %v456 = vld [vmem:[%s2 + $0x578] sm:$0xff]
        %v457 = vld [vmem:[%s2 + $0x580] sm:$0xff]
        %v458 = vld [vmem:[%s2 + $0x588] sm:$0xff]
        %v459 = vld [vmem:[%s2 + $0x590] sm:$0xff]
        %v460 = vld [vmem:[%s2 + $0x598] sm:$0xff]
        %v461 = vld [vmem:[%s2 + $0x5a0] sm:$0xff]
        %v462 = vld [vmem:[%s2 + $0x5a8] sm:$0xff]
        %v463 = vld [vmem:[%s2 + $0x5b0] sm:$0xff]
        %v464 = vld [vmem:[%s2 + $0x5b8] sm:$0xff]
        %v465 = vld [vmem:[%s2 + $0x5c0] sm:$0xff]
        %v466 = vld [vmem:[%s2 + $0x5c8] sm:$0xff]
        %v467 = vld [vmem:[%s2 + $0x5d0] sm:$0xff]
        %v468 = vld [vmem:[%s2 + $0x5d8] sm:$0xff]
        %v469 = vld [vmem:[%s2 + $0x5e0] sm:$0xff]
        %v470 = vld [vmem:[%s2 + $0x5e8] sm:$0xff]
        %v471 = vld [vmem:[%s2 + $0x5f0] sm:$0xff]
        %v472 = vld [vmem:[%s2 + $0x5f8] sm:$0xff]
        %v473 = vld [vmem:[%s2 + $0x600] sm:$0xff]
        %v474 = vld [vmem:[%s2 + $0x608] sm:$0xff]
        %v475 = vld [vmem:[%s2 + $0x610] sm:$0xff]
        %v476 = vld [vmem:[%s2 + $0x618] sm:$0xff]
        %v477 = vld [vmem:[%s2 + $0x620] sm:$0xff]
        %v478 = vld [vmem:[%s2 + $0x628] sm:$0xff]
        %v479 = vld [vmem:[%s2 + $0x630] sm:$0xff]
        %v480 = vld [vmem:[%s2 + $0x638] sm:$0xff]
        %v481 = vld [vmem:[%s2 + $0x640] sm:$0xff]
        %v482 = vld [vmem:[%s2 + $0x648] sm:$0xff]
        %v483 = vld [vmem:[%s2 + $0x650] sm:$0xff]
        %v484 = vld [vmem:[%s2 + $0x658] sm:$0xff]
        %v485 = vld [vmem:[%s2 + $0x660] sm:$0xff]
        %v486 = vld [vmem:[%s2 + $0x668] sm:$0xff]
        %v487 = vld [vmem:[%s2 + $0x670] sm:$0xff]
        %v488 = vld [vmem:[%s2 + $0x678] sm:$0xff]
        %v489 = vld [vmem:[%s2 + $0x680] sm:$0xff]
        %v490 = vld [vmem:[%s2 + $0x688] sm:$0xff]
        %v491 = vld [vmem:[%s2 + $0x690] sm:$0xff]
        %v492 = vld [vmem:[%s2 + $0x698] sm:$0xff]
        %v493 = vld [vmem:[%s2 + $0x6a0] sm:$0xff]
        %v494 = vld [vmem:[%s2 + $0x6a8] sm:$0xff]
        %v495 = vld [vmem:[%s2 + $0x6b0] sm:$0xff]
        %v496 = vld [vmem:[%s2 + $0x6b8] sm:$0xff]
        %v497 = vld [vmem:[%s2 + $0x6c0] sm:$0xff]
        %v498 = vld [vmem:[%s2 + $0x6c8] sm:$0xff]
        %v499 = vld [vmem:[%s2 + $0x6d0] sm:$0xff]
        %v500 = vld [vmem:[%s2 + $0x6d8] sm:$0xff]
        %v501 = vld [vmem:[%s2 + $0x6e0] sm:$0xff]
        %v502 = vld [vmem:[%s2 + $0x6e8] sm:$0xff]
        %v503 = vld [vmem:[%s2 + $0x6f0] sm:$0xff]
        %v504 = vld [vmem:[%s2 + $0x6f8] sm:$0xff]
        %v505 = vld [vmem:[%s2 + $0x700] sm:$0xff]
        %v506 = vld [vmem:[%s2 + $0x708] sm:$0xff]
        %v507 = vld [vmem:[%s2 + $0x710] sm:$0xff]
        %v508 = vld [vmem:[%s2 + $0x718] sm:$0xff]
        %v509 = vld [vmem:[%s2 + $0x720] sm:$0xff]
        %v510 = vld [vmem:[%s2 + $0x728] sm:$0xff]
        %v511 = vld [vmem:[%s2 + $0x730] sm:$0xff]
        %v512 = vld [vmem:[%s2 + $0x738] sm:$0xff]
        %v513 = vld [vmem:[%s2 + $0x740] sm:$0xff]
        %v514 = vld [vmem:[%s2 + $0x748] sm:$0xff]
        %v515 = vld [vmem:[%s2 + $0x750] sm:$0xff]
        %v516 = vld [vmem:[%s2 + $0x758] sm:$0xff]
        %v517 = vld [vmem:[%s2 + $0x760] sm:$0xff]
        %v518 = vld [vmem:[%s2 + $0x768] sm:$0xff]
        %v519 = vld [vmem:[%s2 + $0x770] sm:$0xff]
        %v520 = vld [vmem:[%s2 + $0x778] sm:$0xff]
        %v521 = vld [vmem:[%s2 + $0x780] sm:$0xff]
        %v522 = vld [vmem:[%s2 + $0x788] sm:$0xff]
        %v523 = vld [vmem:[%s2 + $0x790] sm:$0xff]
        %v524 = vld [vmem:[%s2 + $0x798] sm:$0xff]
        %v525 = vld [vmem:[%s2 + $0x7a0] sm:$0xff]
        %v526 = vld [vmem:[%s2 + $0x7a8] sm:$0xff]
        %v527 = vld [vmem:[%s2 + $0x7b0] sm:$0xff]
        %v528 = vld [vmem:[%s2 + $0x7b8] sm:$0xff]
        %v529 = vld [vmem:[%s2 + $0x7c0] sm:$0xff]
        %v530 = vld [vmem:[%s2 + $0x7c8] sm:$0xff]
        %v531 = vld [vmem:[%s2 + $0x7d0] sm:$0xff]
        %v532 = vld [vmem:[%s2 + $0x7d8] sm:$0xff]
        %v533 = vld [vmem:[%s2 + $0x7e0] sm:$0xff]
        %v534 = vld [vmem:[%s2 + $0x7e8] sm:$0xff]
        %v535 = vld [vmem:[%s2 + $0x7f0] sm:$0xff]
        %v536 = vld [vmem:[%s2 + $0x7f8] sm:$0xff]
        %v537 = vld [vmem:[%s2 + $0x800] sm:$0xff]
        %v538 = vld [vmem:[%s2 + $0x808] sm:$0xff]
        %v539 = vld [vmem:[%s2 + $0x810] sm:$0xff]
        %v540 = vld [vmem:[%s2 + $0x818] sm:$0xff]
        %v541 = vld [vmem:[%s2 + $0x820] sm:$0xff]
        %v542 = vld [vmem:[%s2 + $0x828] sm:$0xff]
        %v543 = vld [vmem:[%s2 + $0x830] sm:$0xff]
        %v544 = vld [vmem:[%s2 + $0x838] sm:$0xff]
        %v545 = vld [vmem:[%s2 + $0x840] sm:$0xff]
        %v546 = vld [vmem:[%s2 + $0x848] sm:$0xff]
        %v547 = vld [vmem:[%s2 + $0x850] sm:$0xff]
        %v548 = vld [vmem:[%s2 + $0x858] sm:$0xff]
        %v549 = vld [vmem:[%s2 + $0x860] sm:$0xff]
        %v550 = vld [vmem:[%s2 + $0x868] sm:$0xff]
        %v551 = vld [vmem:[%s2 + $0x870] sm:$0xff]
        %v552 = vld [vmem:[%s2 + $0x878] sm:$0xff]
        %v553 = vld [vmem:[%s2 + $0x880] sm:$0xff]
        %v554 = vld [vmem:[%s2 + $0x888] sm:$0xff]
        %v555 = vld [vmem:[%s2 + $0x890] sm:$0xff]
        %v556 = vld [vmem:[%s2 + $0x898] sm:$0xff]
        %v557 = vld [vmem:[%s2 + $0x8a0] sm:$0xff]
        %v558 = vld [vmem:[%s2 + $0x8a8] sm:$0xff]
        %v559 = vld [vmem:[%s2 + $0x8b0] sm:$0xff]
        %v560 = vld [vmem:[%s2 + $0x8b8] sm:$0xff]
        %v561 = vld [vmem:[%s2 + $0x8c0] sm:$0xff]
        %v562 = vld [vmem:[%s2 + $0x8c8] sm:$0xff]
        %v563 = vld [vmem:[%s2 + $0x8d0] sm:$0xff]
        %v564 = vld [vmem:[%s2 + $0x8d8] sm:$0xff]
        %v565 = vld [vmem:[%s2 + $0x8e0] sm:$0xff]
        %v566 = vld [vmem:[%s2 + $0x8e8] sm:$0xff]
        %v567 = vld [vmem:[%s2 + $0x8f0] sm:$0xff]
        %v568 = vld [vmem:[%s2 + $0x8f8] sm:$0xff]
        %v569 = vld [vmem:[%s2 + $0x900] sm:$0xff]
        %v570 = vld [vmem:[%s2 + $0x908] sm:$0xff]
        %v571 = vld [vmem:[%s2 + $0x910] sm:$0xff]
        %v572 = vld [vmem:[%s2 + $0x918] sm:$0xff]
        %v573 = vld [vmem:[%s2 + $0x920] sm:$0xff]
        %v574 = vld [vmem:[%s2 + $0x928] sm:$0xff]
        %v575 = vld [vmem:[%s2 + $0x930] sm:$0xff]
        %v576 = vld [vmem:[%s2 + $0x938] sm:$0xff]
        %v577 = vld [vmem:[%s2 + $0x940] sm:$0xff]
        %v578 = vld [vmem:[%s2 + $0x948] sm:$0xff]
        %v579 = vld [vmem:[%s2 + $0x950] sm:$0xff]
        %v580 = vld [vmem:[%s2 + $0x958] sm:$0xff]
        %v581 = vld [vmem:[%s2 + $0x960] sm:$0xff]
        %v582 = vld [vmem:[%s2 + $0x968] sm:$0xff]
        %v583 = vld [vmem:[%s2 + $0x970] sm:$0xff]
        %v584 = vld [vmem:[%s2 + $0x978] sm:$0xff]
        %v585 = vld [vmem:[%s2 + $0x980] sm:$0xff]
        %v586 = vld [vmem:[%s2 + $0x988] sm:$0xff]
        %v587 = vld [vmem:[%s2 + $0x990] sm:$0xff]
        %v588 = vld [vmem:[%s2 + $0x998] sm:$0xff]
        %v589 = vld [vmem:[%s2 + $0x9a0] sm:$0xff]
        %v590 = vld [vmem:[%s2 + $0x9a8] sm:$0xff]
        %v591 = vld [vmem:[%s2 + $0x9b0] sm:$0xff]
        %v592 = vld [vmem:[%s2 + $0x9b8] sm:$0xff]
        %v593 = vld [vmem:[%s2 + $0x9c0] sm:$0xff]
        %v594 = vld [vmem:[%s2 + $0x9c8] sm:$0xff]
        %v595 = vld [vmem:[%s2 + $0x9d0] sm:$0xff]
        %v596 = vld [vmem:[%s2 + $0x9d8] sm:$0xff]
        %v597 = vld [vmem:[%s2 + $0x9e0] sm:$0xff]
        %v598 = vld [vmem:[%s2 + $0x9e8] sm:$0xff]
        %v599 = vld [vmem:[%s2 + $0x9f0] sm:$0xff]
        %v600 = vld [vmem:[%s2 + $0x9f8] sm:$0xff]
        %v601 = vld [vmem:[%s2 + $0xa00] sm:$0xff]
        %v602 = vld [vmem:[%s2 + $0xa08] sm:$0xff]
        %v603 = vld [vmem:[%s2 + $0xa10] sm:$0xff]
        %v604 = vld [vmem:[%s2 + $0xa18] sm:$0xff]
        %v605 = vld [vmem:[%s2 + $0xa20] sm:$0xff]
        %v606 = vld [vmem:[%s2 + $0xa28] sm:$0xff]
        %v607 = vld [vmem:[%s2 + $0xa30] sm:$0xff]
        %v608 = vld [vmem:[%s2 + $0xa38] sm:$0xff]
        %v609 = vld [vmem:[%s2 + $0xa40] sm:$0xff]
        %v610 = vld [vmem:[%s2 + $0xa48] sm:$0xff]
        %v611 = vld [vmem:[%s2 + $0xa50] sm:$0xff]
        %v612 = vld [vmem:[%s2 + $0xa58] sm:$0xff]
        %v613 = vld [vmem:[%s2 + $0xa60] sm:$0xff]
        %v614 = vld [vmem:[%s2 + $0xa68] sm:$0xff]
        %v615 = vld [vmem:[%s2 + $0xa70] sm:$0xff]
        %v616 = vld [vmem:[%s2 + $0xa78] sm:$0xff]
        %v617 = vld [vmem:[%s2 + $0xa80] sm:$0xff]
        %v618 = vld [vmem:[%s2 + $0xa88] sm:$0xff]
        %v619 = vld [vmem:[%s2 + $0xa90] sm:$0xff]
        %v620 = vld [vmem:[%s2 + $0xa98] sm:$0xff]
        %v621 = vld [vmem:[%s2 + $0xaa0] sm:$0xff]
        %v622 = vld [vmem:[%s2 + $0xaa8] sm:$0xff]
        %v623 = vld [vmem:[%s2 + $0xab0] sm:$0xff]
        %v624 = vld [vmem:[%s2 + $0xab8] sm:$0xff]
        %v625 = vld [vmem:[%s2 + $0xac0] sm:$0xff]
        %v626 = vld [vmem:[%s2 + $0xac8] sm:$0xff]
        %v627 = vld [vmem:[%s2 + $0xad0] sm:$0xff]
        %v628 = vld [vmem:[%s2 + $0xad8] sm:$0xff]
        %v629 = vld [vmem:[%s2 + $0xae0] sm:$0xff]
        %v630 = vld [vmem:[%s2 + $0xae8] sm:$0xff]
        %v631 = vld [vmem:[%s2 + $0xaf0] sm:$0xff]
        %v632 = vld [vmem:[%s2 + $0xaf8] sm:$0xff]
        %v633 = vld [vmem:[%s2 + $0xb00] sm:$0xff]
        %v634 = vld [vmem:[%s2 + $0xb08] sm:$0xff]
        %v635 = vld [vmem:[%s2 + $0xb10] sm:$0xff]
        %v636 = vld [vmem:[%s2 + $0xb18] sm:$0xff]
        %v637 = vld [vmem:[%s2 + $0xb20] sm:$0xff]
        %v638 = vld [vmem:[%s2 + $0xb28] sm:$0xff]
        %v639 = vld [vmem:[%s2 + $0xb30] sm:$0xff]
        %v640 = vld [vmem:[%s2 + $0xb38] sm:$0xff]
        %v641 = vld [vmem:[%s2 + $0xb40] sm:$0xff]
        %v642 = vld [vmem:[%s2 + $0xb48] sm:$0xff]
        %v643 = vld [vmem:[%s2 + $0xb50] sm:$0xff]
        %v644 = vld [vmem:[%s2 + $0xb58] sm:$0xff]
        %v645 = vld [vmem:[%s2 + $0xb60] sm:$0xff]
        %v646 = vld [vmem:[%s2 + $0xb68] sm:$0xff]
        %v647 = vld [vmem:[%s2 + $0xb70] sm:$0xff]
        %v648 = vld [vmem:[%s2 + $0xb78] sm:$0xff]
        %v649 = vld [vmem:[%s2 + $0xb80] sm:$0xff]
        %v650 = vld [vmem:[%s2 + $0xb88] sm:$0xff]
        %v651 = vld [vmem:[%s2 + $0xb90] sm:$0xff]
        %v652 = vld [vmem:[%s2 + $0xb98] sm:$0xff]
        %v653 = vld [vmem:[%s2 + $0xba0] sm:$0xff]
        %v654 = vld [vmem:[%s2 + $0xba8] sm:$0xff]
        %v655 = vld [vmem:[%s2 + $0xbb0] sm:$0xff]
        %v656 = vld [vmem:[%s2 + $0xbb8] sm:$0xff]
        %v657 = vld [vmem:[%s2 + $0xbc0] sm:$0xff]
        %v658 = vld [vmem:[%s2 + $0xbc8] sm:$0xff]
        %v659 = vld [vmem:[%s2 + $0xbd0] sm:$0xff]
        %v660 = vld [vmem:[%s2 + $0xbd8] sm:$0xff]
        %v661 = vld [vmem:[%s2 + $0xbe0] sm:$0xff]
        %v662 = vld [vmem:[%s2 + $0xbe8] sm:$0xff]
        %v663 = vld [vmem:[%s2 + $0xbf0] sm:$0xff]
        %v664 = vld [vmem:[%s2 + $0xbf8] sm:$0xff]
        %v665 = vld [vmem:[%s2 + $0xc00] sm:$0xff]
        %v666 = vld [vmem:[%s2 + $0xc08] sm:$0xff]
        %v667 = vld [vmem:[%s2 + $0xc10] sm:$0xff]
        %v668 = vld [vmem:[%s2 + $0xc18] sm:$0xff]
        %v669 = vld [vmem:[%s2 + $0xc20] sm:$0xff]
        %v670 = vld [vmem:[%s2 + $0xc28] sm:$0xff]
        %v671 = vld [vmem:[%s2 + $0xc30] sm:$0xff]
        %v672 = vld [vmem:[%s2 + $0xc38] sm:$0xff]
        %v673 = vld [vmem:[%s2 + $0xc40] sm:$0xff]
        %v674 = vld [vmem:[%s2 + $0xc48] sm:$0xff]
        %v675 = vld [vmem:[%s2 + $0xc50] sm:$0xff]
        %v676 = vld [vmem:[%s2 + $0xc58] sm:$0xff]
        %v677 = vld [vmem:[%s2 + $0xc60] sm:$0xff]
        %v678 = vld [vmem:[%s2 + $0xc68] sm:$0xff]
        %v679 = vld [vmem:[%s2 + $0xc70] sm:$0xff]
        %v680 = vld [vmem:[%s2 + $0xc78] sm:$0xff]
        %v681 = vld [vmem:[%s2 + $0xc80] sm:$0xff]
        %v682 = vld [vmem:[%s2 + $0xc88] sm:$0xff]
        %v683 = vld [vmem:[%s2 + $0xc90] sm:$0xff]
        %v684 = vld [vmem:[%s2 + $0xc98] sm:$0xff]
        %v685 = vld [vmem:[%s2 + $0xca0] sm:$0xff]
        %v686 = vld [vmem:[%s2 + $0xca8] sm:$0xff]
        %v687 = vld [vmem:[%s2 + $0xcb0] sm:$0xff]
        %v688 = vld [vmem:[%s2 + $0xcb8] sm:$0xff]
        %v689 = vld [vmem:[%s2 + $0xcc0] sm:$0xff]
        %v690 = vld [vmem:[%s2 + $0xcc8] sm:$0xff]
        %v691 = vld [vmem:[%s2 + $0xcd0] sm:$0xff]
        %v692 = vld [vmem:[%s2 + $0xcd8] sm:$0xff]
        %v693 = vld [vmem:[%s2 + $0xce0] sm:$0xff]
        %v694 = vld [vmem:[%s2 + $0xce8] sm:$0xff]
        %v695 = vld [vmem:[%s2 + $0xcf0] sm:$0xff]
        %v696 = vld [vmem:[%s2 + $0xcf8] sm:$0xff]
        %v697 = vld [vmem:[%s2 + $0xd00] sm:$0xff]
        %v698 = vld [vmem:[%s2 + $0xd08] sm:$0xff]
        %v699 = vld [vmem:[%s2 + $0xd10] sm:$0xff]
        %v700 = vld [vmem:[%s2 + $0xd18] sm:$0xff]
        %v701 = vld [vmem:[%s2 + $0xd20] sm:$0xff]
        %v702 = vld [vmem:[%s2 + $0xd28] sm:$0xff]
        %v703 = vld [vmem:[%s2 + $0xd30] sm:$0xff]
        %v704 = vld [vmem:[%s2 + $0xd38] sm:$0xff]
        %v705 = vld [vmem:[%s2 + $0xd40] sm:$0xff]
        %v706 = vld [vmem:[%s2 + $0xd48] sm:$0xff]
        %v707 = vld [vmem:[%s2 + $0xd50] sm:$0xff]
        %v708 = vld [vmem:[%s2 + $0xd58] sm:$0xff]
        %v709 = vld [vmem:[%s2 + $0xd60] sm:$0xff]
        %v710 = vld [vmem:[%s2 + $0xd68] sm:$0xff]
        %v711 = vld [vmem:[%s2 + $0xd70] sm:$0xff]
        %v712 = vld [vmem:[%s2 + $0xd78] sm:$0xff]
        %v713 = vld [vmem:[%s2 + $0xd80] sm:$0xff]
        %v714 = vld [vmem:[%s2 + $0xd88] sm:$0xff]
        %v715 = vld [vmem:[%s2 + $0xd90] sm:$0xff]
        %v716 = vld [vmem:[%s2 + $0xd98] sm:$0xff]
        %v717 = vld [vmem:[%s2 + $0xda0] sm:$0xff]
        %v718 = vld [vmem:[%s2 + $0xda8] sm:$0xff]
        %v719 = vld [vmem:[%s2 + $0xdb0] sm:$0xff]
        %v720 = vld [vmem:[%s2 + $0xdb8] sm:$0xff]
        %v721 = vld [vmem:[%s2 + $0xdc0] sm:$0xff]
        %v722 = vld [vmem:[%s2 + $0xdc8] sm:$0xff]
        %v723 = vld [vmem:[%s2 + $0xdd0] sm:$0xff]
        %v724 = vld [vmem:[%s2 + $0xdd8] sm:$0xff]
        %v725 = vld [vmem:[%s2 + $0xde0] sm:$0xff]
        %v726 = vld [vmem:[%s2 + $0xde8] sm:$0xff]
        %v727 = vld [vmem:[%s2 + $0xdf0] sm:$0xff]
        %v728 = vld [vmem:[%s2 + $0xdf8] sm:$0xff]
        %v729 = vld [vmem:[%s2 + $0xe00] sm:$0xff]
        %v730 = vld [vmem:[%s2 + $0xe08] sm:$0xff]
        %v731 = vld [vmem:[%s2 + $0xe10] sm:$0xff]
        %v732 = vld [vmem:[%s2 + $0xe18] sm:$0xff]
        %v733 = vld [vmem:[%s2 + $0xe20] sm:$0xff]
        %v734 = vld [vmem:[%s2 + $0xe28] sm:$0xff]
        %v735 = vld [vmem:[%s2 + $0xe30] sm:$0xff]
        %v736 = vld [vmem:[%s2 + $0xe38] sm:$0xff]
        %v737 = vld [vmem:[%s2 + $0xe40] sm:$0xff]
        %v738 = vld [vmem:[%s2 + $0xe48] sm:$0xff]
        %v739 = vld [vmem:[%s2 + $0xe50] sm:$0xff]
        %v740 = vld [vmem:[%s2 + $0xe58] sm:$0xff]
        %v741 = vld [vmem:[%s2 + $0xe60] sm:$0xff]
        %v742 = vld [vmem:[%s2 + $0xe68] sm:$0xff]
        %v743 = vld [vmem:[%s2 + $0xe70] sm:$0xff]
        %v744 = vld [vmem:[%s2 + $0xe78] sm:$0xff]
        %v745 = vld [vmem:[%s2 + $0xe80] sm:$0xff]
        %v746 = vld [vmem:[%s2 + $0xe88] sm:$0xff]
        %v747 = vld [vmem:[%s2 + $0xe90] sm:$0xff]
        %v748 = vld [vmem:[%s2 + $0xe98] sm:$0xff]
        %v749 = vld [vmem:[%s2 + $0xea0] sm:$0xff]
        %v750 = vld [vmem:[%s2 + $0xea8] sm:$0xff]
        %v751 = vld [vmem:[%s2 + $0xeb0] sm:$0xff]
        %v752 = vld [vmem:[%s2 + $0xeb8] sm:$0xff]
        %v753 = vld [vmem:[%s2 + $0xec0] sm:$0xff]
        %v754 = vld [vmem:[%s2 + $0xec8] sm:$0xff]
        %v755 = vld [vmem:[%s2 + $0xed0] sm:$0xff]
        %v756 = vld [vmem:[%s2 + $0xed8] sm:$0xff]
        %v757 = vld [vmem:[%s2 + $0xee0] sm:$0xff]
        %v758 = vld [vmem:[%s2 + $0xee8] sm:$0xff]
        %v759 = vld [vmem:[%s2 + $0xef0] sm:$0xff]
        %v760 = vld [vmem:[%s2 + $0xef8] sm:$0xff]
        %v761 = vld [vmem:[%s2 + $0xf00] sm:$0xff]
        %v762 = vld [vmem:[%s2 + $0xf08] sm:$0xff]
        %v763 = vld [vmem:[%s2 + $0xf10] sm:$0xff]
        %v764 = vld [vmem:[%s2 + $0xf18] sm:$0xff]
        %v765 = vld [vmem:[%s2 + $0xf20] sm:$0xff]
        %v766 = vld [vmem:[%s2 + $0xf28] sm:$0xff]
        %v767 = vld [vmem:[%s2 + $0xf30] sm:$0xff]
        %v768 = vld [vmem:[%s2 + $0xf38] sm:$0xff]
        %v769 = vld [vmem:[%s2 + $0xf40] sm:$0xff]
        %v770 = vld [vmem:[%s2 + $0xf48] sm:$0xff]
        %v771 = vld [vmem:[%s2 + $0xf50] sm:$0xff]
        %v772 = vld [vmem:[%s2 + $0xf58] sm:$0xff]
        %v773 = vld [vmem:[%s2 + $0xf60] sm:$0xff]
        %v774 = vld [vmem:[%s2 + $0xf68] sm:$0xff]
        %v775 = vld [vmem:[%s2 + $0xf70] sm:$0xff]
        %v776 = vld [vmem:[%s2 + $0xf78] sm:$0xff]
        %v777 = vld [vmem:[%s2 + $0xf80] sm:$0xff]
        %v778 = vld [vmem:[%s2 + $0xf88] sm:$0xff]
        %v779 = vld [vmem:[%s2 + $0xf90] sm:$0xff]
        %v780 = vld [vmem:[%s2 + $0xf98] sm:$0xff]
        %v781 = vld [vmem:[%s2 + $0xfa0] sm:$0xff]
        %v782 = vld [vmem:[%s2 + $0xfa8] sm:$0xff]
        %v783 = vld [vmem:[%s2 + $0xfb0] sm:$0xff]
        %v784 = vld [vmem:[%s2 + $0xfb8] sm:$0xff]
        %v785 = vld [vmem:[%s2 + $0xfc0] sm:$0xff]
        %v786 = vld [vmem:[%s2 + $0xfc8] sm:$0xff]
        %v787 = vld [vmem:[%s2 + $0xfd0] sm:$0xff]
        %v788 = vld [vmem:[%s2 + $0xfd8] sm:$0xff]
        %v789 = vld [vmem:[%s2 + $0xfe0] sm:$0xff]
        %v790 = vld [vmem:[%s2 + $0xfe8] sm:$0xff]
        %v791 = vld [vmem:[%s2 + $0xff0] sm:$0xff]
        %v792 = vld [vmem:[%s2 + $0xff8] sm:$0xff]
        %v1305 = vunpack.c.l.b16 %v281
        %v1306 = vunpack.c.h.b16 %v281
        %v1307 = vunpack.c.l.b16 %v282
        %v1308 = vunpack.c.h.b16 %v282
        %v1309 = vunpack.c.l.b16 %v283
        %v1310 = vunpack.c.h.b16 %v283
        %v1311 = vunpack.c.l.b16 %v284
        %v1312 = vunpack.c.h.b16 %v284
        %v1313 = vunpack.c.l.b16 %v285
        %v1314 = vunpack.c.h.b16 %v285
        %v1315 = vunpack.c.l.b16 %v286
        %v1316 = vunpack.c.h.b16 %v286
        %v1317 = vunpack.c.l.b16 %v287
        %v1318 = vunpack.c.h.b16 %v287
        %v1319 = vunpack.c.l.b16 %v288
        %v1320 = vunpack.c.h.b16 %v288
        %v1321 = vunpack.c.l.b16 %v289
        %v1322 = vunpack.c.h.b16 %v289
        %v1323 = vunpack.c.l.b16 %v290
        %v1324 = vunpack.c.h.b16 %v290
        %v1325 = vunpack.c.l.b16 %v291
        %v1326 = vunpack.c.h.b16 %v291
        %v1327 = vunpack.c.l.b16 %v292
        %v1328 = vunpack.c.h.b16 %v292
        %v1329 = vunpack.c.l.b16 %v293
        %v1330 = vunpack.c.h.b16 %v293
        %v1331 = vunpack.c.l.b16 %v294
        %v1332 = vunpack.c.h.b16 %v294
        %v1333 = vunpack.c.l.b16 %v295
        %v1334 = vunpack.c.h.b16 %v295
        %v1335 = vunpack.c.l.b16 %v296
        %v1336 = vunpack.c.h.b16 %v296
        %v1337 = vunpack.c.l.b16 %v297
        %v1338 = vunpack.c.h.b16 %v297
        %v1339 = vunpack.c.l.b16 %v298
        %v1340 = vunpack.c.h.b16 %v298
        %v1341 = vunpack.c.l.b16 %v299
        %v1342 = vunpack.c.h.b16 %v299
        %v1343 = vunpack.c.l.b16 %v300
        %v1344 = vunpack.c.h.b16 %v300
        %v1345 = vunpack.c.l.b16 %v301
        %v1346 = vunpack.c.h.b16 %v301
        %v1347 = vunpack.c.l.b16 %v302
        %v1348 = vunpack.c.h.b16 %v302
        %v1349 = vunpack.c.l.b16 %v303
        %v1350 = vunpack.c.h.b16 %v303
        %v1351 = vunpack.c.l.b16 %v304
        %v1352 = vunpack.c.h.b16 %v304
        %v1353 = vunpack.c.l.b16 %v305
        %v1354 = vunpack.c.h.b16 %v305
        %v1355 = vunpack.c.l.b16 %v306
        %v1356 = vunpack.c.h.b16 %v306
        %v1357 = vunpack.c.l.b16 %v307
        %v1358 = vunpack.c.h.b16 %v307
        %v1359 = vunpack.c.l.b16 %v308
        %v1360 = vunpack.c.h.b16 %v308
        %v1361 = vunpack.c.l.b16 %v309
        %v1362 = vunpack.c.h.b16 %v309
        %v1363 = vunpack.c.l.b16 %v310
        %v1364 = vunpack.c.h.b16 %v310
        %v1365 = vunpack.c.l.b16 %v311
        %v1366 = vunpack.c.h.b16 %v311
        %v1367 = vunpack.c.l.b16 %v312
        %v1368 = vunpack.c.h.b16 %v312
        %v1369 = vunpack.c.l.b16 %v313
        %v1370 = vunpack.c.h.b16 %v313
        %v1371 = vunpack.c.l.b16 %v314
        %v1372 = vunpack.c.h.b16 %v314
        %v1373 = vunpack.c.l.b16 %v315
        %v1374 = vunpack.c.h.b16 %v315
        %v1375 = vunpack.c.l.b16 %v316
        %v1376 = vunpack.c.h.b16 %v316
        %v1377 = vunpack.c.l.b16 %v317
        %v1378 = vunpack.c.h.b16 %v317
        %v1379 = vunpack.c.l.b16 %v318
        %v1380 = vunpack.c.h.b16 %v318
        %v1381 = vunpack.c.l.b16 %v319
        %v1382 = vunpack.c.h.b16 %v319
        %v1383 = vunpack.c.l.b16 %v320
        %v1384 = vunpack.c.h.b16 %v320
        %v1385 = vunpack.c.l.b16 %v321
        %v1386 = vunpack.c.h.b16 %v321
        %v1387 = vunpack.c.l.b16 %v322
        %v1388 = vunpack.c.h.b16 %v322
        %v1389 = vunpack.c.l.b16 %v323
        %v1390 = vunpack.c.h.b16 %v323
        %v1391 = vunpack.c.l.b16 %v324
        %v1392 = vunpack.c.h.b16 %v324
        %v1393 = vunpack.c.l.b16 %v325
        %v1394 = vunpack.c.h.b16 %v325
        %v1395 = vunpack.c.l.b16 %v326
        %v1396 = vunpack.c.h.b16 %v326
        %v1397 = vunpack.c.l.b16 %v327
        %v1398 = vunpack.c.h.b16 %v327
        %v1399 = vunpack.c.l.b16 %v328
        %v1400 = vunpack.c.h.b16 %v328
        %v1401 = vunpack.c.l.b16 %v329
        %v1402 = vunpack.c.h.b16 %v329
        %v1403 = vunpack.c.l.b16 %v330
        %v1404 = vunpack.c.h.b16 %v330
        %v1405 = vunpack.c.l.b16 %v331
        %v1406 = vunpack.c.h.b16 %v331
        %v1407 = vunpack.c.l.b16 %v332
        %v1408 = vunpack.c.h.b16 %v332
        %v1409 = vunpack.c.l.b16 %v333
        %v1410 = vunpack.c.h.b16 %v333
        %v1411 = vunpack.c.l.b16 %v334
        %v1412 = vunpack.c.h.b16 %v334
        %v1413 = vunpack.c.l.b16 %v335
        %v1414 = vunpack.c.h.b16 %v335
        %v1415 = vunpack.c.l.b16 %v336
        %v1416 = vunpack.c.h.b16 %v336
        %v1417 = vunpack.c.l.b16 %v337
        %v1418 = vunpack.c.h.b16 %v337
        %v1419 = vunpack.c.l.b16 %v338
        %v1420 = vunpack.c.h.b16 %v338
        %v1421 = vunpack.c.l.b16 %v339
        %v1422 = vunpack.c.h.b16 %v339
        %v1423 = vunpack.c.l.b16 %v340
        %v1424 = vunpack.c.h.b16 %v340
        %v1425 = vunpack.c.l.b16 %v341
        %v1426 = vunpack.c.h.b16 %v341
        %v1427 = vunpack.c.l.b16 %v342
        %v1428 = vunpack.c.h.b16 %v342
        %v1429 = vunpack.c.l.b16 %v343
        %v1430 = vunpack.c.h.b16 %v343
        %v1431 = vunpack.c.l.b16 %v344
        %v1432 = vunpack.c.h.b16 %v344
        %v1433 = vunpack.c.l.b16 %v345
        %v1434 = vunpack.c.h.b16 %v345
        %v1435 = vunpack.c.l.b16 %v346
        %v1436 = vunpack.c.h.b16 %v346
        %v1437 = vunpack.c.l.b16 %v347
        %v1438 = vunpack.c.h.b16 %v347
        %v1439 = vunpack.c.l.b16 %v348
        %v1440 = vunpack.c.h.b16 %v348
        %v1441 = vunpack.c.l.b16 %v349
        %v1442 = vunpack.c.h.b16 %v349
        %v1443 = vunpack.c.l.b16 %v350
        %v1444 = vunpack.c.h.b16 %v350
        %v1445 = vunpack.c.l.b16 %v351
        %v1446 = vunpack.c.h.b16 %v351
        %v1447 = vunpack.c.l.b16 %v352
        %v1448 = vunpack.c.h.b16 %v352
        %v1449 = vunpack.c.l.b16 %v353
        %v1450 = vunpack.c.h.b16 %v353
        %v1451 = vunpack.c.l.b16 %v354
        %v1452 = vunpack.c.h.b16 %v354
        %v1453 = vunpack.c.l.b16 %v355
        %v1454 = vunpack.c.h.b16 %v355
        %v1455 = vunpack.c.l.b16 %v356
        %v1456 = vunpack.c.h.b16 %v356
        %v1457 = vunpack.c.l.b16 %v357
        %v1458 = vunpack.c.h.b16 %v357
        %v1459 = vunpack.c.l.b16 %v358
        %v1460 = vunpack.c.h.b16 %v358
        %v1461 = vunpack.c.l.b16 %v359
        %v1462 = vunpack.c.h.b16 %v359
        %v1463 = vunpack.c.l.b16 %v360
        %v1464 = vunpack.c.h.b16 %v360
        %v1465 = vunpack.c.l.b16 %v361
        %v1466 = vunpack.c.h.b16 %v361
        %v1467 = vunpack.c.l.b16 %v362
        %v1468 = vunpack.c.h.b16 %v362
        %v1469 = vunpack.c.l.b16 %v363
        %v1470 = vunpack.c.h.b16 %v363
        %v1471 = vunpack.c.l.b16 %v364
        %v1472 = vunpack.c.h.b16 %v364
        %v1473 = vunpack.c.l.b16 %v365
        %v1474 = vunpack.c.h.b16 %v365
        %v1475 = vunpack.c.l.b16 %v366
        %v1476 = vunpack.c.h.b16 %v366
        %v1477 = vunpack.c.l.b16 %v367
        %v1478 = vunpack.c.h.b16 %v367
        %v1479 = vunpack.c.l.b16 %v368
        %v1480 = vunpack.c.h.b16 %v368
        %v1481 = vunpack.c.l.b16 %v369
        %v1482 = vunpack.c.h.b16 %v369
        %v1483 = vunpack.c.l.b16 %v370
        %v1484 = vunpack.c.h.b16 %v370
        %v1485 = vunpack.c.l.b16 %v371
        %v1486 = vunpack.c.h.b16 %v371
        %v1487 = vunpack.c.l.b16 %v372
        %v1488 = vunpack.c.h.b16 %v372
        %v1489 = vunpack.c.l.b16 %v373
        %v1490 = vunpack.c.h.b16 %v373
        %v1491 = vunpack.c.l.b16 %v374
        %v1492 = vunpack.c.h.b16 %v374
        %v1493 = vunpack.c.l.b16 %v375
        %v1494 = vunpack.c.h.b16 %v375
        %v1495 = vunpack.c.l.b16 %v376
        %v1496 = vunpack.c.h.b16 %v376
        %v1497 = vunpack.c.l.b16 %v377
        %v1498 = vunpack.c.h.b16 %v377
        %v1499 = vunpack.c.l.b16 %v378
        %v1500 = vunpack.c.h.b16 %v378
        %v1501 = vunpack.c.l.b16 %v379
        %v1502 = vunpack.c.h.b16 %v379
        %v1503 = vunpack.c.l.b16 %v380
        %v1504 = vunpack.c.h.b16 %v380
        %v1505 = vunpack.c.l.b16 %v381
        %v1506 = vunpack.c.h.b16 %v381
        %v1507 = vunpack.c.l.b16 %v382
        %v1508 = vunpack.c.h.b16 %v382
        %v1509 = vunpack.c.l.b16 %v383
        %v1510 = vunpack.c.h.b16 %v383
        %v1511 = vunpack.c.l.b16 %v384
        %v1512 = vunpack.c.h.b16 %v384
        %v1513 = vunpack.c.l.b16 %v385
        %v1514 = vunpack.c.h.b16 %v385
        %v1515 = vunpack.c.l.b16 %v386
        %v1516 = vunpack.c.h.b16 %v386
        %v1517 = vunpack.c.l.b16 %v387
        %v1518 = vunpack.c.h.b16 %v387
        %v1519 = vunpack.c.l.b16 %v388
        %v1520 = vunpack.c.h.b16 %v388
        %v1521 = vunpack.c.l.b16 %v389
        %v1522 = vunpack.c.h.b16 %v389
        %v1523 = vunpack.c.l.b16 %v390
        %v1524 = vunpack.c.h.b16 %v390
        %v1525 = vunpack.c.l.b16 %v391
        %v1526 = vunpack.c.h.b16 %v391
        %v1527 = vunpack.c.l.b16 %v392
        %v1528 = vunpack.c.h.b16 %v392
        %v1529 = vunpack.c.l.b16 %v393
        %v1530 = vunpack.c.h.b16 %v393
        %v1531 = vunpack.c.l.b16 %v394
        %v1532 = vunpack.c.h.b16 %v394
        %v1533 = vunpack.c.l.b16 %v395
        %v1534 = vunpack.c.h.b16 %v395
        %v1535 = vunpack.c.l.b16 %v396
        %v1536 = vunpack.c.h.b16 %v396
        %v1537 = vunpack.c.l.b16 %v397
        %v1538 = vunpack.c.h.b16 %v397
        %v1539 = vunpack.c.l.b16 %v398
        %v1540 = vunpack.c.h.b16 %v398
        %v1541 = vunpack.c.l.b16 %v399
        %v1542 = vunpack.c.h.b16 %v399
        %v1543 = vunpack.c.l.b16 %v400
        %v1544 = vunpack.c.h.b16 %v400
        %v1545 = vunpack.c.l.b16 %v401
        %v1546 = vunpack.c.h.b16 %v401
        %v1547 = vunpack.c.l.b16 %v402
        %v1548 = vunpack.c.h.b16 %v402
        %v1549 = vunpack.c.l.b16 %v403
        %v1550 = vunpack.c.h.b16 %v403
        %v1551 = vunpack.c.l.b16 %v404
        %v1552 = vunpack.c.h.b16 %v404
        %v1553 = vunpack.c.l.b16 %v405
        %v1554 = vunpack.c.h.b16 %v405
        %v1555 = vunpack.c.l.b16 %v406
        %v1556 = vunpack.c.h.b16 %v406
        %v1557 = vunpack.c.l.b16 %v407
        %v1558 = vunpack.c.h.b16 %v407
        %v1559 = vunpack.c.l.b16 %v408
        %v1560 = vunpack.c.h.b16 %v408
        %v1561 = vunpack.c.l.b16 %v409
        %v1562 = vunpack.c.h.b16 %v409
        %v1563 = vunpack.c.l.b16 %v410
        %v1564 = vunpack.c.h.b16 %v410
        %v1565 = vunpack.c.l.b16 %v411
        %v1566 = vunpack.c.h.b16 %v411
        %v1567 = vunpack.c.l.b16 %v412
        %v1568 = vunpack.c.h.b16 %v412
        %v1569 = vunpack.c.l.b16 %v413
        %v1570 = vunpack.c.h.b16 %v413
        %v1571 = vunpack.c.l.b16 %v414
        %v1572 = vunpack.c.h.b16 %v414
        %v1573 = vunpack.c.l.b16 %v415
        %v1574 = vunpack.c.h.b16 %v415
        %v1575 = vunpack.c.l.b16 %v416
        %v1576 = vunpack.c.h.b16 %v416
        %v1577 = vunpack.c.l.b16 %v417
        %v1578 = vunpack.c.h.b16 %v417
        %v1579 = vunpack.c.l.b16 %v418
        %v1580 = vunpack.c.h.b16 %v418
        %v1581 = vunpack.c.l.b16 %v419
        %v1582 = vunpack.c.h.b16 %v419
        %v1583 = vunpack.c.l.b16 %v420
        %v1584 = vunpack.c.h.b16 %v420
        %v1585 = vunpack.c.l.b16 %v421
        %v1586 = vunpack.c.h.b16 %v421
        %v1587 = vunpack.c.l.b16 %v422
        %v1588 = vunpack.c.h.b16 %v422
        %v1589 = vunpack.c.l.b16 %v423
        %v1590 = vunpack.c.h.b16 %v423
        %v1591 = vunpack.c.l.b16 %v424
        %v1592 = vunpack.c.h.b16 %v424
        %v1593 = vunpack.c.l.b16 %v425
        %v1594 = vunpack.c.h.b16 %v425
        %v1595 = vunpack.c.l.b16 %v426
        %v1596 = vunpack.c.h.b16 %v426
        %v1597 = vunpack.c.l.b16 %v427
        %v1598 = vunpack.c.h.b16 %v427
        %v1599 = vunpack.c.l.b16 %v428
        %v1600 = vunpack.c.h.b16 %v428
        %v1601 = vunpack.c.l.b16 %v429
        %v1602 = vunpack.c.h.b16 %v429
        %v1603 = vunpack.c.l.b16 %v430
        %v1604 = vunpack.c.h.b16 %v430
        %v1605 = vunpack.c.l.b16 %v431
        %v1606 = vunpack.c.h.b16 %v431
        %v1607 = vunpack.c.l.b16 %v432
        %v1608 = vunpack.c.h.b16 %v432
        %v1609 = vunpack.c.l.b16 %v433
        %v1610 = vunpack.c.h.b16 %v433
        %v1611 = vunpack.c.l.b16 %v434
        %v1612 = vunpack.c.h.b16 %v434
        %v1613 = vunpack.c.l.b16 %v435
        %v1614 = vunpack.c.h.b16 %v435
        %v1615 = vunpack.c.l.b16 %v436
        %v1616 = vunpack.c.h.b16 %v436
        %v1617 = vunpack.c.l.b16 %v437
        %v1618 = vunpack.c.h.b16 %v437
        %v1619 = vunpack.c.l.b16 %v438
        %v1620 = vunpack.c.h.b16 %v438
        %v1621 = vunpack.c.l.b16 %v439
        %v1622 = vunpack.c.h.b16 %v439
        %v1623 = vunpack.c.l.b16 %v440
        %v1624 = vunpack.c.h.b16 %v440
        %v1625 = vunpack.c.l.b16 %v441
        %v1626 = vunpack.c.h.b16 %v441
        %v1627 = vunpack.c.l.b16 %v442
        %v1628 = vunpack.c.h.b16 %v442
        %v1629 = vunpack.c.l.b16 %v443
        %v1630 = vunpack.c.h.b16 %v443
        %v1631 = vunpack.c.l.b16 %v444
        %v1632 = vunpack.c.h.b16 %v444
        %v1633 = vunpack.c.l.b16 %v445
        %v1634 = vunpack.c.h.b16 %v445
        %v1635 = vunpack.c.l.b16 %v446
        %v1636 = vunpack.c.h.b16 %v446
        %v1637 = vunpack.c.l.b16 %v447
        %v1638 = vunpack.c.h.b16 %v447
        %v1639 = vunpack.c.l.b16 %v448
        %v1640 = vunpack.c.h.b16 %v448
        %v1641 = vunpack.c.l.b16 %v449
        %v1642 = vunpack.c.h.b16 %v449
        %v1643 = vunpack.c.l.b16 %v450
        %v1644 = vunpack.c.h.b16 %v450
        %v1645 = vunpack.c.l.b16 %v451
        %v1646 = vunpack.c.h.b16 %v451
        %v1647 = vunpack.c.l.b16 %v452
        %v1648 = vunpack.c.h.b16 %v452
        %v1649 = vunpack.c.l.b16 %v453
        %v1650 = vunpack.c.h.b16 %v453
        %v1651 = vunpack.c.l.b16 %v454
        %v1652 = vunpack.c.h.b16 %v454
        %v1653 = vunpack.c.l.b16 %v455
        %v1654 = vunpack.c.h.b16 %v455
        %v1655 = vunpack.c.l.b16 %v456
        %v1656 = vunpack.c.h.b16 %v456
        %v1657 = vunpack.c.l.b16 %v457
        %v1658 = vunpack.c.h.b16 %v457
        %v1659 = vunpack.c.l.b16 %v458
        %v1660 = vunpack.c.h.b16 %v458
        %v1661 = vunpack.c.l.b16 %v459
        %v1662 = vunpack.c.h.b16 %v459
        %v1663 = vunpack.c.l.b16 %v460
        %v1664 = vunpack.c.h.b16 %v460
        %v1665 = vunpack.c.l.b16 %v461
        %v1666 = vunpack.c.h.b16 %v461
        %v1667 = vunpack.c.l.b16 %v462
        %v1668 = vunpack.c.h.b16 %v462
        %v1669 = vunpack.c.l.b16 %v463
        %v1670 = vunpack.c.h.b16 %v463
        %v1671 = vunpack.c.l.b16 %v464
        %v1672 = vunpack.c.h.b16 %v464
        %v1673 = vunpack.c.l.b16 %v465
        %v1674 = vunpack.c.h.b16 %v465
        %v1675 = vunpack.c.l.b16 %v466
        %v1676 = vunpack.c.h.b16 %v466
        %v1677 = vunpack.c.l.b16 %v467
        %v1678 = vunpack.c.h.b16 %v467
        %v1679 = vunpack.c.l.b16 %v468
        %v1680 = vunpack.c.h.b16 %v468
        %v1681 = vunpack.c.l.b16 %v469
        %v1682 = vunpack.c.h.b16 %v469
        %v1683 = vunpack.c.l.b16 %v470
        %v1684 = vunpack.c.h.b16 %v470
        %v1685 = vunpack.c.l.b16 %v471
        %v1686 = vunpack.c.h.b16 %v471
        %v1687 = vunpack.c.l.b16 %v472
        %v1688 = vunpack.c.h.b16 %v472
        %v1689 = vunpack.c.l.b16 %v473
        %v1690 = vunpack.c.h.b16 %v473
        %v1691 = vunpack.c.l.b16 %v474
        %v1692 = vunpack.c.h.b16 %v474
        %v1693 = vunpack.c.l.b16 %v475
        %v1694 = vunpack.c.h.b16 %v475
        %v1695 = vunpack.c.l.b16 %v476
        %v1696 = vunpack.c.h.b16 %v476
        %v1697 = vunpack.c.l.b16 %v477
        %v1698 = vunpack.c.h.b16 %v477
        %v1699 = vunpack.c.l.b16 %v478
        %v1700 = vunpack.c.h.b16 %v478
        %v1701 = vunpack.c.l.b16 %v479
        %v1702 = vunpack.c.h.b16 %v479
        %v1703 = vunpack.c.l.b16 %v480
        %v1704 = vunpack.c.h.b16 %v480
        %v1705 = vunpack.c.l.b16 %v481
        %v1706 = vunpack.c.h.b16 %v481
        %v1707 = vunpack.c.l.b16 %v482
        %v1708 = vunpack.c.h.b16 %v482
        %v1709 = vunpack.c.l.b16 %v483
        %v1710 = vunpack.c.h.b16 %v483
        %v1711 = vunpack.c.l.b16 %v484
        %v1712 = vunpack.c.h.b16 %v484
        %v1713 = vunpack.c.l.b16 %v485
        %v1714 = vunpack.c.h.b16 %v485
        %v1715 = vunpack.c.l.b16 %v486
        %v1716 = vunpack.c.h.b16 %v486
        %v1717 = vunpack.c.l.b16 %v487
        %v1718 = vunpack.c.h.b16 %v487
        %v1719 = vunpack.c.l.b16 %v488
        %v1720 = vunpack.c.h.b16 %v488
        %v1721 = vunpack.c.l.b16 %v489
        %v1722 = vunpack.c.h.b16 %v489
        %v1723 = vunpack.c.l.b16 %v490
        %v1724 = vunpack.c.h.b16 %v490
        %v1725 = vunpack.c.l.b16 %v491
        %v1726 = vunpack.c.h.b16 %v491
        %v1727 = vunpack.c.l.b16 %v492
        %v1728 = vunpack.c.h.b16 %v492
        %v1729 = vunpack.c.l.b16 %v493
        %v1730 = vunpack.c.h.b16 %v493
        %v1731 = vunpack.c.l.b16 %v494
        %v1732 = vunpack.c.h.b16 %v494
        %v1733 = vunpack.c.l.b16 %v495
        %v1734 = vunpack.c.h.b16 %v495
        %v1735 = vunpack.c.l.b16 %v496
        %v1736 = vunpack.c.h.b16 %v496
        %v1737 = vunpack.c.l.b16 %v497
        %v1738 = vunpack.c.h.b16 %v497
        %v1739 = vunpack.c.l.b16 %v498
        %v1740 = vunpack.c.h.b16 %v498
        %v1741 = vunpack.c.l.b16 %v499
        %v1742 = vunpack.c.h.b16 %v499
        %v1743 = vunpack.c.l.b16 %v500
        %v1744 = vunpack.c.h.b16 %v500
        %v1745 = vunpack.c.l.b16 %v501
        %v1746 = vunpack.c.h.b16 %v501
        %v1747 = vunpack.c.l.b16 %v502
        %v1748 = vunpack.c.h.b16 %v502
        %v1749 = vunpack.c.l.b16 %v503
        %v1750 = vunpack.c.h.b16 %v503
        %v1751 = vunpack.c.l.b16 %v504
        %v1752 = vunpack.c.h.b16 %v504
        %v1753 = vunpack.c.l.b16 %v505
        %v1754 = vunpack.c.h.b16 %v505
        %v1755 = vunpack.c.l.b16 %v506
        %v1756 = vunpack.c.h.b16 %v506
        %v1757 = vunpack.c.l.b16 %v507
        %v1758 = vunpack.c.h.b16 %v507
        %v1759 = vunpack.c.l.b16 %v508
        %v1760 = vunpack.c.h.b16 %v508
        %v1761 = vunpack.c.l.b16 %v509
        %v1762 = vunpack.c.h.b16 %v509
        %v1763 = vunpack.c.l.b16 %v510
        %v1764 = vunpack.c.h.b16 %v510
        %v1765 = vunpack.c.l.b16 %v511
        %v1766 = vunpack.c.h.b16 %v511
        %v1767 = vunpack.c.l.b16 %v512
        %v1768 = vunpack.c.h.b16 %v512
        %v1769 = vunpack.c.l.b16 %v513
        %v1770 = vunpack.c.h.b16 %v513
        %v1771 = vunpack.c.l.b16 %v514
        %v1772 = vunpack.c.h.b16 %v514
        %v1773 = vunpack.c.l.b16 %v515
        %v1774 = vunpack.c.h.b16 %v515
        %v1775 = vunpack.c.l.b16 %v516
        %v1776 = vunpack.c.h.b16 %v516
        %v1777 = vunpack.c.l.b16 %v517
        %v1778 = vunpack.c.h.b16 %v517
        %v1779 = vunpack.c.l.b16 %v518
        %v1780 = vunpack.c.h.b16 %v518
        %v1781 = vunpack.c.l.b16 %v519
        %v1782 = vunpack.c.h.b16 %v519
        %v1783 = vunpack.c.l.b16 %v520
        %v1784 = vunpack.c.h.b16 %v520
        %v1785 = vunpack.c.l.b16 %v521
        %v1786 = vunpack.c.h.b16 %v521
        %v1787 = vunpack.c.l.b16 %v522
        %v1788 = vunpack.c.h.b16 %v522
        %v1789 = vunpack.c.l.b16 %v523
        %v1790 = vunpack.c.h.b16 %v523
        %v1791 = vunpack.c.l.b16 %v524
        %v1792 = vunpack.c.h.b16 %v524
        %v1793 = vunpack.c.l.b16 %v525
        %v1794 = vunpack.c.h.b16 %v525
        %v1795 = vunpack.c.l.b16 %v526
        %v1796 = vunpack.c.h.b16 %v526
        %v1797 = vunpack.c.l.b16 %v527
        %v1798 = vunpack.c.h.b16 %v527
        %v1799 = vunpack.c.l.b16 %v528
        %v1800 = vunpack.c.h.b16 %v528
        %v1801 = vunpack.c.l.b16 %v529
        %v1802 = vunpack.c.h.b16 %v529
        %v1803 = vunpack.c.l.b16 %v530
        %v1804 = vunpack.c.h.b16 %v530
        %v1805 = vunpack.c.l.b16 %v531
        %v1806 = vunpack.c.h.b16 %v531
        %v1807 = vunpack.c.l.b16 %v532
        %v1808 = vunpack.c.h.b16 %v532
        %v1809 = vunpack.c.l.b16 %v533
        %v1810 = vunpack.c.h.b16 %v533
        %v1811 = vunpack.c.l.b16 %v534
        %v1812 = vunpack.c.h.b16 %v534
        %v1813 = vunpack.c.l.b16 %v535
        %v1814 = vunpack.c.h.b16 %v535
        %v1815 = vunpack.c.l.b16 %v536
        %v1816 = vunpack.c.h.b16 %v536
        %v1817 = vunpack.c.l.b16 %v537
        %v1818 = vunpack.c.h.b16 %v537
        %v1819 = vunpack.c.l.b16 %v538
        %v1820 = vunpack.c.h.b16 %v538
        %v1821 = vunpack.c.l.b16 %v539
        %v1822 = vunpack.c.h.b16 %v539
        %v1823 = vunpack.c.l.b16 %v540
        %v1824 = vunpack.c.h.b16 %v540
        %v1825 = vunpack.c.l.b16 %v541
        %v1826 = vunpack.c.h.b16 %v541
        %v1827 = vunpack.c.l.b16 %v542
        %v1828 = vunpack.c.h.b16 %v542
        %v1829 = vunpack.c.l.b16 %v543
        %v1830 = vunpack.c.h.b16 %v543
        %v1831 = vunpack.c.l.b16 %v544
        %v1832 = vunpack.c.h.b16 %v544
        %v1833 = vunpack.c.l.b16 %v545
        %v1834 = vunpack.c.h.b16 %v545
        %v1835 = vunpack.c.l.b16 %v546
        %v1836 = vunpack.c.h.b16 %v546
        %v1837 = vunpack.c.l.b16 %v547
        %v1838 = vunpack.c.h.b16 %v547
        %v1839 = vunpack.c.l.b16 %v548
        %v1840 = vunpack.c.h.b16 %v548
        %v1841 = vunpack.c.l.b16 %v549
        %v1842 = vunpack.c.h.b16 %v549
        %v1843 = vunpack.c.l.b16 %v550
        %v1844 = vunpack.c.h.b16 %v550
        %v1845 = vunpack.c.l.b16 %v551
        %v1846 = vunpack.c.h.b16 %v551
        %v1847 = vunpack.c.l.b16 %v552
        %v1848 = vunpack.c.h.b16 %v552
        %v1849 = vunpack.c.l.b16 %v553
        %v1850 = vunpack.c.h.b16 %v553
        %v1851 = vunpack.c.l.b16 %v554
        %v1852 = vunpack.c.h.b16 %v554
        %v1853 = vunpack.c.l.b16 %v555
        %v1854 = vunpack.c.h.b16 %v555
        %v1855 = vunpack.c.l.b16 %v556
        %v1856 = vunpack.c.h.b16 %v556
        %v1857 = vunpack.c.l.b16 %v557
        %v1858 = vunpack.c.h.b16 %v557
        %v1859 = vunpack.c.l.b16 %v558
        %v1860 = vunpack.c.h.b16 %v558
        %v1861 = vunpack.c.l.b16 %v559
        %v1862 = vunpack.c.h.b16 %v559
        %v1863 = vunpack.c.l.b16 %v560
        %v1864 = vunpack.c.h.b16 %v560
        %v1865 = vunpack.c.l.b16 %v561
        %v1866 = vunpack.c.h.b16 %v561
        %v1867 = vunpack.c.l.b16 %v562
        %v1868 = vunpack.c.h.b16 %v562
        %v1869 = vunpack.c.l.b16 %v563
        %v1870 = vunpack.c.h.b16 %v563
        %v1871 = vunpack.c.l.b16 %v564
        %v1872 = vunpack.c.h.b16 %v564
        %v1873 = vunpack.c.l.b16 %v565
        %v1874 = vunpack.c.h.b16 %v565
        %v1875 = vunpack.c.l.b16 %v566
        %v1876 = vunpack.c.h.b16 %v566
        %v1877 = vunpack.c.l.b16 %v567
        %v1878 = vunpack.c.h.b16 %v567
        %v1879 = vunpack.c.l.b16 %v568
        %v1880 = vunpack.c.h.b16 %v568
        %v1881 = vunpack.c.l.b16 %v569
        %v1882 = vunpack.c.h.b16 %v569
        %v1883 = vunpack.c.l.b16 %v570
        %v1884 = vunpack.c.h.b16 %v570
        %v1885 = vunpack.c.l.b16 %v571
        %v1886 = vunpack.c.h.b16 %v571
        %v1887 = vunpack.c.l.b16 %v572
        %v1888 = vunpack.c.h.b16 %v572
        %v1889 = vunpack.c.l.b16 %v573
        %v1890 = vunpack.c.h.b16 %v573
        %v1891 = vunpack.c.l.b16 %v574
        %v1892 = vunpack.c.h.b16 %v574
        %v1893 = vunpack.c.l.b16 %v575
        %v1894 = vunpack.c.h.b16 %v575
        %v1895 = vunpack.c.l.b16 %v576
        %v1896 = vunpack.c.h.b16 %v576
        %v1897 = vunpack.c.l.b16 %v577
        %v1898 = vunpack.c.h.b16 %v577
        %v1899 = vunpack.c.l.b16 %v578
        %v1900 = vunpack.c.h.b16 %v578
        %v1901 = vunpack.c.l.b16 %v579
        %v1902 = vunpack.c.h.b16 %v579
        %v1903 = vunpack.c.l.b16 %v580
        %v1904 = vunpack.c.h.b16 %v580
        %v1905 = vunpack.c.l.b16 %v581
        %v1906 = vunpack.c.h.b16 %v581
        %v1907 = vunpack.c.l.b16 %v582
        %v1908 = vunpack.c.h.b16 %v582
        %v1909 = vunpack.c.l.b16 %v583
        %v1910 = vunpack.c.h.b16 %v583
        %v1911 = vunpack.c.l.b16 %v584
        %v1912 = vunpack.c.h.b16 %v584
        %v1913 = vunpack.c.l.b16 %v585
        %v1914 = vunpack.c.h.b16 %v585
        %v1915 = vunpack.c.l.b16 %v586
        %v1916 = vunpack.c.h.b16 %v586
        %v1917 = vunpack.c.l.b16 %v587
        %v1918 = vunpack.c.h.b16 %v587
        %v1919 = vunpack.c.l.b16 %v588
        %v1920 = vunpack.c.h.b16 %v588
        %v1921 = vunpack.c.l.b16 %v589
        %v1922 = vunpack.c.h.b16 %v589
        %v1923 = vunpack.c.l.b16 %v590
        %v1924 = vunpack.c.h.b16 %v590
        %v1925 = vunpack.c.l.b16 %v591
        %v1926 = vunpack.c.h.b16 %v591
        %v1927 = vunpack.c.l.b16 %v592
        %v1928 = vunpack.c.h.b16 %v592
        %v1929 = vunpack.c.l.b16 %v593
        %v1930 = vunpack.c.h.b16 %v593
        %v1931 = vunpack.c.l.b16 %v594
        %v1932 = vunpack.c.h.b16 %v594
        %v1933 = vunpack.c.l.b16 %v595
        %v1934 = vunpack.c.h.b16 %v595
        %v1935 = vunpack.c.l.b16 %v596
        %v1936 = vunpack.c.h.b16 %v596
        %v1937 = vunpack.c.l.b16 %v597
        %v1938 = vunpack.c.h.b16 %v597
        %v1939 = vunpack.c.l.b16 %v598
        %v1940 = vunpack.c.h.b16 %v598
        %v1941 = vunpack.c.l.b16 %v599
        %v1942 = vunpack.c.h.b16 %v599
        %v1943 = vunpack.c.l.b16 %v600
        %v1944 = vunpack.c.h.b16 %v600
        %v1945 = vunpack.c.l.b16 %v601
        %v1946 = vunpack.c.h.b16 %v601
        %v1947 = vunpack.c.l.b16 %v602
        %v1948 = vunpack.c.h.b16 %v602
        %v1949 = vunpack.c.l.b16 %v603
        %v1950 = vunpack.c.h.b16 %v603
        %v1951 = vunpack.c.l.b16 %v604
        %v1952 = vunpack.c.h.b16 %v604
        %v1953 = vunpack.c.l.b16 %v605
        %v1954 = vunpack.c.h.b16 %v605
        %v1955 = vunpack.c.l.b16 %v606
        %v1956 = vunpack.c.h.b16 %v606
        %v1957 = vunpack.c.l.b16 %v607
        %v1958 = vunpack.c.h.b16 %v607
        %v1959 = vunpack.c.l.b16 %v608
        %v1960 = vunpack.c.h.b16 %v608
        %v1961 = vunpack.c.l.b16 %v609
        %v1962 = vunpack.c.h.b16 %v609
        %v1963 = vunpack.c.l.b16 %v610
        %v1964 = vunpack.c.h.b16 %v610
        %v1965 = vunpack.c.l.b16 %v611
        %v1966 = vunpack.c.h.b16 %v611
        %v1967 = vunpack.c.l.b16 %v612
        %v1968 = vunpack.c.h.b16 %v612
        %v1969 = vunpack.c.l.b16 %v613
        %v1970 = vunpack.c.h.b16 %v613
        %v1971 = vunpack.c.l.b16 %v614
        %v1972 = vunpack.c.h.b16 %v614
        %v1973 = vunpack.c.l.b16 %v615
        %v1974 = vunpack.c.h.b16 %v615
        %v1975 = vunpack.c.l.b16 %v616
        %v1976 = vunpack.c.h.b16 %v616
        %v1977 = vunpack.c.l.b16 %v617
        %v1978 = vunpack.c.h.b16 %v617
        %v1979 = vunpack.c.l.b16 %v618
        %v1980 = vunpack.c.h.b16 %v618
        %v1981 = vunpack.c.l.b16 %v619
        %v1982 = vunpack.c.h.b16 %v619
        %v1983 = vunpack.c.l.b16 %v620
        %v1984 = vunpack.c.h.b16 %v620
        %v1985 = vunpack.c.l.b16 %v621
        %v1986 = vunpack.c.h.b16 %v621
        %v1987 = vunpack.c.l.b16 %v622
        %v1988 = vunpack.c.h.b16 %v622
        %v1989 = vunpack.c.l.b16 %v623
        %v1990 = vunpack.c.h.b16 %v623
        %v1991 = vunpack.c.l.b16 %v624
        %v1992 = vunpack.c.h.b16 %v624
        %v1993 = vunpack.c.l.b16 %v625
        %v1994 = vunpack.c.h.b16 %v625
        %v1995 = vunpack.c.l.b16 %v626
        %v1996 = vunpack.c.h.b16 %v626
        %v1997 = vunpack.c.l.b16 %v627
        %v1998 = vunpack.c.h.b16 %v627
        %v1999 = vunpack.c.l.b16 %v628
        %v2000 = vunpack.c.h.b16 %v628
        %v2001 = vunpack.c.l.b16 %v629
        %v2002 = vunpack.c.h.b16 %v629
        %v2003 = vunpack.c.l.b16 %v630
        %v2004 = vunpack.c.h.b16 %v630
        %v2005 = vunpack.c.l.b16 %v631
        %v2006 = vunpack.c.h.b16 %v631
        %v2007 = vunpack.c.l.b16 %v632
        %v2008 = vunpack.c.h.b16 %v632
        %v2009 = vunpack.c.l.b16 %v633
        %v2010 = vunpack.c.h.b16 %v633
        %v2011 = vunpack.c.l.b16 %v634
        %v2012 = vunpack.c.h.b16 %v634
        %v2013 = vunpack.c.l.b16 %v635
        %v2014 = vunpack.c.h.b16 %v635
        %v2015 = vunpack.c.l.b16 %v636
        %v2016 = vunpack.c.h.b16 %v636
        %v2017 = vunpack.c.l.b16 %v637
        %v2018 = vunpack.c.h.b16 %v637
        %v2019 = vunpack.c.l.b16 %v638
        %v2020 = vunpack.c.h.b16 %v638
        %v2021 = vunpack.c.l.b16 %v639
        %v2022 = vunpack.c.h.b16 %v639
        %v2023 = vunpack.c.l.b16 %v640
        %v2024 = vunpack.c.h.b16 %v640
        %v2025 = vunpack.c.l.b16 %v641
        %v2026 = vunpack.c.h.b16 %v641
        %v2027 = vunpack.c.l.b16 %v642
        %v2028 = vunpack.c.h.b16 %v642
        %v2029 = vunpack.c.l.b16 %v643
        %v2030 = vunpack.c.h.b16 %v643
        %v2031 = vunpack.c.l.b16 %v644
        %v2032 = vunpack.c.h.b16 %v644
        %v2033 = vunpack.c.l.b16 %v645
        %v2034 = vunpack.c.h.b16 %v645
        %v2035 = vunpack.c.l.b16 %v646
        %v2036 = vunpack.c.h.b16 %v646
        %v2037 = vunpack.c.l.b16 %v647
        %v2038 = vunpack.c.h.b16 %v647
        %v2039 = vunpack.c.l.b16 %v648
        %v2040 = vunpack.c.h.b16 %v648
        %v2041 = vunpack.c.l.b16 %v649
        %v2042 = vunpack.c.h.b16 %v649
        %v2043 = vunpack.c.l.b16 %v650
        %v2044 = vunpack.c.h.b16 %v650
        %v2045 = vunpack.c.l.b16 %v651
        %v2046 = vunpack.c.h.b16 %v651
        %v2047 = vunpack.c.l.b16 %v652
        %v2048 = vunpack.c.h.b16 %v652
        %v2049 = vunpack.c.l.b16 %v653
        %v2050 = vunpack.c.h.b16 %v653
        %v2051 = vunpack.c.l.b16 %v654
        %v2052 = vunpack.c.h.b16 %v654
        %v2053 = vunpack.c.l.b16 %v655
        %v2054 = vunpack.c.h.b16 %v655
        %v2055 = vunpack.c.l.b16 %v656
        %v2056 = vunpack.c.h.b16 %v656
        %v2057 = vunpack.c.l.b16 %v657
        %v2058 = vunpack.c.h.b16 %v657
        %v2059 = vunpack.c.l.b16 %v658
        %v2060 = vunpack.c.h.b16 %v658
        %v2061 = vunpack.c.l.b16 %v659
        %v2062 = vunpack.c.h.b16 %v659
        %v2063 = vunpack.c.l.b16 %v660
        %v2064 = vunpack.c.h.b16 %v660
        %v2065 = vunpack.c.l.b16 %v661
        %v2066 = vunpack.c.h.b16 %v661
        %v2067 = vunpack.c.l.b16 %v662
        %v2068 = vunpack.c.h.b16 %v662
        %v2069 = vunpack.c.l.b16 %v663
        %v2070 = vunpack.c.h.b16 %v663
        %v2071 = vunpack.c.l.b16 %v664
        %v2072 = vunpack.c.h.b16 %v664
        %v2073 = vunpack.c.l.b16 %v665
        %v2074 = vunpack.c.h.b16 %v665
        %v2075 = vunpack.c.l.b16 %v666
        %v2076 = vunpack.c.h.b16 %v666
        %v2077 = vunpack.c.l.b16 %v667
        %v2078 = vunpack.c.h.b16 %v667
        %v2079 = vunpack.c.l.b16 %v668
        %v2080 = vunpack.c.h.b16 %v668
        %v2081 = vunpack.c.l.b16 %v669
        %v2082 = vunpack.c.h.b16 %v669
        %v2083 = vunpack.c.l.b16 %v670
        %v2084 = vunpack.c.h.b16 %v670
        %v2085 = vunpack.c.l.b16 %v671
        %v2086 = vunpack.c.h.b16 %v671
        %v2087 = vunpack.c.l.b16 %v672
        %v2088 = vunpack.c.h.b16 %v672
        %v2089 = vunpack.c.l.b16 %v673
        %v2090 = vunpack.c.h.b16 %v673
        %v2091 = vunpack.c.l.b16 %v674
        %v2092 = vunpack.c.h.b16 %v674
        %v2093 = vunpack.c.l.b16 %v675
        %v2094 = vunpack.c.h.b16 %v675
        %v2095 = vunpack.c.l.b16 %v676
        %v2096 = vunpack.c.h.b16 %v676
        %v2097 = vunpack.c.l.b16 %v677
        %v2098 = vunpack.c.h.b16 %v677
        %v2099 = vunpack.c.l.b16 %v678
        %v2100 = vunpack.c.h.b16 %v678
        %v2101 = vunpack.c.l.b16 %v679
        %v2102 = vunpack.c.h.b16 %v679
        %v2103 = vunpack.c.l.b16 %v680
        %v2104 = vunpack.c.h.b16 %v680
        %v2105 = vunpack.c.l.b16 %v681
        %v2106 = vunpack.c.h.b16 %v681
        %v2107 = vunpack.c.l.b16 %v682
        %v2108 = vunpack.c.h.b16 %v682
        %v2109 = vunpack.c.l.b16 %v683
        %v2110 = vunpack.c.h.b16 %v683
        %v2111 = vunpack.c.l.b16 %v684
        %v2112 = vunpack.c.h.b16 %v684
        %v2113 = vunpack.c.l.b16 %v685
        %v2114 = vunpack.c.h.b16 %v685
        %v2115 = vunpack.c.l.b16 %v686
        %v2116 = vunpack.c.h.b16 %v686
        %v2117 = vunpack.c.l.b16 %v687
        %v2118 = vunpack.c.h.b16 %v687
        %v2119 = vunpack.c.l.b16 %v688
        %v2120 = vunpack.c.h.b16 %v688
        %v2121 = vunpack.c.l.b16 %v689
        %v2122 = vunpack.c.h.b16 %v689
        %v2123 = vunpack.c.l.b16 %v690
        %v2124 = vunpack.c.h.b16 %v690
        %v2125 = vunpack.c.l.b16 %v691
        %v2126 = vunpack.c.h.b16 %v691
        %v2127 = vunpack.c.l.b16 %v692
        %v2128 = vunpack.c.h.b16 %v692
        %v2129 = vunpack.c.l.b16 %v693
        %v2130 = vunpack.c.h.b16 %v693
        %v2131 = vunpack.c.l.b16 %v694
        %v2132 = vunpack.c.h.b16 %v694
        %v2133 = vunpack.c.l.b16 %v695
        %v2134 = vunpack.c.h.b16 %v695
        %v2135 = vunpack.c.l.b16 %v696
        %v2136 = vunpack.c.h.b16 %v696
        %v2137 = vunpack.c.l.b16 %v697
        %v2138 = vunpack.c.h.b16 %v697
        %v2139 = vunpack.c.l.b16 %v698
        %v2140 = vunpack.c.h.b16 %v698
        %v2141 = vunpack.c.l.b16 %v699
        %v2142 = vunpack.c.h.b16 %v699
        %v2143 = vunpack.c.l.b16 %v700
        %v2144 = vunpack.c.h.b16 %v700
        %v2145 = vunpack.c.l.b16 %v701
        %v2146 = vunpack.c.h.b16 %v701
        %v2147 = vunpack.c.l.b16 %v702
        %v2148 = vunpack.c.h.b16 %v702
        %v2149 = vunpack.c.l.b16 %v703
        %v2150 = vunpack.c.h.b16 %v703
        %v2151 = vunpack.c.l.b16 %v704
        %v2152 = vunpack.c.h.b16 %v704
        %v2153 = vunpack.c.l.b16 %v705
        %v2154 = vunpack.c.h.b16 %v705
        %v2155 = vunpack.c.l.b16 %v706
        %v2156 = vunpack.c.h.b16 %v706
        %v2157 = vunpack.c.l.b16 %v707
        %v2158 = vunpack.c.h.b16 %v707
        %v2159 = vunpack.c.l.b16 %v708
        %v2160 = vunpack.c.h.b16 %v708
        %v2161 = vunpack.c.l.b16 %v709
        %v2162 = vunpack.c.h.b16 %v709
        %v2163 = vunpack.c.l.b16 %v710
        %v2164 = vunpack.c.h.b16 %v710
        %v2165 = vunpack.c.l.b16 %v711
        %v2166 = vunpack.c.h.b16 %v711
        %v2167 = vunpack.c.l.b16 %v712
        %v2168 = vunpack.c.h.b16 %v712
        %v2169 = vunpack.c.l.b16 %v713
        %v2170 = vunpack.c.h.b16 %v713
        %v2171 = vunpack.c.l.b16 %v714
        %v2172 = vunpack.c.h.b16 %v714
        %v2173 = vunpack.c.l.b16 %v715
        %v2174 = vunpack.c.h.b16 %v715
        %v2175 = vunpack.c.l.b16 %v716
        %v2176 = vunpack.c.h.b16 %v716
        %v2177 = vunpack.c.l.b16 %v717
        %v2178 = vunpack.c.h.b16 %v717
        %v2179 = vunpack.c.l.b16 %v718
        %v2180 = vunpack.c.h.b16 %v718
        %v2181 = vunpack.c.l.b16 %v719
        %v2182 = vunpack.c.h.b16 %v719
        %v2183 = vunpack.c.l.b16 %v720
        %v2184 = vunpack.c.h.b16 %v720
        %v2185 = vunpack.c.l.b16 %v721
        %v2186 = vunpack.c.h.b16 %v721
        %v2187 = vunpack.c.l.b16 %v722
        %v2188 = vunpack.c.h.b16 %v722
        %v2189 = vunpack.c.l.b16 %v723
        %v2190 = vunpack.c.h.b16 %v723
        %v2191 = vunpack.c.l.b16 %v724
        %v2192 = vunpack.c.h.b16 %v724
        %v2193 = vunpack.c.l.b16 %v725
        %v2194 = vunpack.c.h.b16 %v725
        %v2195 = vunpack.c.l.b16 %v726
        %v2196 = vunpack.c.h.b16 %v726
        %v2197 = vunpack.c.l.b16 %v727
        %v2198 = vunpack.c.h.b16 %v727
        %v2199 = vunpack.c.l.b16 %v728
        %v2200 = vunpack.c.h.b16 %v728
        %v2201 = vunpack.c.l.b16 %v729
        %v2202 = vunpack.c.h.b16 %v729
        %v2203 = vunpack.c.l.b16 %v730
        %v2204 = vunpack.c.h.b16 %v730
        %v2205 = vunpack.c.l.b16 %v731
        %v2206 = vunpack.c.h.b16 %v731
        %v2207 = vunpack.c.l.b16 %v732
        %v2208 = vunpack.c.h.b16 %v732
        %v2209 = vunpack.c.l.b16 %v733
        %v2210 = vunpack.c.h.b16 %v733
        %v2211 = vunpack.c.l.b16 %v734
        %v2212 = vunpack.c.h.b16 %v734
        %v2213 = vunpack.c.l.b16 %v735
        %v2214 = vunpack.c.h.b16 %v735
        %v2215 = vunpack.c.l.b16 %v736
        %v2216 = vunpack.c.h.b16 %v736
        %v2217 = vunpack.c.l.b16 %v737
        %v2218 = vunpack.c.h.b16 %v737
        %v2219 = vunpack.c.l.b16 %v738
        %v2220 = vunpack.c.h.b16 %v738
        %v2221 = vunpack.c.l.b16 %v739
        %v2222 = vunpack.c.h.b16 %v739
        %v2223 = vunpack.c.l.b16 %v740
        %v2224 = vunpack.c.h.b16 %v740
        %v2225 = vunpack.c.l.b16 %v741
        %v2226 = vunpack.c.h.b16 %v741
        %v2227 = vunpack.c.l.b16 %v742
        %v2228 = vunpack.c.h.b16 %v742
        %v2229 = vunpack.c.l.b16 %v743
        %v2230 = vunpack.c.h.b16 %v743
        %v2231 = vunpack.c.l.b16 %v744
        %v2232 = vunpack.c.h.b16 %v744
        %v2233 = vunpack.c.l.b16 %v745
        %v2234 = vunpack.c.h.b16 %v745
        %v2235 = vunpack.c.l.b16 %v746
        %v2236 = vunpack.c.h.b16 %v746
        %v2237 = vunpack.c.l.b16 %v747
        %v2238 = vunpack.c.h.b16 %v747
        %v2239 = vunpack.c.l.b16 %v748
        %v2240 = vunpack.c.h.b16 %v748
        %v2241 = vunpack.c.l.b16 %v749
        %v2242 = vunpack.c.h.b16 %v749
        %v2243 = vunpack.c.l.b16 %v750
        %v2244 = vunpack.c.h.b16 %v750
        %v2245 = vunpack.c.l.b16 %v751
        %v2246 = vunpack.c.h.b16 %v751
        %v2247 = vunpack.c.l.b16 %v752
        %v2248 = vunpack.c.h.b16 %v752
        %v2249 = vunpack.c.l.b16 %v753
        %v2250 = vunpack.c.h.b16 %v753
        %v2251 = vunpack.c.l.b16 %v754
        %v2252 = vunpack.c.h.b16 %v754
        %v2253 = vunpack.c.l.b16 %v755
        %v2254 = vunpack.c.h.b16 %v755
        %v2255 = vunpack.c.l.b16 %v756
        %v2256 = vunpack.c.h.b16 %v756
        %v2257 = vunpack.c.l.b16 %v757
        %v2258 = vunpack.c.h.b16 %v757
        %v2259 = vunpack.c.l.b16 %v758
        %v2260 = vunpack.c.h.b16 %v758
        %v2261 = vunpack.c.l.b16 %v759
        %v2262 = vunpack.c.h.b16 %v759
        %v2263 = vunpack.c.l.b16 %v760
        %v2264 = vunpack.c.h.b16 %v760
        %v2265 = vunpack.c.l.b16 %v761
        %v2266 = vunpack.c.h.b16 %v761
        %v2267 = vunpack.c.l.b16 %v762
        %v2268 = vunpack.c.h.b16 %v762
        %v2269 = vunpack.c.l.b16 %v763
        %v2270 = vunpack.c.h.b16 %v763
        %v2271 = vunpack.c.l.b16 %v764
        %v2272 = vunpack.c.h.b16 %v764
        %v2273 = vunpack.c.l.b16 %v765
        %v2274 = vunpack.c.h.b16 %v765
        %v2275 = vunpack.c.l.b16 %v766
        %v2276 = vunpack.c.h.b16 %v766
        %v2277 = vunpack.c.l.b16 %v767
        %v2278 = vunpack.c.h.b16 %v767
        %v2279 = vunpack.c.l.b16 %v768
        %v2280 = vunpack.c.h.b16 %v768
        %v2281 = vunpack.c.l.b16 %v769
        %v2282 = vunpack.c.h.b16 %v769
        %v2283 = vunpack.c.l.b16 %v770
        %v2284 = vunpack.c.h.b16 %v770
        %v2285 = vunpack.c.l.b16 %v771
        %v2286 = vunpack.c.h.b16 %v771
        %v2287 = vunpack.c.l.b16 %v772
        %v2288 = vunpack.c.h.b16 %v772
        %v2289 = vunpack.c.l.b16 %v773
        %v2290 = vunpack.c.h.b16 %v773
        %v2291 = vunpack.c.l.b16 %v774
        %v2292 = vunpack.c.h.b16 %v774
        %v2293 = vunpack.c.l.b16 %v775
        %v2294 = vunpack.c.h.b16 %v775
        %v2295 = vunpack.c.l.b16 %v776
        %v2296 = vunpack.c.h.b16 %v776
        %v2297 = vunpack.c.l.b16 %v777
        %v2298 = vunpack.c.h.b16 %v777
        %v2299 = vunpack.c.l.b16 %v778
        %v2300 = vunpack.c.h.b16 %v778
        %v2301 = vunpack.c.l.b16 %v779
        %v2302 = vunpack.c.h.b16 %v779
        %v2303 = vunpack.c.l.b16 %v780
        %v2304 = vunpack.c.h.b16 %v780
        %v2305 = vunpack.c.l.b16 %v781
        %v2306 = vunpack.c.h.b16 %v781
        %v2307 = vunpack.c.l.b16 %v782
        %v2308 = vunpack.c.h.b16 %v782
        %v2309 = vunpack.c.l.b16 %v783
        %v2310 = vunpack.c.h.b16 %v783
        %v2311 = vunpack.c.l.b16 %v784
        %v2312 = vunpack.c.h.b16 %v784
        %v2313 = vunpack.c.l.b16 %v785
        %v2314 = vunpack.c.h.b16 %v785
        %v2315 = vunpack.c.l.b16 %v786
        %v2316 = vunpack.c.h.b16 %v786
        %v2317 = vunpack.c.l.b16 %v787
        %v2318 = vunpack.c.h.b16 %v787
        %v2319 = vunpack.c.l.b16 %v788
        %v2320 = vunpack.c.h.b16 %v788
        %v2321 = vunpack.c.l.b16 %v789
        %v2322 = vunpack.c.h.b16 %v789
        %v2323 = vunpack.c.l.b16 %v790
        %v2324 = vunpack.c.h.b16 %v790
        %v2325 = vunpack.c.l.b16 %v791
        %v2326 = vunpack.c.h.b16 %v791
        %v2327 = vunpack.c.l.b16 %v792
        %v2328 = vunpack.c.h.b16 %v792
        %v2329 = vpack.c.b16 %v1313, %v1305
        %v2330 = vpack.c.b16 %v1314, %v1306
        %v2331 = vpack.c.b16 %v1315, %v1307
        %v2332 = vpack.c.b16 %v1316, %v1308
        %v2333 = vpack.c.b16 %v1317, %v1309
        %v2334 = vpack.c.b16 %v1318, %v1310
        %v2335 = vpack.c.b16 %v1319, %v1311
        %v2336 = vpack.c.b16 %v1320, %v1312
        %v2337 = vpack.c.b16 %v1329, %v1321
        %v2338 = vpack.c.b16 %v1330, %v1322
        %v2339 = vpack.c.b16 %v1331, %v1323
        %v2340 = vpack.c.b16 %v1332, %v1324
        %v2341 = vpack.c.b16 %v1333, %v1325
        %v2342 = vpack.c.b16 %v1334, %v1326
        %v2343 = vpack.c.b16 %v1335, %v1327
        %v2344 = vpack.c.b16 %v1336, %v1328
        %v2345 = vpack.c.b16 %v1345, %v1337
        %v2346 = vpack.c.b16 %v1346, %v1338
        %v2347 = vpack.c.b16 %v1347, %v1339
        %v2348 = vpack.c.b16 %v1348, %v1340
        %v2349 = vpack.c.b16 %v1349, %v1341
        %v2350 = vpack.c.b16 %v1350, %v1342
        %v2351 = vpack.c.b16 %v1351, %v1343
        %v2352 = vpack.c.b16 %v1352, %v1344
        %v2353 = vpack.c.b16 %v1361, %v1353
        %v2354 = vpack.c.b16 %v1362, %v1354
        %v2355 = vpack.c.b16 %v1363, %v1355
        %v2356 = vpack.c.b16 %v1364, %v1356
        %v2357 = vpack.c.b16 %v1365, %v1357
        %v2358 = vpack.c.b16 %v1366, %v1358
        %v2359 = vpack.c.b16 %v1367, %v1359
        %v2360 = vpack.c.b16 %v1368, %v1360
        %v2361 = vpack.c.b16 %v1377, %v1369
        %v2362 = vpack.c.b16 %v1378, %v1370
        %v2363 = vpack.c.b16 %v1379, %v1371
        %v2364 = vpack.c.b16 %v1380, %v1372
        %v2365 = vpack.c.b16 %v1381, %v1373
        %v2366 = vpack.c.b16 %v1382, %v1374
        %v2367 = vpack.c.b16 %v1383, %v1375
        %v2368 = vpack.c.b16 %v1384, %v1376
        %v2369 = vpack.c.b16 %v1393, %v1385
        %v2370 = vpack.c.b16 %v1394, %v1386
        %v2371 = vpack.c.b16 %v1395, %v1387
        %v2372 = vpack.c.b16 %v1396, %v1388
        %v2373 = vpack.c.b16 %v1397, %v1389
        %v2374 = vpack.c.b16 %v1398, %v1390
        %v2375 = vpack.c.b16 %v1399, %v1391
        %v2376 = vpack.c.b16 %v1400, %v1392
        %v2377 = vpack.c.b16 %v1409, %v1401
        %v2378 = vpack.c.b16 %v1410, %v1402
        %v2379 = vpack.c.b16 %v1411, %v1403
        %v2380 = vpack.c.b16 %v1412, %v1404
        %v2381 = vpack.c.b16 %v1413, %v1405
        %v2382 = vpack.c.b16 %v1414, %v1406
        %v2383 = vpack.c.b16 %v1415, %v1407
        %v2384 = vpack.c.b16 %v1416, %v1408
        %v2385 = vpack.c.b16 %v1425, %v1417
        %v2386 = vpack.c.b16 %v1426, %v1418
        %v2387 = vpack.c.b16 %v1427, %v1419
        %v2388 = vpack.c.b16 %v1428, %v1420
        %v2389 = vpack.c.b16 %v1429, %v1421
        %v2390 = vpack.c.b16 %v1430, %v1422
        %v2391 = vpack.c.b16 %v1431, %v1423
        %v2392 = vpack.c.b16 %v1432, %v1424
        %v2393 = vpack.c.b16 %v1441, %v1433
        %v2394 = vpack.c.b16 %v1442, %v1434
        %v2395 = vpack.c.b16 %v1443, %v1435
        %v2396 = vpack.c.b16 %v1444, %v1436
        %v2397 = vpack.c.b16 %v1445, %v1437
        %v2398 = vpack.c.b16 %v1446, %v1438
        %v2399 = vpack.c.b16 %v1447, %v1439
        %v2400 = vpack.c.b16 %v1448, %v1440
        %v2401 = vpack.c.b16 %v1457, %v1449
        %v2402 = vpack.c.b16 %v1458, %v1450
        %v2403 = vpack.c.b16 %v1459, %v1451
        %v2404 = vpack.c.b16 %v1460, %v1452
        %v2405 = vpack.c.b16 %v1461, %v1453
        %v2406 = vpack.c.b16 %v1462, %v1454
        %v2407 = vpack.c.b16 %v1463, %v1455
        %v2408 = vpack.c.b16 %v1464, %v1456
        %v2409 = vpack.c.b16 %v1473, %v1465
        %v2410 = vpack.c.b16 %v1474, %v1466
        %v2411 = vpack.c.b16 %v1475, %v1467
        %v2412 = vpack.c.b16 %v1476, %v1468
        %v2413 = vpack.c.b16 %v1477, %v1469
        %v2414 = vpack.c.b16 %v1478, %v1470
        %v2415 = vpack.c.b16 %v1479, %v1471
        %v2416 = vpack.c.b16 %v1480, %v1472
        %v2417 = vpack.c.b16 %v1489, %v1481
        %v2418 = vpack.c.b16 %v1490, %v1482
        %v2419 = vpack.c.b16 %v1491, %v1483
        %v2420 = vpack.c.b16 %v1492, %v1484
        %v2421 = vpack.c.b16 %v1493, %v1485
        %v2422 = vpack.c.b16 %v1494, %v1486
        %v2423 = vpack.c.b16 %v1495, %v1487
        %v2424 = vpack.c.b16 %v1496, %v1488
        %v2425 = vpack.c.b16 %v1505, %v1497
        %v2426 = vpack.c.b16 %v1506, %v1498
        %v2427 = vpack.c.b16 %v1507, %v1499
        %v2428 = vpack.c.b16 %v1508, %v1500
        %v2429 = vpack.c.b16 %v1509, %v1501
        %v2430 = vpack.c.b16 %v1510, %v1502
        %v2431 = vpack.c.b16 %v1511, %v1503
        %v2432 = vpack.c.b16 %v1512, %v1504
        %v2433 = vpack.c.b16 %v1521, %v1513
        %v2434 = vpack.c.b16 %v1522, %v1514
        %v2435 = vpack.c.b16 %v1523, %v1515
        %v2436 = vpack.c.b16 %v1524, %v1516
        %v2437 = vpack.c.b16 %v1525, %v1517
        %v2438 = vpack.c.b16 %v1526, %v1518
        %v2439 = vpack.c.b16 %v1527, %v1519
        %v2440 = vpack.c.b16 %v1528, %v1520
        %v2441 = vpack.c.b16 %v1537, %v1529
        %v2442 = vpack.c.b16 %v1538, %v1530
        %v2443 = vpack.c.b16 %v1539, %v1531
        %v2444 = vpack.c.b16 %v1540, %v1532
        %v2445 = vpack.c.b16 %v1541, %v1533
        %v2446 = vpack.c.b16 %v1542, %v1534
        %v2447 = vpack.c.b16 %v1543, %v1535
        %v2448 = vpack.c.b16 %v1544, %v1536
        %v2449 = vpack.c.b16 %v1553, %v1545
        %v2450 = vpack.c.b16 %v1554, %v1546
        %v2451 = vpack.c.b16 %v1555, %v1547
        %v2452 = vpack.c.b16 %v1556, %v1548
        %v2453 = vpack.c.b16 %v1557, %v1549
        %v2454 = vpack.c.b16 %v1558, %v1550
        %v2455 = vpack.c.b16 %v1559, %v1551
        %v2456 = vpack.c.b16 %v1560, %v1552
        %v2457 = vpack.c.b16 %v1569, %v1561
        %v2458 = vpack.c.b16 %v1570, %v1562
        %v2459 = vpack.c.b16 %v1571, %v1563
        %v2460 = vpack.c.b16 %v1572, %v1564
        %v2461 = vpack.c.b16 %v1573, %v1565
        %v2462 = vpack.c.b16 %v1574, %v1566
        %v2463 = vpack.c.b16 %v1575, %v1567
        %v2464 = vpack.c.b16 %v1576, %v1568
        %v2465 = vpack.c.b16 %v1585, %v1577
        %v2466 = vpack.c.b16 %v1586, %v1578
        %v2467 = vpack.c.b16 %v1587, %v1579
        %v2468 = vpack.c.b16 %v1588, %v1580
        %v2469 = vpack.c.b16 %v1589, %v1581
        %v2470 = vpack.c.b16 %v1590, %v1582
        %v2471 = vpack.c.b16 %v1591, %v1583
        %v2472 = vpack.c.b16 %v1592, %v1584
        %v2473 = vpack.c.b16 %v1601, %v1593
        %v2474 = vpack.c.b16 %v1602, %v1594
        %v2475 = vpack.c.b16 %v1603, %v1595
        %v2476 = vpack.c.b16 %v1604, %v1596
        %v2477 = vpack.c.b16 %v1605, %v1597
        %v2478 = vpack.c.b16 %v1606, %v1598
        %v2479 = vpack.c.b16 %v1607, %v1599
        %v2480 = vpack.c.b16 %v1608, %v1600
        %v2481 = vpack.c.b16 %v1617, %v1609
        %v2482 = vpack.c.b16 %v1618, %v1610
        %v2483 = vpack.c.b16 %v1619, %v1611
        %v2484 = vpack.c.b16 %v1620, %v1612
        %v2485 = vpack.c.b16 %v1621, %v1613
        %v2486 = vpack.c.b16 %v1622, %v1614
        %v2487 = vpack.c.b16 %v1623, %v1615
        %v2488 = vpack.c.b16 %v1624, %v1616
        %v2489 = vpack.c.b16 %v1633, %v1625
        %v2490 = vpack.c.b16 %v1634, %v1626
        %v2491 = vpack.c.b16 %v1635, %v1627
        %v2492 = vpack.c.b16 %v1636, %v1628
        %v2493 = vpack.c.b16 %v1637, %v1629
        %v2494 = vpack.c.b16 %v1638, %v1630
        %v2495 = vpack.c.b16 %v1639, %v1631
        %v2496 = vpack.c.b16 %v1640, %v1632
        %v2497 = vpack.c.b16 %v1649, %v1641
        %v2498 = vpack.c.b16 %v1650, %v1642
        %v2499 = vpack.c.b16 %v1651, %v1643
        %v2500 = vpack.c.b16 %v1652, %v1644
        %v2501 = vpack.c.b16 %v1653, %v1645
        %v2502 = vpack.c.b16 %v1654, %v1646
        %v2503 = vpack.c.b16 %v1655, %v1647
        %v2504 = vpack.c.b16 %v1656, %v1648
        %v2505 = vpack.c.b16 %v1665, %v1657
        %v2506 = vpack.c.b16 %v1666, %v1658
        %v2507 = vpack.c.b16 %v1667, %v1659
        %v2508 = vpack.c.b16 %v1668, %v1660
        %v2509 = vpack.c.b16 %v1669, %v1661
        %v2510 = vpack.c.b16 %v1670, %v1662
        %v2511 = vpack.c.b16 %v1671, %v1663
        %v2512 = vpack.c.b16 %v1672, %v1664
        %v2513 = vpack.c.b16 %v1681, %v1673
        %v2514 = vpack.c.b16 %v1682, %v1674
        %v2515 = vpack.c.b16 %v1683, %v1675
        %v2516 = vpack.c.b16 %v1684, %v1676
        %v2517 = vpack.c.b16 %v1685, %v1677
        %v2518 = vpack.c.b16 %v1686, %v1678
        %v2519 = vpack.c.b16 %v1687, %v1679
        %v2520 = vpack.c.b16 %v1688, %v1680
        %v2521 = vpack.c.b16 %v1697, %v1689
        %v2522 = vpack.c.b16 %v1698, %v1690
        %v2523 = vpack.c.b16 %v1699, %v1691
        %v2524 = vpack.c.b16 %v1700, %v1692
        %v2525 = vpack.c.b16 %v1701, %v1693
        %v2526 = vpack.c.b16 %v1702, %v1694
        %v2527 = vpack.c.b16 %v1703, %v1695
        %v2528 = vpack.c.b16 %v1704, %v1696
        %v2529 = vpack.c.b16 %v1713, %v1705
        %v2530 = vpack.c.b16 %v1714, %v1706
        %v2531 = vpack.c.b16 %v1715, %v1707
        %v2532 = vpack.c.b16 %v1716, %v1708
        %v2533 = vpack.c.b16 %v1717, %v1709
        %v2534 = vpack.c.b16 %v1718, %v1710
        %v2535 = vpack.c.b16 %v1719, %v1711
        %v2536 = vpack.c.b16 %v1720, %v1712
        %v2537 = vpack.c.b16 %v1729, %v1721
        %v2538 = vpack.c.b16 %v1730, %v1722
        %v2539 = vpack.c.b16 %v1731, %v1723
        %v2540 = vpack.c.b16 %v1732, %v1724
        %v2541 = vpack.c.b16 %v1733, %v1725
        %v2542 = vpack.c.b16 %v1734, %v1726
        %v2543 = vpack.c.b16 %v1735, %v1727
        %v2544 = vpack.c.b16 %v1736, %v1728
        %v2545 = vpack.c.b16 %v1745, %v1737
        %v2546 = vpack.c.b16 %v1746, %v1738
        %v2547 = vpack.c.b16 %v1747, %v1739
        %v2548 = vpack.c.b16 %v1748, %v1740
        %v2549 = vpack.c.b16 %v1749, %v1741
        %v2550 = vpack.c.b16 %v1750, %v1742
        %v2551 = vpack.c.b16 %v1751, %v1743
        %v2552 = vpack.c.b16 %v1752, %v1744
        %v2553 = vpack.c.b16 %v1761, %v1753
        %v2554 = vpack.c.b16 %v1762, %v1754
        %v2555 = vpack.c.b16 %v1763, %v1755
        %v2556 = vpack.c.b16 %v1764, %v1756
        %v2557 = vpack.c.b16 %v1765, %v1757
        %v2558 = vpack.c.b16 %v1766, %v1758
        %v2559 = vpack.c.b16 %v1767, %v1759
        %v2560 = vpack.c.b16 %v1768, %v1760
        %v2561 = vpack.c.b16 %v1777, %v1769
        %v2562 = vpack.c.b16 %v1778, %v1770
        %v2563 = vpack.c.b16 %v1779, %v1771
        %v2564 = vpack.c.b16 %v1780, %v1772
        %v2565 = vpack.c.b16 %v1781, %v1773
        %v2566 = vpack.c.b16 %v1782, %v1774
        %v2567 = vpack.c.b16 %v1783, %v1775
        %v2568 = vpack.c.b16 %v1784, %v1776
        %v2569 = vpack.c.b16 %v1793, %v1785
        %v2570 = vpack.c.b16 %v1794, %v1786
        %v2571 = vpack.c.b16 %v1795, %v1787
        %v2572 = vpack.c.b16 %v1796, %v1788
        %v2573 = vpack.c.b16 %v1797, %v1789
        %v2574 = vpack.c.b16 %v1798, %v1790
        %v2575 = vpack.c.b16 %v1799, %v1791
        %v2576 = vpack.c.b16 %v1800, %v1792
        %v2577 = vpack.c.b16 %v1809, %v1801
        %v2578 = vpack.c.b16 %v1810, %v1802
        %v2579 = vpack.c.b16 %v1811, %v1803
        %v2580 = vpack.c.b16 %v1812, %v1804
        %v2581 = vpack.c.b16 %v1813, %v1805
        %v2582 = vpack.c.b16 %v1814, %v1806
        %v2583 = vpack.c.b16 %v1815, %v1807
        %v2584 = vpack.c.b16 %v1816, %v1808
        %v2585 = vpack.c.b16 %v1825, %v1817
        %v2586 = vpack.c.b16 %v1826, %v1818
        %v2587 = vpack.c.b16 %v1827, %v1819
        %v2588 = vpack.c.b16 %v1828, %v1820
        %v2589 = vpack.c.b16 %v1829, %v1821
        %v2590 = vpack.c.b16 %v1830, %v1822
        %v2591 = vpack.c.b16 %v1831, %v1823
        %v2592 = vpack.c.b16 %v1832, %v1824
        %v2593 = vpack.c.b16 %v1841, %v1833
        %v2594 = vpack.c.b16 %v1842, %v1834
        %v2595 = vpack.c.b16 %v1843, %v1835
        %v2596 = vpack.c.b16 %v1844, %v1836
        %v2597 = vpack.c.b16 %v1845, %v1837
        %v2598 = vpack.c.b16 %v1846, %v1838
        %v2599 = vpack.c.b16 %v1847, %v1839
        %v2600 = vpack.c.b16 %v1848, %v1840
        %v2601 = vpack.c.b16 %v1857, %v1849
        %v2602 = vpack.c.b16 %v1858, %v1850
        %v2603 = vpack.c.b16 %v1859, %v1851
        %v2604 = vpack.c.b16 %v1860, %v1852
        %v2605 = vpack.c.b16 %v1861, %v1853
        %v2606 = vpack.c.b16 %v1862, %v1854
        %v2607 = vpack.c.b16 %v1863, %v1855
        %v2608 = vpack.c.b16 %v1864, %v1856
        %v2609 = vpack.c.b16 %v1873, %v1865
        %v2610 = vpack.c.b16 %v1874, %v1866
        %v2611 = vpack.c.b16 %v1875, %v1867
        %v2612 = vpack.c.b16 %v1876, %v1868
        %v2613 = vpack.c.b16 %v1877, %v1869
        %v2614 = vpack.c.b16 %v1878, %v1870
        %v2615 = vpack.c.b16 %v1879, %v1871
        %v2616 = vpack.c.b16 %v1880, %v1872
        %v2617 = vpack.c.b16 %v1889, %v1881
        %v2618 = vpack.c.b16 %v1890, %v1882
        %v2619 = vpack.c.b16 %v1891, %v1883
        %v2620 = vpack.c.b16 %v1892, %v1884
        %v2621 = vpack.c.b16 %v1893, %v1885
        %v2622 = vpack.c.b16 %v1894, %v1886
        %v2623 = vpack.c.b16 %v1895, %v1887
        %v2624 = vpack.c.b16 %v1896, %v1888
        %v2625 = vpack.c.b16 %v1905, %v1897
        %v2626 = vpack.c.b16 %v1906, %v1898
        %v2627 = vpack.c.b16 %v1907, %v1899
        %v2628 = vpack.c.b16 %v1908, %v1900
        %v2629 = vpack.c.b16 %v1909, %v1901
        %v2630 = vpack.c.b16 %v1910, %v1902
        %v2631 = vpack.c.b16 %v1911, %v1903
        %v2632 = vpack.c.b16 %v1912, %v1904
        %v2633 = vpack.c.b16 %v1921, %v1913
        %v2634 = vpack.c.b16 %v1922, %v1914
        %v2635 = vpack.c.b16 %v1923, %v1915
        %v2636 = vpack.c.b16 %v1924, %v1916
        %v2637 = vpack.c.b16 %v1925, %v1917
        %v2638 = vpack.c.b16 %v1926, %v1918
        %v2639 = vpack.c.b16 %v1927, %v1919
        %v2640 = vpack.c.b16 %v1928, %v1920
        %v2641 = vpack.c.b16 %v1937, %v1929
        %v2642 = vpack.c.b16 %v1938, %v1930
        %v2643 = vpack.c.b16 %v1939, %v1931
        %v2644 = vpack.c.b16 %v1940, %v1932
        %v2645 = vpack.c.b16 %v1941, %v1933
        %v2646 = vpack.c.b16 %v1942, %v1934
        %v2647 = vpack.c.b16 %v1943, %v1935
        %v2648 = vpack.c.b16 %v1944, %v1936
        %v2649 = vpack.c.b16 %v1953, %v1945
        %v2650 = vpack.c.b16 %v1954, %v1946
        %v2651 = vpack.c.b16 %v1955, %v1947
        %v2652 = vpack.c.b16 %v1956, %v1948
        %v2653 = vpack.c.b16 %v1957, %v1949
        %v2654 = vpack.c.b16 %v1958, %v1950
        %v2655 = vpack.c.b16 %v1959, %v1951
        %v2656 = vpack.c.b16 %v1960, %v1952
        %v2657 = vpack.c.b16 %v1969, %v1961
        %v2658 = vpack.c.b16 %v1970, %v1962
        %v2659 = vpack.c.b16 %v1971, %v1963
        %v2660 = vpack.c.b16 %v1972, %v1964
        %v2661 = vpack.c.b16 %v1973, %v1965
        %v2662 = vpack.c.b16 %v1974, %v1966
        %v2663 = vpack.c.b16 %v1975, %v1967
        %v2664 = vpack.c.b16 %v1976, %v1968
        %v2665 = vpack.c.b16 %v1985, %v1977
        %v2666 = vpack.c.b16 %v1986, %v1978
        %v2667 = vpack.c.b16 %v1987, %v1979
        %v2668 = vpack.c.b16 %v1988, %v1980
        %v2669 = vpack.c.b16 %v1989, %v1981
        %v2670 = vpack.c.b16 %v1990, %v1982
        %v2671 = vpack.c.b16 %v1991, %v1983
        %v2672 = vpack.c.b16 %v1992, %v1984
        %v2673 = vpack.c.b16 %v2001, %v1993
        %v2674 = vpack.c.b16 %v2002, %v1994
        %v2675 = vpack.c.b16 %v2003, %v1995
        %v2676 = vpack.c.b16 %v2004, %v1996
        %v2677 = vpack.c.b16 %v2005, %v1997
        %v2678 = vpack.c.b16 %v2006, %v1998
        %v2679 = vpack.c.b16 %v2007, %v1999
        %v2680 = vpack.c.b16 %v2008, %v2000
        %v2681 = vpack.c.b16 %v2017, %v2009
        %v2682 = vpack.c.b16 %v2018, %v2010
        %v2683 = vpack.c.b16 %v2019, %v2011
        %v2684 = vpack.c.b16 %v2020, %v2012
        %v2685 = vpack.c.b16 %v2021, %v2013
        %v2686 = vpack.c.b16 %v2022, %v2014
        %v2687 = vpack.c.b16 %v2023, %v2015
        %v2688 = vpack.c.b16 %v2024, %v2016
        %v2689 = vpack.c.b16 %v2033, %v2025
        %v2690 = vpack.c.b16 %v2034, %v2026
        %v2691 = vpack.c.b16 %v2035, %v2027
        %v2692 = vpack.c.b16 %v2036, %v2028
        %v2693 = vpack.c.b16 %v2037, %v2029
        %v2694 = vpack.c.b16 %v2038, %v2030
        %v2695 = vpack.c.b16 %v2039, %v2031
        %v2696 = vpack.c.b16 %v2040, %v2032
        %v2697 = vpack.c.b16 %v2049, %v2041
        %v2698 = vpack.c.b16 %v2050, %v2042
        %v2699 = vpack.c.b16 %v2051, %v2043
        %v2700 = vpack.c.b16 %v2052, %v2044
        %v2701 = vpack.c.b16 %v2053, %v2045
        %v2702 = vpack.c.b16 %v2054, %v2046
        %v2703 = vpack.c.b16 %v2055, %v2047
        %v2704 = vpack.c.b16 %v2056, %v2048
        %v2705 = vpack.c.b16 %v2065, %v2057
        %v2706 = vpack.c.b16 %v2066, %v2058
        %v2707 = vpack.c.b16 %v2067, %v2059
        %v2708 = vpack.c.b16 %v2068, %v2060
        %v2709 = vpack.c.b16 %v2069, %v2061
        %v2710 = vpack.c.b16 %v2070, %v2062
        %v2711 = vpack.c.b16 %v2071, %v2063
        %v2712 = vpack.c.b16 %v2072, %v2064
        %v2713 = vpack.c.b16 %v2081, %v2073
        %v2714 = vpack.c.b16 %v2082, %v2074
        %v2715 = vpack.c.b16 %v2083, %v2075
        %v2716 = vpack.c.b16 %v2084, %v2076
        %v2717 = vpack.c.b16 %v2085, %v2077
        %v2718 = vpack.c.b16 %v2086, %v2078
        %v2719 = vpack.c.b16 %v2087, %v2079
        %v2720 = vpack.c.b16 %v2088, %v2080
        %v2721 = vpack.c.b16 %v2097, %v2089
        %v2722 = vpack.c.b16 %v2098, %v2090
        %v2723 = vpack.c.b16 %v2099, %v2091
        %v2724 = vpack.c.b16 %v2100, %v2092
        %v2725 = vpack.c.b16 %v2101, %v2093
        %v2726 = vpack.c.b16 %v2102, %v2094
        %v2727 = vpack.c.b16 %v2103, %v2095
        %v2728 = vpack.c.b16 %v2104, %v2096
        %v2729 = vpack.c.b16 %v2113, %v2105
        %v2730 = vpack.c.b16 %v2114, %v2106
        %v2731 = vpack.c.b16 %v2115, %v2107
        %v2732 = vpack.c.b16 %v2116, %v2108
        %v2733 = vpack.c.b16 %v2117, %v2109
        %v2734 = vpack.c.b16 %v2118, %v2110
        %v2735 = vpack.c.b16 %v2119, %v2111
        %v2736 = vpack.c.b16 %v2120, %v2112
        %v2737 = vpack.c.b16 %v2129, %v2121
        %v2738 = vpack.c.b16 %v2130, %v2122
        %v2739 = vpack.c.b16 %v2131, %v2123
        %v2740 = vpack.c.b16 %v2132, %v2124
        %v2741 = vpack.c.b16 %v2133, %v2125
        %v2742 = vpack.c.b16 %v2134, %v2126
        %v2743 = vpack.c.b16 %v2135, %v2127
        %v2744 = vpack.c.b16 %v2136, %v2128
        %v2745 = vpack.c.b16 %v2145, %v2137
        %v2746 = vpack.c.b16 %v2146, %v2138
        %v2747 = vpack.c.b16 %v2147, %v2139
        %v2748 = vpack.c.b16 %v2148, %v2140
        %v2749 = vpack.c.b16 %v2149, %v2141
        %v2750 = vpack.c.b16 %v2150, %v2142
        %v2751 = vpack.c.b16 %v2151, %v2143
        %v2752 = vpack.c.b16 %v2152, %v2144
        %v2753 = vpack.c.b16 %v2161, %v2153
        %v2754 = vpack.c.b16 %v2162, %v2154
        %v2755 = vpack.c.b16 %v2163, %v2155
        %v2756 = vpack.c.b16 %v2164, %v2156
        %v2757 = vpack.c.b16 %v2165, %v2157
        %v2758 = vpack.c.b16 %v2166, %v2158
        %v2759 = vpack.c.b16 %v2167, %v2159
        %v2760 = vpack.c.b16 %v2168, %v2160
        %v2761 = vpack.c.b16 %v2177, %v2169
        %v2762 = vpack.c.b16 %v2178, %v2170
        %v2763 = vpack.c.b16 %v2179, %v2171
        %v2764 = vpack.c.b16 %v2180, %v2172
        %v2765 = vpack.c.b16 %v2181, %v2173
        %v2766 = vpack.c.b16 %v2182, %v2174
        %v2767 = vpack.c.b16 %v2183, %v2175
        %v2768 = vpack.c.b16 %v2184, %v2176
        %v2769 = vpack.c.b16 %v2193, %v2185
        %v2770 = vpack.c.b16 %v2194, %v2186
        %v2771 = vpack.c.b16 %v2195, %v2187
        %v2772 = vpack.c.b16 %v2196, %v2188
        %v2773 = vpack.c.b16 %v2197, %v2189
        %v2774 = vpack.c.b16 %v2198, %v2190
        %v2775 = vpack.c.b16 %v2199, %v2191
        %v2776 = vpack.c.b16 %v2200, %v2192
        %v2777 = vpack.c.b16 %v2209, %v2201
        %v2778 = vpack.c.b16 %v2210, %v2202
        %v2779 = vpack.c.b16 %v2211, %v2203
        %v2780 = vpack.c.b16 %v2212, %v2204
        %v2781 = vpack.c.b16 %v2213, %v2205
        %v2782 = vpack.c.b16 %v2214, %v2206
        %v2783 = vpack.c.b16 %v2215, %v2207
        %v2784 = vpack.c.b16 %v2216, %v2208
        %v2785 = vpack.c.b16 %v2225, %v2217
        %v2786 = vpack.c.b16 %v2226, %v2218
        %v2787 = vpack.c.b16 %v2227, %v2219
        %v2788 = vpack.c.b16 %v2228, %v2220
        %v2789 = vpack.c.b16 %v2229, %v2221
        %v2790 = vpack.c.b16 %v2230, %v2222
        %v2791 = vpack.c.b16 %v2231, %v2223
        %v2792 = vpack.c.b16 %v2232, %v2224
        %v2793 = vpack.c.b16 %v2241, %v2233
        %v2794 = vpack.c.b16 %v2242, %v2234
        %v2795 = vpack.c.b16 %v2243, %v2235
        %v2796 = vpack.c.b16 %v2244, %v2236
        %v2797 = vpack.c.b16 %v2245, %v2237
        %v2798 = vpack.c.b16 %v2246, %v2238
        %v2799 = vpack.c.b16 %v2247, %v2239
        %v2800 = vpack.c.b16 %v2248, %v2240
        %v2801 = vpack.c.b16 %v2257, %v2249
        %v2802 = vpack.c.b16 %v2258, %v2250
        %v2803 = vpack.c.b16 %v2259, %v2251
        %v2804 = vpack.c.b16 %v2260, %v2252
        %v2805 = vpack.c.b16 %v2261, %v2253
        %v2806 = vpack.c.b16 %v2262, %v2254
        %v2807 = vpack.c.b16 %v2263, %v2255
        %v2808 = vpack.c.b16 %v2264, %v2256
        %v2809 = vpack.c.b16 %v2273, %v2265
        %v2810 = vpack.c.b16 %v2274, %v2266
        %v2811 = vpack.c.b16 %v2275, %v2267
        %v2812 = vpack.c.b16 %v2276, %v2268
        %v2813 = vpack.c.b16 %v2277, %v2269
        %v2814 = vpack.c.b16 %v2278, %v2270
        %v2815 = vpack.c.b16 %v2279, %v2271
        %v2816 = vpack.c.b16 %v2280, %v2272
        %v2817 = vpack.c.b16 %v2289, %v2281
        %v2818 = vpack.c.b16 %v2290, %v2282
        %v2819 = vpack.c.b16 %v2291, %v2283
        %v2820 = vpack.c.b16 %v2292, %v2284
        %v2821 = vpack.c.b16 %v2293, %v2285
        %v2822 = vpack.c.b16 %v2294, %v2286
        %v2823 = vpack.c.b16 %v2295, %v2287
        %v2824 = vpack.c.b16 %v2296, %v2288
        %v2825 = vpack.c.b16 %v2305, %v2297
        %v2826 = vpack.c.b16 %v2306, %v2298
        %v2827 = vpack.c.b16 %v2307, %v2299
        %v2828 = vpack.c.b16 %v2308, %v2300
        %v2829 = vpack.c.b16 %v2309, %v2301
        %v2830 = vpack.c.b16 %v2310, %v2302
        %v2831 = vpack.c.b16 %v2311, %v2303
        %v2832 = vpack.c.b16 %v2312, %v2304
        %v2833 = vpack.c.b16 %v2321, %v2313
        %v2834 = vpack.c.b16 %v2322, %v2314
        %v2835 = vpack.c.b16 %v2323, %v2315
        %v2836 = vpack.c.b16 %v2324, %v2316
        %v2837 = vpack.c.b16 %v2325, %v2317
        %v2838 = vpack.c.b16 %v2326, %v2318
        %v2839 = vpack.c.b16 %v2327, %v2319
        %v2840 = vpack.c.b16 %v2328, %v2320
        %3353 = vmatprep.subr.bf16.mxu0 %v2386
        %3354 = vmatpush1.bf16.msra.mxu0 %v2385
        %3355 = vmatprep.subr.bf16.mxu0 %v2378
        %3356 = vmatpush1.bf16.msra.mxu0 %v2377
        %3357 = vmatprep.subr.bf16.mxu0 %v2370
        %3358 = vmatpush1.bf16.msra.mxu0 %v2369
        %3359 = vmatprep.subr.bf16.mxu0 %v2362
        %3360 = vmatpush1.bf16.msra.mxu0 %v2361
        %3361 = vmatprep.subr.bf16.mxu0 %v2354
        %3362 = vmatpush1.bf16.msra.mxu0 %v2353
        %3363 = vmatprep.subr.bf16.mxu0 %v2346
        %3364 = vmatpush1.bf16.msra.mxu0 %v2345
        %3365 = vmatprep.subr.bf16.mxu0 %v2338
        %3366 = vmatpush1.bf16.msra.mxu0 %v2337
        %3367 = vmatprep.subr.bf16.mxu0 %v2330
        %3368 = vmatpush1.bf16.msra.mxu0 %v2329
        %3369 = vmatprep.subr.bf16.mxu0 %v2450
        %3370 = vmatpush2.bf16.msra.mxu0 %v2449
        %3371 = vmatprep.subr.bf16.mxu0 %v2442
        %3372 = vmatpush2.bf16.msra.mxu0 %v2441
        %3373 = vmatprep.subr.bf16.mxu0 %v2434
        %3374 = vmatpush2.bf16.msra.mxu0 %v2433
        %3375 = vmatprep.subr.bf16.mxu0 %v2426
        %3376 = vmatpush2.bf16.msra.mxu0 %v2425
        %3377 = vmatprep.subr.bf16.mxu0 %v2418
        %3378 = vmatpush2.bf16.msra.mxu0 %v2417
        %3379 = vmatprep.subr.bf16.mxu0 %v2410
        %3380 = vmatpush2.bf16.msra.mxu0 %v2409
        %3381 = vmatprep.subr.bf16.mxu0 %v2402
        %3382 = vmatpush2.bf16.msra.mxu0 %v2401
        %3383 = vmatprep.subr.bf16.mxu0 %v2394
        %3384 = vmatpush2.bf16.msra.mxu0 %v2393
        %3385 = vmatprep.mubr.bf16.mxu0 %v274
        %3386 = vmatmul.mubr.bf16.gmra.mxu0 %v273
        %v3387 = vpop.f32.mrf.mxu0
        %v3388 = vadd.f32 0.0, %v3387
        %v3389 = vpop.f32.mrf.mxu0
        %v3390 = vadd.f32 0.0, %v3389
        %v3391 = vpop.f32.mrf.mxu0
        %v3392 = vpop.f32.mrf.mxu0
        %3393 = vdwg.mxu0
        %3394 = vmatprep.subr.bf16.mxu0 %v2514
        %3395 = vmatpush1.bf16.msra.mxu0 %v2513
        %3396 = vmatprep.subr.bf16.mxu0 %v2506
        %3397 = vmatpush1.bf16.msra.mxu0 %v2505
        %3398 = vmatprep.subr.bf16.mxu0 %v2498
        %3399 = vmatpush1.bf16.msra.mxu0 %v2497
        %3400 = vmatprep.subr.bf16.mxu0 %v2490
        %3401 = vmatpush1.bf16.msra.mxu0 %v2489
        %3402 = vmatprep.subr.bf16.mxu0 %v2482
        %3403 = vmatpush1.bf16.msra.mxu0 %v2481
        %3404 = vmatprep.subr.bf16.mxu0 %v2474
        %3405 = vmatpush1.bf16.msra.mxu0 %v2473
        %3406 = vmatprep.subr.bf16.mxu0 %v2466
        %3407 = vmatpush1.bf16.msra.mxu0 %v2465
        %3408 = vmatprep.subr.bf16.mxu0 %v2458
        %3409 = vmatpush1.bf16.msra.mxu0 %v2457
        %3410 = vmatprep.subr.bf16.mxu0 %v2578
        %3411 = vmatpush2.bf16.msra.mxu0 %v2577
        %3412 = vmatprep.subr.bf16.mxu0 %v2570
        %3413 = vmatpush2.bf16.msra.mxu0 %v2569
        %3414 = vmatprep.subr.bf16.mxu0 %v2562
        %3415 = vmatpush2.bf16.msra.mxu0 %v2561
        %3416 = vmatprep.subr.bf16.mxu0 %v2554
        %3417 = vmatpush2.bf16.msra.mxu0 %v2553
        %3418 = vmatprep.subr.bf16.mxu0 %v2546
        %3419 = vmatpush2.bf16.msra.mxu0 %v2545
        %3420 = vmatprep.subr.bf16.mxu0 %v2538
        %3421 = vmatpush2.bf16.msra.mxu0 %v2537
        %3422 = vmatprep.subr.bf16.mxu0 %v2530
        %3423 = vmatpush2.bf16.msra.mxu0 %v2529
        %3424 = vmatprep.subr.bf16.mxu0 %v2522
        %3425 = vmatpush2.bf16.msra.mxu0 %v2521
        %3426 = vmatprep.mubr.bf16.mxu0 %v276
        %3427 = vmatmul.mubr.bf16.gmra.mxu0 %v275
        %v3428 = vpop.f32.mrf.mxu0
        %v3429 = vadd.f32 %v3388, %v3428
        %v3430 = vpop.f32.mrf.mxu0
        %v3431 = vadd.f32 %v3390, %v3430
        %v3432 = vpop.f32.mrf.mxu0
        %v3433 = vpop.f32.mrf.mxu0
        %3434 = vdwg.mxu0
        %3435 = vmatprep.subr.bf16.mxu0 %v2642
        %3436 = vmatpush1.bf16.msra.mxu0 %v2641
        %3437 = vmatprep.subr.bf16.mxu0 %v2634
        %3438 = vmatpush1.bf16.msra.mxu0 %v2633
        %3439 = vmatprep.subr.bf16.mxu0 %v2626
        %3440 = vmatpush1.bf16.msra.mxu0 %v2625
        %3441 = vmatprep.subr.bf16.mxu0 %v2618
        %3442 = vmatpush1.bf16.msra.mxu0 %v2617
        %3443 = vmatprep.subr.bf16.mxu0 %v2610
        %3444 = vmatpush1.bf16.msra.mxu0 %v2609
        %3445 = vmatprep.subr.bf16.mxu0 %v2602
        %3446 = vmatpush1.bf16.msra.mxu0 %v2601
        %3447 = vmatprep.subr.bf16.mxu0 %v2594
        %3448 = vmatpush1.bf16.msra.mxu0 %v2593
        %3449 = vmatprep.subr.bf16.mxu0 %v2586
        %3450 = vmatpush1.bf16.msra.mxu0 %v2585
        %3451 = vmatprep.subr.bf16.mxu0 %v2706
        %3452 = vmatpush2.bf16.msra.mxu0 %v2705
        %3453 = vmatprep.subr.bf16.mxu0 %v2698
        %3454 = vmatpush2.bf16.msra.mxu0 %v2697
        %3455 = vmatprep.subr.bf16.mxu0 %v2690
        %3456 = vmatpush2.bf16.msra.mxu0 %v2689
        %3457 = vmatprep.subr.bf16.mxu0 %v2682
        %3458 = vmatpush2.bf16.msra.mxu0 %v2681
        %3459 = vmatprep.subr.bf16.mxu0 %v2674
        %3460 = vmatpush2.bf16.msra.mxu0 %v2673
        %3461 = vmatprep.subr.bf16.mxu0 %v2666
        %3462 = vmatpush2.bf16.msra.mxu0 %v2665
        %3463 = vmatprep.subr.bf16.mxu0 %v2658
        %3464 = vmatpush2.bf16.msra.mxu0 %v2657
        %3465 = vmatprep.subr.bf16.mxu0 %v2650
        %3466 = vmatpush2.bf16.msra.mxu0 %v2649
        %3467 = vmatprep.mubr.bf16.mxu0 %v278
        %3468 = vmatmul.mubr.bf16.gmra.mxu0 %v277
        %v3469 = vpop.f32.mrf.mxu0
        %v3470 = vadd.f32 %v3429, %v3469
        %v3471 = vpop.f32.mrf.mxu0
        %v3472 = vadd.f32 %v3431, %v3471
        %v3473 = vpop.f32.mrf.mxu0
        %v3474 = vpop.f32.mrf.mxu0
        %3475 = vdwg.mxu0
        %3476 = vmatprep.subr.bf16.mxu0 %v2770
        %3477 = vmatpush1.bf16.msra.mxu0 %v2769
        %3478 = vmatprep.subr.bf16.mxu0 %v2762
        %3479 = vmatpush1.bf16.msra.mxu0 %v2761
        %3480 = vmatprep.subr.bf16.mxu0 %v2754
        %3481 = vmatpush1.bf16.msra.mxu0 %v2753
        %3482 = vmatprep.subr.bf16.mxu0 %v2746
        %3483 = vmatpush1.bf16.msra.mxu0 %v2745
        %3484 = vmatprep.subr.bf16.mxu0 %v2738
        %3485 = vmatpush1.bf16.msra.mxu0 %v2737
        %3486 = vmatprep.subr.bf16.mxu0 %v2730
        %3487 = vmatpush1.bf16.msra.mxu0 %v2729
        %3488 = vmatprep.subr.bf16.mxu0 %v2722
        %3489 = vmatpush1.bf16.msra.mxu0 %v2721
        %3490 = vmatprep.subr.bf16.mxu0 %v2714
        %3491 = vmatpush1.bf16.msra.mxu0 %v2713
        %3492 = vmatprep.subr.bf16.mxu0 %v2834
        %3493 = vmatpush2.bf16.msra.mxu0 %v2833
        %3494 = vmatprep.subr.bf16.mxu0 %v2826
        %3495 = vmatpush2.bf16.msra.mxu0 %v2825
        %3496 = vmatprep.subr.bf16.mxu0 %v2818
        %3497 = vmatpush2.bf16.msra.mxu0 %v2817
        %3498 = vmatprep.subr.bf16.mxu0 %v2810
        %3499 = vmatpush2.bf16.msra.mxu0 %v2809
        %3500 = vmatprep.subr.bf16.mxu0 %v2802
        %3501 = vmatpush2.bf16.msra.mxu0 %v2801
        %3502 = vmatprep.subr.bf16.mxu0 %v2794
        %3503 = vmatpush2.bf16.msra.mxu0 %v2793
        %3504 = vmatprep.subr.bf16.mxu0 %v2786
        %3505 = vmatpush2.bf16.msra.mxu0 %v2785
        %3506 = vmatprep.subr.bf16.mxu0 %v2778
        %3507 = vmatpush2.bf16.msra.mxu0 %v2777
        %3508 = vmatprep.mubr.bf16.mxu0 %v280
        %3509 = vmatmul.mubr.bf16.gmra.mxu0 %v279
        %v3510 = vpop.f32.mrf.mxu0
        %v3511 = vadd.f32 %v3470, %v3510
        %v3512 = vpop.f32.mrf.mxu0
        %v3513 = vadd.f32 %v3472, %v3512
        %v3514 = vpop.f32.mrf.mxu0
        %v3515 = vpop.f32.mrf.mxu0
        %3516 = vdwg.mxu0
        %3517 = vmatprep.subr.bf16.mxu0 %v2388
        %3518 = vmatpush1.bf16.msra.mxu0 %v2387
        %3519 = vmatprep.subr.bf16.mxu0 %v2380
        %3520 = vmatpush1.bf16.msra.mxu0 %v2379
        %3521 = vmatprep.subr.bf16.mxu0 %v2372
        %3522 = vmatpush1.bf16.msra.mxu0 %v2371
        %3523 = vmatprep.subr.bf16.mxu0 %v2364
        %3524 = vmatpush1.bf16.msra.mxu0 %v2363
        %3525 = vmatprep.subr.bf16.mxu0 %v2356
        %3526 = vmatpush1.bf16.msra.mxu0 %v2355
        %3527 = vmatprep.subr.bf16.mxu0 %v2348
        %3528 = vmatpush1.bf16.msra.mxu0 %v2347
        %3529 = vmatprep.subr.bf16.mxu0 %v2340
        %3530 = vmatpush1.bf16.msra.mxu0 %v2339
        %3531 = vmatprep.subr.bf16.mxu0 %v2332
        %3532 = vmatpush1.bf16.msra.mxu0 %v2331
        %3533 = vmatprep.subr.bf16.mxu0 %v2452
        %3534 = vmatpush2.bf16.msra.mxu0 %v2451
        %3535 = vmatprep.subr.bf16.mxu0 %v2444
        %3536 = vmatpush2.bf16.msra.mxu0 %v2443
        %3537 = vmatprep.subr.bf16.mxu0 %v2436
        %3538 = vmatpush2.bf16.msra.mxu0 %v2435
        %3539 = vmatprep.subr.bf16.mxu0 %v2428
        %3540 = vmatpush2.bf16.msra.mxu0 %v2427
        %3541 = vmatprep.subr.bf16.mxu0 %v2420
        %3542 = vmatpush2.bf16.msra.mxu0 %v2419
        %3543 = vmatprep.subr.bf16.mxu0 %v2412
        %3544 = vmatpush2.bf16.msra.mxu0 %v2411
        %3545 = vmatprep.subr.bf16.mxu0 %v2404
        %3546 = vmatpush2.bf16.msra.mxu0 %v2403
        %3547 = vmatprep.subr.bf16.mxu0 %v2396
        %3548 = vmatpush2.bf16.msra.mxu0 %v2395
        %3549 = vmatprep.mubr.bf16.mxu0 %v274
        %3550 = vmatmul.mubr.bf16.gmra.mxu0 %v273
        %v3551 = vpop.f32.mrf.mxu0
        %v3552 = vadd.f32 0.0, %v3551
        %v3553 = vpop.f32.mrf.mxu0
        %v3554 = vadd.f32 0.0, %v3553
        %v3555 = vpop.f32.mrf.mxu0
        %v3556 = vpop.f32.mrf.mxu0
        %3557 = vdwg.mxu0
        %3558 = vmatprep.subr.bf16.mxu0 %v2516
        %3559 = vmatpush1.bf16.msra.mxu0 %v2515
        %3560 = vmatprep.subr.bf16.mxu0 %v2508
        %3561 = vmatpush1.bf16.msra.mxu0 %v2507
        %3562 = vmatprep.subr.bf16.mxu0 %v2500
        %3563 = vmatpush1.bf16.msra.mxu0 %v2499
        %3564 = vmatprep.subr.bf16.mxu0 %v2492
        %3565 = vmatpush1.bf16.msra.mxu0 %v2491
        %3566 = vmatprep.subr.bf16.mxu0 %v2484
        %3567 = vmatpush1.bf16.msra.mxu0 %v2483
        %3568 = vmatprep.subr.bf16.mxu0 %v2476
        %3569 = vmatpush1.bf16.msra.mxu0 %v2475
        %3570 = vmatprep.subr.bf16.mxu0 %v2468
        %3571 = vmatpush1.bf16.msra.mxu0 %v2467
        %3572 = vmatprep.subr.bf16.mxu0 %v2460
        %3573 = vmatpush1.bf16.msra.mxu0 %v2459
        %3574 = vmatprep.subr.bf16.mxu0 %v2580
        %3575 = vmatpush2.bf16.msra.mxu0 %v2579
        %3576 = vmatprep.subr.bf16.mxu0 %v2572
        %3577 = vmatpush2.bf16.msra.mxu0 %v2571
        %3578 = vmatprep.subr.bf16.mxu0 %v2564
        %3579 = vmatpush2.bf16.msra.mxu0 %v2563
        %3580 = vmatprep.subr.bf16.mxu0 %v2556
        %3581 = vmatpush2.bf16.msra.mxu0 %v2555
        %3582 = vmatprep.subr.bf16.mxu0 %v2548
        %3583 = vmatpush2.bf16.msra.mxu0 %v2547
        %3584 = vmatprep.subr.bf16.mxu0 %v2540
        %3585 = vmatpush2.bf16.msra.mxu0 %v2539
        %3586 = vmatprep.subr.bf16.mxu0 %v2532
        %3587 = vmatpush2.bf16.msra.mxu0 %v2531
        %3588 = vmatprep.subr.bf16.mxu0 %v2524
        %3589 = vmatpush2.bf16.msra.mxu0 %v2523
        %3590 = vmatprep.mubr.bf16.mxu0 %v276
        %3591 = vmatmul.mubr.bf16.gmra.mxu0 %v275
        %v3592 = vpop.f32.mrf.mxu0
        %v3593 = vadd.f32 %v3552, %v3592
        %v3594 = vpop.f32.mrf.mxu0
        %v3595 = vadd.f32 %v3554, %v3594
        %v3596 = vpop.f32.mrf.mxu0
        %v3597 = vpop.f32.mrf.mxu0
        %3598 = vdwg.mxu0
        %3599 = vmatprep.subr.bf16.mxu0 %v2644
        %3600 = vmatpush1.bf16.msra.mxu0 %v2643
        %3601 = vmatprep.subr.bf16.mxu0 %v2636
        %3602 = vmatpush1.bf16.msra.mxu0 %v2635
        %3603 = vmatprep.subr.bf16.mxu0 %v2628
        %3604 = vmatpush1.bf16.msra.mxu0 %v2627
        %3605 = vmatprep.subr.bf16.mxu0 %v2620
        %3606 = vmatpush1.bf16.msra.mxu0 %v2619
        %3607 = vmatprep.subr.bf16.mxu0 %v2612
        %3608 = vmatpush1.bf16.msra.mxu0 %v2611
        %3609 = vmatprep.subr.bf16.mxu0 %v2604
        %3610 = vmatpush1.bf16.msra.mxu0 %v2603
        %3611 = vmatprep.subr.bf16.mxu0 %v2596
        %3612 = vmatpush1.bf16.msra.mxu0 %v2595
        %3613 = vmatprep.subr.bf16.mxu0 %v2588
        %3614 = vmatpush1.bf16.msra.mxu0 %v2587
        %3615 = vmatprep.subr.bf16.mxu0 %v2708
        %3616 = vmatpush2.bf16.msra.mxu0 %v2707
        %3617 = vmatprep.subr.bf16.mxu0 %v2700
        %3618 = vmatpush2.bf16.msra.mxu0 %v2699
        %3619 = vmatprep.subr.bf16.mxu0 %v2692
        %3620 = vmatpush2.bf16.msra.mxu0 %v2691
        %3621 = vmatprep.subr.bf16.mxu0 %v2684
        %3622 = vmatpush2.bf16.msra.mxu0 %v2683
        %3623 = vmatprep.subr.bf16.mxu0 %v2676
        %3624 = vmatpush2.bf16.msra.mxu0 %v2675
        %3625 = vmatprep.subr.bf16.mxu0 %v2668
        %3626 = vmatpush2.bf16.msra.mxu0 %v2667
        %3627 = vmatprep.subr.bf16.mxu0 %v2660
        %3628 = vmatpush2.bf16.msra.mxu0 %v2659
        %3629 = vmatprep.subr.bf16.mxu0 %v2652
        %3630 = vmatpush2.bf16.msra.mxu0 %v2651
        %3631 = vmatprep.mubr.bf16.mxu0 %v278
        %3632 = vmatmul.mubr.bf16.gmra.mxu0 %v277
        %v3633 = vpop.f32.mrf.mxu0
        %v3634 = vadd.f32 %v3593, %v3633
        %v3635 = vpop.f32.mrf.mxu0
        %v3636 = vadd.f32 %v3595, %v3635
        %v3637 = vpop.f32.mrf.mxu0
        %v3638 = vpop.f32.mrf.mxu0
        %3639 = vdwg.mxu0
        %3640 = vmatprep.subr.bf16.mxu0 %v2772
        %3641 = vmatpush1.bf16.msra.mxu0 %v2771
        %3642 = vmatprep.subr.bf16.mxu0 %v2764
        %3643 = vmatpush1.bf16.msra.mxu0 %v2763
        %3644 = vmatprep.subr.bf16.mxu0 %v2756
        %3645 = vmatpush1.bf16.msra.mxu0 %v2755
        %3646 = vmatprep.subr.bf16.mxu0 %v2748
        %3647 = vmatpush1.bf16.msra.mxu0 %v2747
        %3648 = vmatprep.subr.bf16.mxu0 %v2740
        %3649 = vmatpush1.bf16.msra.mxu0 %v2739
        %3650 = vmatprep.subr.bf16.mxu0 %v2732
        %3651 = vmatpush1.bf16.msra.mxu0 %v2731
        %3652 = vmatprep.subr.bf16.mxu0 %v2724
        %3653 = vmatpush1.bf16.msra.mxu0 %v2723
        %3654 = vmatprep.subr.bf16.mxu0 %v2716
        %3655 = vmatpush1.bf16.msra.mxu0 %v2715
        %3656 = vmatprep.subr.bf16.mxu0 %v2836
        %3657 = vmatpush2.bf16.msra.mxu0 %v2835
        %3658 = vmatprep.subr.bf16.mxu0 %v2828
        %3659 = vmatpush2.bf16.msra.mxu0 %v2827
        %3660 = vmatprep.subr.bf16.mxu0 %v2820
        %3661 = vmatpush2.bf16.msra.mxu0 %v2819
        %3662 = vmatprep.subr.bf16.mxu0 %v2812
        %3663 = vmatpush2.bf16.msra.mxu0 %v2811
        %3664 = vmatprep.subr.bf16.mxu0 %v2804
        %3665 = vmatpush2.bf16.msra.mxu0 %v2803
        %3666 = vmatprep.subr.bf16.mxu0 %v2796
        %3667 = vmatpush2.bf16.msra.mxu0 %v2795
        %3668 = vmatprep.subr.bf16.mxu0 %v2788
        %3669 = vmatpush2.bf16.msra.mxu0 %v2787
        %3670 = vmatprep.subr.bf16.mxu0 %v2780
        %3671 = vmatpush2.bf16.msra.mxu0 %v2779
        %3672 = vmatprep.mubr.bf16.mxu0 %v280
        %3673 = vmatmul.mubr.bf16.gmra.mxu0 %v279
        %v3674 = vpop.f32.mrf.mxu0
        %v3675 = vadd.f32 %v3634, %v3674
        %v3676 = vpop.f32.mrf.mxu0
        %v3677 = vadd.f32 %v3636, %v3676
        %v3678 = vpop.f32.mrf.mxu0
        %v3679 = vpop.f32.mrf.mxu0
        %3680 = vdwg.mxu0
        %3681 = vmatprep.subr.bf16.mxu0 %v2390
        %3682 = vmatpush1.bf16.msra.mxu0 %v2389
        %3683 = vmatprep.subr.bf16.mxu0 %v2382
        %3684 = vmatpush1.bf16.msra.mxu0 %v2381
        %3685 = vmatprep.subr.bf16.mxu0 %v2374
        %3686 = vmatpush1.bf16.msra.mxu0 %v2373
        %3687 = vmatprep.subr.bf16.mxu0 %v2366
        %3688 = vmatpush1.bf16.msra.mxu0 %v2365
        %3689 = vmatprep.subr.bf16.mxu0 %v2358
        %3690 = vmatpush1.bf16.msra.mxu0 %v2357
        %3691 = vmatprep.subr.bf16.mxu0 %v2350
        %3692 = vmatpush1.bf16.msra.mxu0 %v2349
        %3693 = vmatprep.subr.bf16.mxu0 %v2342
        %3694 = vmatpush1.bf16.msra.mxu0 %v2341
        %3695 = vmatprep.subr.bf16.mxu0 %v2334
        %3696 = vmatpush1.bf16.msra.mxu0 %v2333
        %3697 = vmatprep.subr.bf16.mxu0 %v2454
        %3698 = vmatpush2.bf16.msra.mxu0 %v2453
        %3699 = vmatprep.subr.bf16.mxu0 %v2446
        %3700 = vmatpush2.bf16.msra.mxu0 %v2445
        %3701 = vmatprep.subr.bf16.mxu0 %v2438
        %3702 = vmatpush2.bf16.msra.mxu0 %v2437
        %3703 = vmatprep.subr.bf16.mxu0 %v2430
        %3704 = vmatpush2.bf16.msra.mxu0 %v2429
        %3705 = vmatprep.subr.bf16.mxu0 %v2422
        %3706 = vmatpush2.bf16.msra.mxu0 %v2421
        %3707 = vmatprep.subr.bf16.mxu0 %v2414
        %3708 = vmatpush2.bf16.msra.mxu0 %v2413
        %3709 = vmatprep.subr.bf16.mxu0 %v2406
        %3710 = vmatpush2.bf16.msra.mxu0 %v2405
        %3711 = vmatprep.subr.bf16.mxu0 %v2398
        %3712 = vmatpush2.bf16.msra.mxu0 %v2397
        %3713 = vmatprep.mubr.bf16.mxu0 %v274
        %3714 = vmatmul.mubr.bf16.gmra.mxu0 %v273
        %v3715 = vpop.f32.mrf.mxu0
        %v3716 = vadd.f32 0.0, %v3715
        %v3717 = vpop.f32.mrf.mxu0
        %v3718 = vadd.f32 0.0, %v3717
        %v3719 = vpop.f32.mrf.mxu0
        %v3720 = vpop.f32.mrf.mxu0
        %3721 = vdwg.mxu0
        %3722 = vmatprep.subr.bf16.mxu0 %v2518
        %3723 = vmatpush1.bf16.msra.mxu0 %v2517
        %3724 = vmatprep.subr.bf16.mxu0 %v2510
        %3725 = vmatpush1.bf16.msra.mxu0 %v2509
        %3726 = vmatprep.subr.bf16.mxu0 %v2502
        %3727 = vmatpush1.bf16.msra.mxu0 %v2501
        %3728 = vmatprep.subr.bf16.mxu0 %v2494
        %3729 = vmatpush1.bf16.msra.mxu0 %v2493
        %3730 = vmatprep.subr.bf16.mxu0 %v2486
        %3731 = vmatpush1.bf16.msra.mxu0 %v2485
        %3732 = vmatprep.subr.bf16.mxu0 %v2478
        %3733 = vmatpush1.bf16.msra.mxu0 %v2477
        %3734 = vmatprep.subr.bf16.mxu0 %v2470
        %3735 = vmatpush1.bf16.msra.mxu0 %v2469
        %3736 = vmatprep.subr.bf16.mxu0 %v2462
        %3737 = vmatpush1.bf16.msra.mxu0 %v2461
        %3738 = vmatprep.subr.bf16.mxu0 %v2582
        %3739 = vmatpush2.bf16.msra.mxu0 %v2581
        %3740 = vmatprep.subr.bf16.mxu0 %v2574
        %3741 = vmatpush2.bf16.msra.mxu0 %v2573
        %3742 = vmatprep.subr.bf16.mxu0 %v2566
        %3743 = vmatpush2.bf16.msra.mxu0 %v2565
        %3744 = vmatprep.subr.bf16.mxu0 %v2558
        %3745 = vmatpush2.bf16.msra.mxu0 %v2557
        %3746 = vmatprep.subr.bf16.mxu0 %v2550
        %3747 = vmatpush2.bf16.msra.mxu0 %v2549
        %3748 = vmatprep.subr.bf16.mxu0 %v2542
        %3749 = vmatpush2.bf16.msra.mxu0 %v2541
        %3750 = vmatprep.subr.bf16.mxu0 %v2534
        %3751 = vmatpush2.bf16.msra.mxu0 %v2533
        %3752 = vmatprep.subr.bf16.mxu0 %v2526
        %3753 = vmatpush2.bf16.msra.mxu0 %v2525
        %3754 = vmatprep.mubr.bf16.mxu0 %v276
        %3755 = vmatmul.mubr.bf16.gmra.mxu0 %v275
        %v3756 = vpop.f32.mrf.mxu0
        %v3757 = vadd.f32 %v3716, %v3756
        %v3758 = vpop.f32.mrf.mxu0
        %v3759 = vadd.f32 %v3718, %v3758
        %v3760 = vpop.f32.mrf.mxu0
        %v3761 = vpop.f32.mrf.mxu0
        %3762 = vdwg.mxu0
        %3763 = vmatprep.subr.bf16.mxu0 %v2646
        %3764 = vmatpush1.bf16.msra.mxu0 %v2645
        %3765 = vmatprep.subr.bf16.mxu0 %v2638
        %3766 = vmatpush1.bf16.msra.mxu0 %v2637
        %3767 = vmatprep.subr.bf16.mxu0 %v2630
        %3768 = vmatpush1.bf16.msra.mxu0 %v2629
        %3769 = vmatprep.subr.bf16.mxu0 %v2622
        %3770 = vmatpush1.bf16.msra.mxu0 %v2621
        %3771 = vmatprep.subr.bf16.mxu0 %v2614
        %3772 = vmatpush1.bf16.msra.mxu0 %v2613
        %3773 = vmatprep.subr.bf16.mxu0 %v2606
        %3774 = vmatpush1.bf16.msra.mxu0 %v2605
        %3775 = vmatprep.subr.bf16.mxu0 %v2598
        %3776 = vmatpush1.bf16.msra.mxu0 %v2597
        %3777 = vmatprep.subr.bf16.mxu0 %v2590
        %3778 = vmatpush1.bf16.msra.mxu0 %v2589
        %3779 = vmatprep.subr.bf16.mxu0 %v2710
        %3780 = vmatpush2.bf16.msra.mxu0 %v2709
        %3781 = vmatprep.subr.bf16.mxu0 %v2702
        %3782 = vmatpush2.bf16.msra.mxu0 %v2701
        %3783 = vmatprep.subr.bf16.mxu0 %v2694
        %3784 = vmatpush2.bf16.msra.mxu0 %v2693
        %3785 = vmatprep.subr.bf16.mxu0 %v2686
        %3786 = vmatpush2.bf16.msra.mxu0 %v2685
        %3787 = vmatprep.subr.bf16.mxu0 %v2678
        %3788 = vmatpush2.bf16.msra.mxu0 %v2677
        %3789 = vmatprep.subr.bf16.mxu0 %v2670
        %3790 = vmatpush2.bf16.msra.mxu0 %v2669
        %3791 = vmatprep.subr.bf16.mxu0 %v2662
        %3792 = vmatpush2.bf16.msra.mxu0 %v2661
        %3793 = vmatprep.subr.bf16.mxu0 %v2654
        %3794 = vmatpush2.bf16.msra.mxu0 %v2653
        %3795 = vmatprep.mubr.bf16.mxu0 %v278
        %3796 = vmatmul.mubr.bf16.gmra.mxu0 %v277
        %v3797 = vpop.f32.mrf.mxu0
        %v3798 = vadd.f32 %v3757, %v3797
        %v3799 = vpop.f32.mrf.mxu0
        %v3800 = vadd.f32 %v3759, %v3799
        %v3801 = vpop.f32.mrf.mxu0
        %v3802 = vpop.f32.mrf.mxu0
        %3803 = vdwg.mxu0
        %3804 = vmatprep.subr.bf16.mxu0 %v2774
        %3805 = vmatpush1.bf16.msra.mxu0 %v2773
        %3806 = vmatprep.subr.bf16.mxu0 %v2766
        %3807 = vmatpush1.bf16.msra.mxu0 %v2765
        %3808 = vmatprep.subr.bf16.mxu0 %v2758
        %3809 = vmatpush1.bf16.msra.mxu0 %v2757
        %3810 = vmatprep.subr.bf16.mxu0 %v2750
        %3811 = vmatpush1.bf16.msra.mxu0 %v2749
        %3812 = vmatprep.subr.bf16.mxu0 %v2742
        %3813 = vmatpush1.bf16.msra.mxu0 %v2741
        %3814 = vmatprep.subr.bf16.mxu0 %v2734
        %3815 = vmatpush1.bf16.msra.mxu0 %v2733
        %3816 = vmatprep.subr.bf16.mxu0 %v2726
        %3817 = vmatpush1.bf16.msra.mxu0 %v2725
        %3818 = vmatprep.subr.bf16.mxu0 %v2718
        %3819 = vmatpush1.bf16.msra.mxu0 %v2717
        %3820 = vmatprep.subr.bf16.mxu0 %v2838
        %3821 = vmatpush2.bf16.msra.mxu0 %v2837
        %3822 = vmatprep.subr.bf16.mxu0 %v2830
        %3823 = vmatpush2.bf16.msra.mxu0 %v2829
        %3824 = vmatprep.subr.bf16.mxu0 %v2822
        %3825 = vmatpush2.bf16.msra.mxu0 %v2821
        %3826 = vmatprep.subr.bf16.mxu0 %v2814
        %3827 = vmatpush2.bf16.msra.mxu0 %v2813
        %3828 = vmatprep.subr.bf16.mxu0 %v2806
        %3829 = vmatpush2.bf16.msra.mxu0 %v2805
        %3830 = vmatprep.subr.bf16.mxu0 %v2798
        %3831 = vmatpush2.bf16.msra.mxu0 %v2797
        %3832 = vmatprep.subr.bf16.mxu0 %v2790
        %3833 = vmatpush2.bf16.msra.mxu0 %v2789
        %3834 = vmatprep.subr.bf16.mxu0 %v2782
        %3835 = vmatpush2.bf16.msra.mxu0 %v2781
        %3836 = vmatprep.mubr.bf16.mxu0 %v280
        %3837 = vmatmul.mubr.bf16.gmra.mxu0 %v279
        %v3838 = vpop.f32.mrf.mxu0
        %v3839 = vadd.f32 %v3798, %v3838
        %v3840 = vpop.f32.mrf.mxu0
        %v3841 = vadd.f32 %v3800, %v3840
        %v3842 = vpop.f32.mrf.mxu0
        %v3843 = vpop.f32.mrf.mxu0
        %3844 = vdwg.mxu0
        %3845 = vmatprep.subr.bf16.mxu0 %v2392
        %3846 = vmatpush1.bf16.msra.mxu0 %v2391
        %3847 = vmatprep.subr.bf16.mxu0 %v2384
        %3848 = vmatpush1.bf16.msra.mxu0 %v2383
        %3849 = vmatprep.subr.bf16.mxu0 %v2376
        %3850 = vmatpush1.bf16.msra.mxu0 %v2375
        %3851 = vmatprep.subr.bf16.mxu0 %v2368
        %3852 = vmatpush1.bf16.msra.mxu0 %v2367
        %3853 = vmatprep.subr.bf16.mxu0 %v2360
        %3854 = vmatpush1.bf16.msra.mxu0 %v2359
        %3855 = vmatprep.subr.bf16.mxu0 %v2352
        %3856 = vmatpush1.bf16.msra.mxu0 %v2351
        %3857 = vmatprep.subr.bf16.mxu0 %v2344
        %3858 = vmatpush1.bf16.msra.mxu0 %v2343
        %3859 = vmatprep.subr.bf16.mxu0 %v2336
        %3860 = vmatpush1.bf16.msra.mxu0 %v2335
        %3861 = vmatprep.subr.bf16.mxu0 %v2456
        %3862 = vmatpush2.bf16.msra.mxu0 %v2455
        %3863 = vmatprep.subr.bf16.mxu0 %v2448
        %3864 = vmatpush2.bf16.msra.mxu0 %v2447
        %3865 = vmatprep.subr.bf16.mxu0 %v2440
        %3866 = vmatpush2.bf16.msra.mxu0 %v2439
        %3867 = vmatprep.subr.bf16.mxu0 %v2432
        %3868 = vmatpush2.bf16.msra.mxu0 %v2431
        %3869 = vmatprep.subr.bf16.mxu0 %v2424
        %3870 = vmatpush2.bf16.msra.mxu0 %v2423
        %3871 = vmatprep.subr.bf16.mxu0 %v2416
        %3872 = vmatpush2.bf16.msra.mxu0 %v2415
        %3873 = vmatprep.subr.bf16.mxu0 %v2408
        %3874 = vmatpush2.bf16.msra.mxu0 %v2407
        %3875 = vmatprep.subr.bf16.mxu0 %v2400
        %3876 = vmatpush2.bf16.msra.mxu0 %v2399
        %3877 = vmatprep.mubr.bf16.mxu0 %v274
        %3878 = vmatmul.mubr.bf16.gmra.mxu0 %v273
        %v3879 = vpop.f32.mrf.mxu0
        %v3880 = vadd.f32 0.0, %v3879
        %v3881 = vpop.f32.mrf.mxu0
        %v3882 = vadd.f32 0.0, %v3881
        %v3883 = vpop.f32.mrf.mxu0
        %v3884 = vpop.f32.mrf.mxu0
        %3885 = vdwg.mxu0
        %3886 = vmatprep.subr.bf16.mxu0 %v2520
        %3887 = vmatpush1.bf16.msra.mxu0 %v2519
        %3888 = vmatprep.subr.bf16.mxu0 %v2512
        %3889 = vmatpush1.bf16.msra.mxu0 %v2511
        %3890 = vmatprep.subr.bf16.mxu0 %v2504
        %3891 = vmatpush1.bf16.msra.mxu0 %v2503
        %3892 = vmatprep.subr.bf16.mxu0 %v2496
        %3893 = vmatpush1.bf16.msra.mxu0 %v2495
        %3894 = vmatprep.subr.bf16.mxu0 %v2488
        %3895 = vmatpush1.bf16.msra.mxu0 %v2487
        %3896 = vmatprep.subr.bf16.mxu0 %v2480
        %3897 = vmatpush1.bf16.msra.mxu0 %v2479
        %3898 = vmatprep.subr.bf16.mxu0 %v2472
        %3899 = vmatpush1.bf16.msra.mxu0 %v2471
        %3900 = vmatprep.subr.bf16.mxu0 %v2464
        %3901 = vmatpush1.bf16.msra.mxu0 %v2463
        %3902 = vmatprep.subr.bf16.mxu0 %v2584
        %3903 = vmatpush2.bf16.msra.mxu0 %v2583
        %3904 = vmatprep.subr.bf16.mxu0 %v2576
        %3905 = vmatpush2.bf16.msra.mxu0 %v2575
        %3906 = vmatprep.subr.bf16.mxu0 %v2568
        %3907 = vmatpush2.bf16.msra.mxu0 %v2567
        %3908 = vmatprep.subr.bf16.mxu0 %v2560
        %3909 = vmatpush2.bf16.msra.mxu0 %v2559
        %3910 = vmatprep.subr.bf16.mxu0 %v2552
        %3911 = vmatpush2.bf16.msra.mxu0 %v2551
        %3912 = vmatprep.subr.bf16.mxu0 %v2544
        %3913 = vmatpush2.bf16.msra.mxu0 %v2543
        %3914 = vmatprep.subr.bf16.mxu0 %v2536
        %3915 = vmatpush2.bf16.msra.mxu0 %v2535
        %3916 = vmatprep.subr.bf16.mxu0 %v2528
        %3917 = vmatpush2.bf16.msra.mxu0 %v2527
        %3918 = vmatprep.mubr.bf16.mxu0 %v276
        %3919 = vmatmul.mubr.bf16.gmra.mxu0 %v275
        %v3920 = vpop.f32.mrf.mxu0
        %v3921 = vadd.f32 %v3880, %v3920
        %v3922 = vpop.f32.mrf.mxu0
        %v3923 = vadd.f32 %v3882, %v3922
        %v3924 = vpop.f32.mrf.mxu0
        %v3925 = vpop.f32.mrf.mxu0
        %3926 = vdwg.mxu0
        %3927 = vmatprep.subr.bf16.mxu0 %v2648
        %3928 = vmatpush1.bf16.msra.mxu0 %v2647
        %3929 = vmatprep.subr.bf16.mxu0 %v2640
        %3930 = vmatpush1.bf16.msra.mxu0 %v2639
        %3931 = vmatprep.subr.bf16.mxu0 %v2632
        %3932 = vmatpush1.bf16.msra.mxu0 %v2631
        %3933 = vmatprep.subr.bf16.mxu0 %v2624
        %3934 = vmatpush1.bf16.msra.mxu0 %v2623
        %3935 = vmatprep.subr.bf16.mxu0 %v2616
        %3936 = vmatpush1.bf16.msra.mxu0 %v2615
        %3937 = vmatprep.subr.bf16.mxu0 %v2608
        %3938 = vmatpush1.bf16.msra.mxu0 %v2607
        %3939 = vmatprep.subr.bf16.mxu0 %v2600
        %3940 = vmatpush1.bf16.msra.mxu0 %v2599
        %3941 = vmatprep.subr.bf16.mxu0 %v2592
        %3942 = vmatpush1.bf16.msra.mxu0 %v2591
        %3943 = vmatprep.subr.bf16.mxu0 %v2712
        %3944 = vmatpush2.bf16.msra.mxu0 %v2711
        %3945 = vmatprep.subr.bf16.mxu0 %v2704
        %3946 = vmatpush2.bf16.msra.mxu0 %v2703
        %3947 = vmatprep.subr.bf16.mxu0 %v2696
        %3948 = vmatpush2.bf16.msra.mxu0 %v2695
        %3949 = vmatprep.subr.bf16.mxu0 %v2688
        %3950 = vmatpush2.bf16.msra.mxu0 %v2687
        %3951 = vmatprep.subr.bf16.mxu0 %v2680
        %3952 = vmatpush2.bf16.msra.mxu0 %v2679
        %3953 = vmatprep.subr.bf16.mxu0 %v2672
        %3954 = vmatpush2.bf16.msra.mxu0 %v2671
        %3955 = vmatprep.subr.bf16.mxu0 %v2664
        %3956 = vmatpush2.bf16.msra.mxu0 %v2663
        %3957 = vmatprep.subr.bf16.mxu0 %v2656
        %3958 = vmatpush2.bf16.msra.mxu0 %v2655
        %3959 = vmatprep.mubr.bf16.mxu0 %v278
        %3960 = vmatmul.mubr.bf16.gmra.mxu0 %v277
        %v3961 = vpop.f32.mrf.mxu0
        %v3962 = vadd.f32 %v3921, %v3961
        %v3963 = vpop.f32.mrf.mxu0
        %v3964 = vadd.f32 %v3923, %v3963
        %v3965 = vpop.f32.mrf.mxu0
        %v3966 = vpop.f32.mrf.mxu0
        %3967 = vdwg.mxu0
        %3968 = vmatprep.subr.bf16.mxu0 %v2776
        %3969 = vmatpush1.bf16.msra.mxu0 %v2775
        %3970 = vmatprep.subr.bf16.mxu0 %v2768
        %3971 = vmatpush1.bf16.msra.mxu0 %v2767
        %3972 = vmatprep.subr.bf16.mxu0 %v2760
        %3973 = vmatpush1.bf16.msra.mxu0 %v2759
        %3974 = vmatprep.subr.bf16.mxu0 %v2752
        %3975 = vmatpush1.bf16.msra.mxu0 %v2751
        %3976 = vmatprep.subr.bf16.mxu0 %v2744
        %3977 = vmatpush1.bf16.msra.mxu0 %v2743
        %3978 = vmatprep.subr.bf16.mxu0 %v2736
        %3979 = vmatpush1.bf16.msra.mxu0 %v2735
        %3980 = vmatprep.subr.bf16.mxu0 %v2728
        %3981 = vmatpush1.bf16.msra.mxu0 %v2727
        %3982 = vmatprep.subr.bf16.mxu0 %v2720
        %3983 = vmatpush1.bf16.msra.mxu0 %v2719
        %3984 = vmatprep.subr.bf16.mxu0 %v2840
        %3985 = vmatpush2.bf16.msra.mxu0 %v2839
        %3986 = vmatprep.subr.bf16.mxu0 %v2832
        %3987 = vmatpush2.bf16.msra.mxu0 %v2831
        %3988 = vmatprep.subr.bf16.mxu0 %v2824
        %3989 = vmatpush2.bf16.msra.mxu0 %v2823
        %3990 = vmatprep.subr.bf16.mxu0 %v2816
        %3991 = vmatpush2.bf16.msra.mxu0 %v2815
        %3992 = vmatprep.subr.bf16.mxu0 %v2808
        %3993 = vmatpush2.bf16.msra.mxu0 %v2807
        %3994 = vmatprep.subr.bf16.mxu0 %v2800
        %3995 = vmatpush2.bf16.msra.mxu0 %v2799
        %3996 = vmatprep.subr.bf16.mxu0 %v2792
        %3997 = vmatpush2.bf16.msra.mxu0 %v2791
        %3998 = vmatprep.subr.bf16.mxu0 %v2784
        %3999 = vmatpush2.bf16.msra.mxu0 %v2783
        %4000 = vmatprep.mubr.bf16.mxu0 %v280
        %4001 = vmatmul.mubr.bf16.gmra.mxu0 %v279
        %v4002 = vpop.f32.mrf.mxu0
        %v4003 = vadd.f32 %v3962, %v4002
        %v4004 = vpop.f32.mrf.mxu0
        %v4005 = vadd.f32 %v3964, %v4004
        %v4006 = vpop.f32.mrf.mxu0
        %v4007 = vpop.f32.mrf.mxu0
        %4008 = vdwg.mxu0
        %v4009 = vtanh.pop %v3511
        %v4010 = vtanh.pop %v3513
        %v4011 = vtanh.pop %v3675
        %v4012 = vtanh.pop %v3677
        %v4013 = vtanh.pop %v3839
        %v4014 = vtanh.pop %v3841
        %v4015 = vtanh.pop %v4003
        %v4016 = vtanh.pop %v4005
        %v4017 = vld [vmem:[%s238] sm:$0xff]
        %v4018 = vld [vmem:[%s238 + $0x8] sm:$0xff]
        %v4019 = vld [vmem:[%s238 + $0x10] sm:$0xff]
        %v4020 = vld [vmem:[%s238 + $0x18] sm:$0xff]
        %v4021 = vld [vmem:[%s238 + $0x20] sm:$0xff]
        %v4022 = vld [vmem:[%s238 + $0x28] sm:$0xff]
        %v4023 = vld [vmem:[%s238 + $0x30] sm:$0xff]
        %v4024 = vld [vmem:[%s238 + $0x38] sm:$0xff]
        %v4025 = vadd.f32 %v4009, %v4017
        %v4026 = vadd.f32 %v4010, %v4018
        %v4027 = vadd.f32 %v4011, %v4019
        %v4028 = vadd.f32 %v4012, %v4020
        %v4029 = vadd.f32 %v4013, %v4021
        %v4030 = vadd.f32 %v4014, %v4022
        %v4031 = vadd.f32 %v4015, %v4023
        %v4032 = vadd.f32 %v4016, %v4024
        %s4033 = sld [smem:[#allocation2 + %s244]]
        %s4034 = sshra.s32 %s244, 7
        %s4035 = sand.u32 %s244, 127
        %s4036 = sadd.s32 %s4034, 1
        %s4037 = smul.u32 %s4036, 128
        %s4038 = sshra.s32 %s244, 7
        %s4039 = sand.u32 %s244, 127
        %s4040 = sadd.s32 %s4037, %s4039
        %s4041 = sld [smem:[#allocation2 + %s4040]]
        %p4042 = scmp.gt.s32.totalorder %s244, 0
        %s4043 = sadd.s32 %s4034, 2
        %s4044 = smul.u32 %s4043, 128
        %s4045 = sadd.s32 %s4044, %s4039
        %s4046 = sld [smem:[#allocation2 + %s4045]]
        %s4047 = scalar_select %p4042, %s4046, 0.0
        %v4048 = vstv %s4033
        %v4049 = vmul.f32 %v4048, %v265
        %v4050 = vmul.f32 %v4048, %v266
        %v4051 = vmul.f32 %v4048, %v267
        %v4052 = vmul.f32 %v4048, %v268
        %v4053 = vmul.f32 %v4048, %v269
        %v4054 = vmul.f32 %v4048, %v270
        %v4055 = vmul.f32 %v4048, %v271
        %v4056 = vmul.f32 %v4048, %v272
        %v4057 = vstv %s4041
        %v4058 = vmul.f32 %v4057, %v4025
        %v4059 = vmul.f32 %v4057, %v4026
        %v4060 = vmul.f32 %v4057, %v4027
        %v4061 = vmul.f32 %v4057, %v4028
        %v4062 = vmul.f32 %v4057, %v4029
        %v4063 = vmul.f32 %v4057, %v4030
        %v4064 = vmul.f32 %v4057, %v4031
        %v4065 = vmul.f32 %v4057, %v4032
        %v4066 = vsub.f32 %v4049, %v4058
        %v4067 = vsub.f32 %v4050, %v4059
        %v4068 = vsub.f32 %v4051, %v4060
        %v4069 = vsub.f32 %v4052, %v4061
        %v4070 = vsub.f32 %v4053, %v4062
        %v4071 = vsub.f32 %v4054, %v4063
        %v4072 = vsub.f32 %v4055, %v4064
        %v4073 = vsub.f32 %v4056, %v4065
        %v4074 = vld [vmem:[%s243] sm:$0xff]
        %v4075 = vld [vmem:[%s243 + $0x8] sm:$0xff]
        %v4076 = vld [vmem:[%s243 + $0x10] sm:$0xff]
        %v4077 = vld [vmem:[%s243 + $0x18] sm:$0xff]
        %v4078 = vld [vmem:[%s243 + $0x20] sm:$0xff]
        %v4079 = vld [vmem:[%s243 + $0x28] sm:$0xff]
        %v4080 = vld [vmem:[%s243 + $0x30] sm:$0xff]
        %v4081 = vld [vmem:[%s243 + $0x38] sm:$0xff]
        %v4082 = vstv %s4047
        %v4083 = vmul.f32 %v4082, %v4074
        %v4084 = vmul.f32 %v4082, %v4075
        %v4085 = vmul.f32 %v4082, %v4076
        %v4086 = vmul.f32 %v4082, %v4077
        %v4087 = vmul.f32 %v4082, %v4078
        %v4088 = vmul.f32 %v4082, %v4079
        %v4089 = vmul.f32 %v4082, %v4080
        %v4090 = vmul.f32 %v4082, %v4081
        %v4091 = vadd.f32 %v4066, %v4083
        %v4092 = vadd.f32 %v4067, %v4084
        %v4093 = vadd.f32 %v4068, %v4085
        %v4094 = vadd.f32 %v4069, %v4086
        %v4095 = vadd.f32 %v4070, %v4087
        %v4096 = vadd.f32 %v4071, %v4088
        %v4097 = vadd.f32 %v4072, %v4089
        %v4098 = vadd.f32 %v4073, %v4090
        %p4099 = scmp.lt.s32.totalorder %s17, 9
        // Predicated region
        $region49: #{gaussian_diffusion_sampler.1} parent=39 // pred_check
          %p4100 = pneg %p4099
        $region50: #{gaussian_diffusion_sampler.1} parent=39 // pred_check_branch
          %4102 = sbr.rel (%p4100) target = $region52
        $region51: #{gaussian_diffusion_sampler.1} parent=39 // pred_region
          %4103 = vst [vmem:[%s5] sm:$0xff] %v4091
          %4104 = vst [vmem:[%s5 + $0x8] sm:$0xff] %v4092
          %4105 = vst [vmem:[%s5 + $0x10] sm:$0xff] %v4093
          %4106 = vst [vmem:[%s5 + $0x18] sm:$0xff] %v4094
          %4107 = vst [vmem:[%s5 + $0x20] sm:$0xff] %v4095
          %4108 = vst [vmem:[%s5 + $0x28] sm:$0xff] %v4096
          %4109 = vst [vmem:[%s5 + $0x30] sm:$0xff] %v4097
          %4110 = vst [vmem:[%s5 + $0x38] sm:$0xff] %v4098
        $region52: #{gaussian_diffusion_sampler.1} parent=39 // pred_fallthru
          _
        %p4111 = scmp.eq.s32.totalorder %s17, 9
        // Predicated region
        $region53: #{gaussian_diffusion_sampler.1} parent=39 // pred_check
          %p4112 = pneg %p4111
        $region54: #{gaussian_diffusion_sampler.1} parent=39 // pred_check_branch
          %4114 = sbr.rel (%p4112) target = $region56
        $region55: #{gaussian_diffusion_sampler.1} parent=39 // pred_region
          %v4115 = vmax.f32 %v4091, -1.0
          %v4116 = vmax.f32 %v4092, -1.0
          %v4117 = vmax.f32 %v4093, -1.0
          %v4118 = vmax.f32 %v4094, -1.0
          %v4119 = vmax.f32 %v4095, -1.0
          %v4120 = vmax.f32 %v4096, -1.0
          %v4121 = vmax.f32 %v4097, -1.0
          %v4122 = vmax.f32 %v4098, -1.0
          %v4123 = vmin.f32 %v4115, 1.0
          %v4124 = vmin.f32 %v4116, 1.0
          %v4125 = vmin.f32 %v4117, 1.0
          %v4126 = vmin.f32 %v4118, 1.0
          %v4127 = vmin.f32 %v4119, 1.0
          %v4128 = vmin.f32 %v4120, 1.0
          %v4129 = vmin.f32 %v4121, 1.0
          %v4130 = vmin.f32 %v4122, 1.0
          %4131 = vst [vmem:[%s5] sm:$0xff] %v4123
          %4132 = vst [vmem:[%s5 + $0x8] sm:$0xff] %v4124
          %4133 = vst [vmem:[%s5 + $0x10] sm:$0xff] %v4125
          %4134 = vst [vmem:[%s5 + $0x18] sm:$0xff] %v4126
          %4135 = vst [vmem:[%s5 + $0x20] sm:$0xff] %v4127
          %4136 = vst [vmem:[%s5 + $0x28] sm:$0xff] %v4128
          %4137 = vst [vmem:[%s5 + $0x30] sm:$0xff] %v4129
          %4138 = vst [vmem:[%s5 + $0x38] sm:$0xff] %v4130
        $region56: #{gaussian_diffusion_sampler.1} parent=39 // pred_fallthru
          _
        // Predicated region
        $region57: #{gaussian_diffusion_sampler.1} parent=39 // pred_check
          %p4139 = pneg %p145
        $region58: #{gaussian_diffusion_sampler.1} parent=39 // pred_check_branch
          %4141 = sbr.rel (%p4139) target = $region60
        $region59: #{gaussian_diffusion_sampler.1} parent=39 // pred_region
          _
        $region60: #{gaussian_diffusion_sampler.1} parent=39 // pred_fallthru
          _
        // Predicated region
        $region61: #{gaussian_diffusion_sampler.1} parent=39 // pred_check
          %p4142 = pneg %p145
        $region62: #{gaussian_diffusion_sampler.1} parent=39 // pred_check_branch
          %4144 = sbr.rel (%p4142) target = $region64
        $region63: #{gaussian_diffusion_sampler.1} parent=39 // pred_region
          _
        $region64: #{gaussian_diffusion_sampler.1} parent=39 // pred_fallthru
          _
      $region40: #{gaussian_diffusion_sampler.1} parent=5 // pred_fallthru
        _
      %p4145 = scmp.le.s32.totalorder 2, %s12
      // Predicated region
      $region65: #{gaussian_diffusion_sampler.1} parent=5 // pred_check
        %p4146 = pneg %p4145
      $region66: #{gaussian_diffusion_sampler.1} parent=5 // pred_check_branch
        %4148 = sbr.rel (%p4146) target = $region68
      $region67: #{gaussian_diffusion_sampler.1} parent=5 // pred_region
        %s4149 = ssub.s32 %s12, 2
      $region68: #{gaussian_diffusion_sampler.1} parent=5 // pred_fallthru
        _
    $region6: #{gaussian_diffusion_sampler.1} parent=1 // loop_footer
      %s16 = sadd.s32 1, %s12
    $region7: #{gaussian_diffusion_sampler.1} parent=1 // loop_footer_branch
      %11 = sbr.rel target = $region3
    $region8: #{gaussian_diffusion_sampler.1} parent=1 // loop_exit
      _
    %4150 = vsyncpa [#allocation3], 1
    %s4151 = scalar_lea.sflag [#allocation3], 1
    %4152 = vsyncpa %s4151, 1

</llo_original>
